<compile_context>
chip_gen: v7x
topology: tpu7x:2x2x1
jax: 0.10.0
libtpu: 0.0.40
codegen_flags: <defaults>
</compile_context>

<pallas_src>
import functools
import math

import jax
import jax.numpy as jnp
from jax.experimental import pallas as pl
from jax.experimental.pallas import tpu as pltpu


# ---------------------------------------------------------------------------
# Lane-roll helper (jnp.roll semantics along the last axis).
# ---------------------------------------------------------------------------
def make_lane_roll(mode):
    """mode=+1: pltpu.roll matches jnp.roll; -1: opposite; 0: concat fallback."""

    def lane_roll(x, shift):
        n = x.shape[-1]
        s = shift % n
        if s == 0:
            return x
        if mode == 0:
            # TODO(synk): slice+concat fallback; pltpu.roll (XLU slot) preferred.
            return jnp.concatenate([x[..., n - s:], x[..., :n - s]], axis=-1)
        amt = (mode * s) % n
        return pltpu.roll(x, amt, x.ndim - 1)

    return lane_roll


def detect_roll_mode():
    """Probe pltpu.roll's lane-shift convention on the actual device."""
    try:
        x = jnp.tile(jnp.arange(128, dtype=jnp.float32)[None, :], (8, 1))

        def k(x_ref, o_ref):
            o_ref[...] = pltpu.roll(x_ref[...], 1, 1)

        y = pl.pallas_call(
            k, out_shape=jax.ShapeDtypeStruct((8, 128), jnp.float32))(x)
        if bool(jnp.array_equal(y, jnp.roll(x, 1, axis=1))):
            return 1
        if bool(jnp.array_equal(y, jnp.roll(x, -1, axis=1))):
            return -1
    except Exception:
        pass
    return 0


# ---------------------------------------------------------------------------
# Fused encoder kernel: all layers, both directions, single invocation.
#
# Expanded lane layout (per direction, 4H = 128 lanes):
#   gates: [i | f | g | o]  at lane offsets 0, H, 2H, 3H
#   c      lives at the f-position  [H:2H]
#   h      lives at the o-position  [3H:4H]
# Forward direction occupies lanes [0:4H], backward lanes [4H:8H] of all
# packed weights / buffers.
# ---------------------------------------------------------------------------
def make_encoder_kernel(T, Bp, E, H, n_layers, roll_mode):
    H4, H8 = 4 * H, 8 * H
    n_bufs = min(2, max(n_layers - 1, 0))
    lane_roll = make_lane_roll(roll_mode)
    f32, bf16 = jnp.float32, jnp.bfloat16

    def half_step(gates, c_prev):
        # gates: (Bp, 4H) pre-activations [i|f|g|o] for one direction.
        # c_prev: (Bp, 4H) with c at the f-position, or None at step 0.
        S = jax.nn.sigmoid(gates)                      # full-vreg EUP
        Tn = jnp.tanh(gates)                           # full-vreg EUP
        ig = S * lane_roll(Tn, -2 * H)                 # sig(i)*tanh(g) at i-pos
        c_new = lane_roll(ig, H)                       # move to f-pos
        if c_prev is not None:
            c_new = c_new + S * c_prev                 # + sig(f)*c at f-pos
        h_new = S * lane_roll(jnp.tanh(c_new), 2 * H)  # sig(o)*tanh(c) at o-pos
        return h_new, c_new

    def kernel(*refs):
        idx = 0
        x_ref = refs[idx]; idx += 1                    # (T*Bp, E)    bf16
        wih0_ref = refs[idx]; idx += 1                 # (E, 8H)      bf16
        if n_layers > 1:
            wih_rest_ref = refs[idx]; idx += 1         # (L-1, 8H, 8H) bf16
        whh_ref = refs[idx]; idx += 1                  # (L, 8H, 8H)  bf16
        b_ref = refs[idx]; idx += 1                    # (L, 1, 8H)   f32
        hidden_ref = refs[idx]; idx += 1               # (Bp, 2L*H)   f32
        cell_ref = refs[idx]; idx += 1                 # (Bp, 2L*H)   f32
        xp_ref = refs[idx]; idx += 1                   # (T*Bp, 8H)   f32 scratch
        seq_refs = refs[idx:]                          # inter-layer scratch

        hid_parts, cell_parts = [], []

        for layer in range(n_layers):
            if layer == 0:
                x_in = x_ref[...]                              # already bf16
                wih = wih0_ref[...]
            else:
                x_in = seq_refs[(layer - 1) % n_bufs][...].astype(bf16)
                wih = wih_rest_ref[layer - 1]

            # Bulk input projection + bias for BOTH directions at once
            # (N = 8H = 256), staged in VMEM, off the recurrent critical path.
            xp_ref[...] = (jnp.dot(x_in, wih, preferred_element_type=f32)
                           + b_ref[layer])

            whh = whh_ref[layer]                               # (8H, 8H) expanded
            last = (layer == n_layers - 1)
            out_ref = None if last else seq_refs[layer % n_bufs]

            h_f = h_b = c_f = c_b = None
            for step in range(T):                              # fully unrolled
                tf, tb = step, T - 1 - step
                xg_f = xp_ref[pl.ds(tf * Bp, Bp), pl.ds(0, H4)]
                xg_b = xp_ref[pl.ds(tb * Bp, Bp), pl.ds(H4, H4)]
                if step == 0:
                    g_f, g_b = xg_f, xg_b                      # h0 = 0
                else:
                    # ONE recurrent dot per step covering both directions.
                    h_cat = jnp.concatenate([h_f, h_b], axis=-1).astype(bf16)
                    rec = jnp.dot(h_cat, whh, preferred_element_type=f32)
                    g_f = xg_f + rec[:, :H4]
                    g_b = xg_b + rec[:, H4:]

                h_f, c_f = half_step(g_f, c_f)
                h_b, c_b = half_step(g_b, c_b)

                if not last:
                    # Full-vreg, lane-0 / lane-128 aligned stores.
                    out_ref[pl.ds(tf * Bp, Bp), pl.ds(0, H4)] = h_f
                    out_ref[pl.ds(tb * Bp, Bp), pl.ds(H4, H4)] = h_b

            # Extract compact h/c once per layer-direction (PyTorch ordering).
            hid_parts += [h_f[:, 3 * H:4 * H], h_b[:, 3 * H:4 * H]]
            cell_parts += [c_f[:, H:2 * H], c_b[:, H:2 * H]]

        # Single lane-dense store per output.
        hidden_ref[...] = jnp.concatenate(hid_parts, axis=-1)
        cell_ref[...] = jnp.concatenate(cell_parts, axis=-1)

    return kernel


# ---------------------------------------------------------------------------
# Parameter packing (done ONCE, outside jit): concat directions, expand the
# recurrent / inter-layer weights to the lane layout above, pre-cast to bf16.
# ---------------------------------------------------------------------------
def pack_params(params, n_layers):
    H = params["lstm"][(0, 0)]["whh_T"].shape[0]
    H4, H8 = 4 * H, 8 * H

    emb = params["embedding"].astype(jnp.bfloat16)

    b_all = jnp.stack(
        [jnp.concatenate([params["lstm"][(l, d)]["b"] for d in range(2)],
                         axis=-1) for l in range(n_layers)], axis=0)   # (L,1,8H)

    wih0 = jnp.concatenate(
        [params["lstm"][(0, d)]["wih_T"] for d in range(2)],
        axis=-1).astype(jnp.bfloat16)                                  # (E, 8H)

    def expand_wih(layer):
        wcat = jnp.concatenate(
            [params["lstm"][(layer, d)]["wih_T"] for d in range(2)],
            axis=-1)                                                   # (2H, 8H)
        w = jnp.zeros((H8, H8), jnp.float32)
        w = w.at[3 * H:4 * H, :].set(wcat[:H, :])      # rows reading h_fwd
        w = w.at[7 * H:8 * H, :].set(wcat[H:, :])      # rows reading h_bwd
        return w

    wih_rest = None
    if n_layers > 1:
        wih_rest = jnp.stack([expand_wih(l) for l in range(1, n_layers)],
                             axis=0).astype(jnp.bfloat16)

    def expand_whh(layer):
        w = jnp.zeros((H8, H8), jnp.float32)
        w = w.at[3 * H:4 * H, 0:H4].set(params["lstm"][(layer, 0)]["whh_T"])
        w = w.at[7 * H:8 * H, H4:H8].set(params["lstm"][(layer, 1)]["whh_T"])
        return w

    whh = jnp.stack([expand_whh(l) for l in range(n_layers)],
                    axis=0).astype(jnp.bfloat16)                       # (L,8H,8H)

    packed = {"emb": emb, "wih0": wih0, "whh": whh, "b": b_all}
    if wih_rest is not None:
        packed["wih_rest"] = wih_rest
    return packed


# ---------------------------------------------------------------------------
# Encoder forward (glue in JAX, the whole LSTM stack in one Pallas call)
# ---------------------------------------------------------------------------
def encoder_forward(src, packed, *, n_layers, roll_mode):
    # TODO(synk): embedding gather is data-dependent; kept in JAX (a manual
    #             DMA-gather kernel is possible but pointless at these sizes).
    E = packed["wih0"].shape[0]
    H8 = packed["whh"].shape[1]
    H = H8 // 8
    H4 = 4 * H
    B, T = src.shape

    emb = jnp.take(packed["emb"], src, axis=0)                    # (B, T, E) bf16
    # nn.Dropout in eval mode -> identity.

    x_tm = jnp.transpose(emb, (1, 0, 2))                          # (T, B, E)
    Bp = ((B + 7) // 8) * 8
    if Bp != B:
        x_tm = jnp.pad(x_tm, ((0, 0), (0, Bp - B), (0, 0)))
    x2d = x_tm.reshape(T * Bp, E)                                 # (T*Bp, E)

    n_dir = 2 * n_layers
    n_bufs = min(2, max(n_layers - 1, 0))

    args = [x2d, packed["wih0"]]
    in_specs = [
        pl.BlockSpec((T * Bp, E), lambda i: (0, 0)),
        pl.BlockSpec((E, H8), lambda i: (0, 0)),
    ]
    if n_layers > 1:
        args.append(packed["wih_rest"])
        in_specs.append(
            pl.BlockSpec((n_layers - 1, H8, H8), lambda i: (0, 0, 0)))
    args += [packed["whh"], packed["b"]]
    in_specs += [
        pl.BlockSpec((n_layers, H8, H8), lambda i: (0, 0, 0)),
        pl.BlockSpec((n_layers, 1, H8), lambda i: (0, 0, 0)),
    ]

    scratch_shapes = [pltpu.VMEM((T * Bp, H8), jnp.float32)]      # xproj staging
    scratch_shapes += [pltpu.VMEM((T * Bp, H8), jnp.float32)
                       for _ in range(n_bufs)]                     # inter-layer

    kernel = make_encoder_kernel(T, Bp, E, H, n_layers, roll_mode)

    hidden2d, cell2d = pl.pallas_call(
        kernel,
        out_shape=(
            jax.ShapeDtypeStruct((Bp, n_dir * H), jnp.float32),
            jax.ShapeDtypeStruct((Bp, n_dir * H), jnp.float32),
        ),
        grid_spec=pltpu.PrefetchScalarGridSpec(
            num_scalar_prefetch=0,
            grid=(1,),
            in_specs=in_specs,
            out_specs=[
                pl.BlockSpec((Bp, n_dir * H), lambda i: (0, 0)),
                pl.BlockSpec((Bp, n_dir * H), lambda i: (0, 0)),
            ],
            scratch_shapes=scratch_shapes),
        compiler_params=pltpu.CompilerParams(
            dimension_semantics=("arbitrary",)),
    )(*args)

    # Un-pack lane-dense outputs to PyTorch (layers*dirs, B, H) layout.
    hidden = hidden2d[:B].reshape(B, n_dir, H).transpose(1, 0, 2)
    cell = cell2d[:B].reshape(B, n_dir, H).transpose(1, 0, 2)
    return hidden, cell


# ---------------------------------------------------------------------------
# Pure-JAX reference (lax.scan) using the same bf16-matmul / f32-accumulate
# arithmetic, for correctness checking.
# ---------------------------------------------------------------------------
def lstm_direction_ref(x_tm, wih_T, whh_T, b, reverse):
    T, B, _ = x_tm.shape
    H = whh_T.shape[0]
    wih_b = wih_T.astype(jnp.bfloat16)
    whh_b = whh_T.astype(jnp.bfloat16)

    xproj = jnp.einsum("tbe,ef->tbf", x_tm.astype(jnp.bfloat16), wih_b,
                       preferred_element_type=jnp.float32) + b
    if reverse:
        xproj = xproj[::-1]

    def step(carry, g_in):
        h, c = carry
        gates = g_in + jnp.dot(h.astype(jnp.bfloat16), whh_b,
                               preferred_element_type=jnp.float32)
        i = jax.nn.sigmoid(gates[:, 0 * H:1 * H])
        f = jax.nn.sigmoid(gates[:, 1 * H:2 * H])
        g = jnp.tanh(gates[:, 2 * H:3 * H])
        o = jax.nn.sigmoid(gates[:, 3 * H:4 * H])
        c_new = f * c + i * g
        h_new = o * jnp.tanh(c_new)
        return (h_new, c_new), h_new

    init = (jnp.zeros((B, H), jnp.float32), jnp.zeros((B, H), jnp.float32))
    (hN, cN), out = jax.lax.scan(step, init, xproj)
    if reverse:
        out = out[::-1]
    return out, hN, cN


def encoder_forward_ref(src, params, n_layers):
    x_tm = jnp.transpose(
        jnp.take(params["embedding"], src, axis=0).astype(jnp.float32),
        (1, 0, 2))                                                # (T, B, E)
    hiddens, cells = [], []
    for layer in range(n_layers):
        outs = []
        for d in range(2):
            w = params["lstm"][(layer, d)]
            out, hN, cN = lstm_direction_ref(
                x_tm, w["wih_T"], w["whh_T"], w["b"], reverse=(d == 1))
            outs.append(out)
            hiddens.append(hN)
            cells.append(cN)
        x_tm = jnp.concatenate(outs, axis=-1)                     # (T, B, 2H)
    return jnp.stack(hiddens, axis=0), jnp.stack(cells, axis=0)


# ---------------------------------------------------------------------------
# Deterministic parameter init (matches PyTorch shapes / init ranges)
# ---------------------------------------------------------------------------
def init_params(key, input_dim, emb_dim, hid_dim, n_layers):
    keys = jax.random.split(key, 1 + 4 * n_layers * 2)
    params = {"embedding": jax.random.normal(keys[0], (input_dim, emb_dim),
                                             jnp.float32),
              "lstm": {}}
    k = 1.0 / math.sqrt(hid_dim)
    ki = 1
    for layer in range(n_layers):
        in_dim = emb_dim if layer == 0 else 2 * hid_dim
        for d in range(2):
            w_ih = jax.random.uniform(keys[ki + 0], (4 * hid_dim, in_dim),
                                      jnp.float32, -k, k)
            w_hh = jax.random.uniform(keys[ki + 1], (4 * hid_dim, hid_dim),
                                      jnp.float32, -k, k)
            b_ih = jax.random.uniform(keys[ki + 2], (4 * hid_dim,),
                                      jnp.float32, -k, k)
            b_hh = jax.random.uniform(keys[ki + 3], (4 * hid_dim,),
                                      jnp.float32, -k, k)
            ki += 4
            params["lstm"][(layer, d)] = {
                "wih_T": w_ih.T,                       # (in_dim, 4H)
                "whh_T": w_hh.T,                       # (H, 4H)
                "b": (b_ih + b_hh)[None, :],           # (1, 4H)
            }
    return params


if __name__ == "__main__":
    # Hyperparameters consistent with the module's __init__
    INPUT_DIM = 50      # vocab size
    EMB_DIM = 32
    HID_DIM = 32
    N_LAYERS = 2
    # dropout = 0.5 in the module, but forward is evaluated in eval mode
    B, T = 2, 8

    key = jax.random.PRNGKey(0)
    kp, ks = jax.random.split(key)
    params = init_params(kp, INPUT_DIM, EMB_DIM, HID_DIM, N_LAYERS)
    packed = pack_params(params, N_LAYERS)      # packed + bf16-cast ONCE
    src = jax.random.randint(ks, (B, T), 0, INPUT_DIM, dtype=jnp.int32)

    roll_mode = detect_roll_mode()

    fwd = jax.jit(functools.partial(encoder_forward,
                                    n_layers=N_LAYERS, roll_mode=roll_mode))
    hidden, cell = fwd(src, packed)
    jax.block_until_ready((hidden, cell))

    assert hidden.shape == (N_LAYERS * 2, B, HID_DIM)
    assert cell.shape == (N_LAYERS * 2, B, HID_DIM)

    # Correctness check against a pure-JAX reference with matching arithmetic.
    h_ref, c_ref = encoder_forward_ref(src, params, N_LAYERS)
    assert jnp.allclose(hidden, h_ref, atol=2e-3, rtol=2e-3)
    assert jnp.allclose(cell, c_ref, atol=2e-3, rtol=2e-3)

    print("KERNEL_OK")
</pallas_src>

<mosaic_0001>
module attributes {stable_mosaic.version = 11 : i64} {
  func.func @k(%arg0: memref<8x128xf32, #tpu.memory_space<vmem>>, %arg1: memref<8x128xf32, #tpu.memory_space<vmem>>) attributes {dimension_semantics = [], scalar_prefetch = 0 : i64, scratch_operands = 0 : i64, tpu.core_type = #tpu.core_type<tc>} {
    %c0 = arith.constant 0 : index
    %c0_0 = arith.constant 0 : index
    %0 = vector.load %arg0[%c0, %c0_0] : memref<8x128xf32, #tpu.memory_space<vmem>>, vector<8x128xf32>
    %c1_i32 = arith.constant 1 : i32
    %1 = tpu.dynamic_rotate %0 by %c1_i32 dim 1 : vector<8x128xf32>, i32 -> vector<8x128xf32>
    %c0_1 = arith.constant 0 : index
    %c0_2 = arith.constant 0 : index
    %2 = vector.load %arg1[%c0_1, %c0_2] : memref<8x128xf32, #tpu.memory_space<vmem>>, vector<8x128xf32>
    tpu.vector_store %arg1[%c0_1, %c0_2], %1 {strides = array<i32>} : memref<8x128xf32, #tpu.memory_space<vmem>>, vector<8x128xf32>,
    return
  }
}

module attributes {stable_mosaic.version = 11 : i64} {
  func.func @kernel(%arg0: i32, %arg1: memref<64x32xbf16, #tpu.memory_space<vmem>>, %arg2: memref<32x256xbf16, #tpu.memory_space<vmem>>, %arg3: memref<1x256x256xbf16, #tpu.memory_space<vmem>>, %arg4: memref<2x256x256xbf16, #tpu.memory_space<vmem>>, %arg5: memref<2x1x256xf32, #tpu.memory_space<vmem>>, %arg6: memref<8x128xf32, #tpu.memory_space<vmem>>, %arg7: memref<8x128xf32, #tpu.memory_space<vmem>>, %arg8: memref<64x256xf32, #tpu.memory_space<vmem>>, %arg9: memref<64x256xf32, #tpu.memory_space<vmem>>) attributes {dimension_semantics = [#tpu.dimension_semantics<arbitrary>], iteration_bounds = array<i64: 1>, scalar_prefetch = 0 : i64, scratch_operands = 2 : i64, tpu.core_type = #tpu.core_type<tc>, window_params = [{pipeline_mode = #tpu.pipeline_mode<synchronous>, transform_indices = @transform_0, window_bounds = array<i64: 64, 32>}, {pipeline_mode = #tpu.pipeline_mode<synchronous>, transform_indices = @transform_1, window_bounds = array<i64: 32, 256>}, {pipeline_mode = #tpu.pipeline_mode<synchronous>, transform_indices = @transform_2, window_bounds = array<i64: 1, 256, 256>}, {pipeline_mode = #tpu.pipeline_mode<synchronous>, transform_indices = @transform_3, window_bounds = array<i64: 2, 256, 256>}, {pipeline_mode = #tpu.pipeline_mode<synchronous>, transform_indices = @transform_4, window_bounds = array<i64: 2, 1, 256>}, {pipeline_mode = #tpu.pipeline_mode<synchronous>, transform_indices = @transform_5, window_bounds = array<i64: 8, 128>}, {pipeline_mode = #tpu.pipeline_mode<synchronous>, transform_indices = @transform_6, window_bounds = array<i64: 8, 128>}]} {
    %c0 = arith.constant 0 : index
    %c0_0 = arith.constant 0 : index
    %0 = vector.load %arg1[%c0, %c0_0] : memref<64x32xbf16, #tpu.memory_space<vmem>>, vector<64x32xbf16>
    %c0_1 = arith.constant 0 : index
    %c0_2 = arith.constant 0 : index
    %1 = vector.load %arg2[%c0_1, %c0_2] : memref<32x256xbf16, #tpu.memory_space<vmem>>, vector<32x256xbf16>
    %cst = arith.constant dense<0.000000e+00> : vector<64x256xf32>
    %2 = tpu.matmul %0, %1, %cst {dimension_numbers = #tpu.dot_dimension_numbers<[1], [0], [0], [1], [0, 0, 1, 1], [], []>} : vector<64x32xbf16>, vector<32x256xbf16>, vector<64x256xf32> -> vector<64x256xf32>
    %c0_3 = arith.constant 0 : index
    %c0_4 = arith.constant 0 : index
    %c0_5 = arith.constant 0 : index
    %3 = vector.load %arg5[%c0_3, %c0_4, %c0_5] : memref<2x1x256xf32, #tpu.memory_space<vmem>>, vector<1x1x256xf32>
    %4 = vector.shape_cast %3 : vector<1x1x256xf32> to vector<1x256xf32>
    %5 = vector.broadcast %4 : vector<1x256xf32> to vector<64x256xf32>
    %6 = arith.addf %2, %5 : vector<64x256xf32>
    %c0_6 = arith.constant 0 : index
    %c0_7 = arith.constant 0 : index
    %7 = vector.load %arg8[%c0_6, %c0_7] : memref<64x256xf32, #tpu.memory_space<vmem>>, vector<64x256xf32>
    tpu.vector_store %arg8[%c0_6, %c0_7], %6 {strides = array<i32>} : memref<64x256xf32, #tpu.memory_space<vmem>>, vector<64x256xf32>,
    %c0_8 = arith.constant 0 : index
    %c0_9 = arith.constant 0 : index
    %c0_10 = arith.constant 0 : index
    %8 = vector.load %arg4[%c0_8, %c0_9, %c0_10] : memref<2x256x256xbf16, #tpu.memory_space<vmem>>, vector<1x256x256xbf16>
    %9 = vector.shape_cast %8 : vector<1x256x256xbf16> to vector<256x256xbf16>
    %c0_11 = arith.constant 0 : index
    %c0_12 = arith.constant 0 : index
    %10 = vector.load %arg8[%c0_11, %c0_12] : memref<64x256xf32, #tpu.memory_space<vmem>>, vector<8x128xf32>
    %c56 = arith.constant 56 : index
    %c128 = arith.constant 128 : index
    %11 = vector.load %arg8[%c56, %c128] : memref<64x256xf32, #tpu.memory_space<vmem>>, vector<8x128xf32>
    %12 = arith.negf %10 : vector<8x128xf32>
    %13 = math.exp %12 : vector<8x128xf32>
    %cst_13 = arith.constant 1.000000e+00 : f32
    %14 = vector.broadcast %cst_13 : f32 to vector<8x128xf32>
    %15 = arith.addf %14, %13 : vector<8x128xf32>
    %16 = arith.divf %14, %15 : vector<8x128xf32>
    %17 = math.tanh %10 : vector<8x128xf32>
    %18 = vector.extract_strided_slice %17 {offsets = [0, 64], sizes = [8, 64], strides = [1, 1]} : vector<8x128xf32> to vector<8x64xf32>
    %19 = vector.extract_strided_slice %17 {offsets = [0, 0], sizes = [8, 64], strides = [1, 1]} : vector<8x128xf32> to vector<8x64xf32>
    %20 = tpu.concatenate %18, %19 in 1 : vector<8x64xf32>, vector<8x64xf32> -> vector<8x128xf32>
    %21 = arith.mulf %16, %20 : vector<8x128xf32>
    %22 = vector.extract_strided_slice %21 {offsets = [0, 96], sizes = [8, 32], strides = [1, 1]} : vector<8x128xf32> to vector<8x32xf32>
    %23 = vector.extract_strided_slice %21 {offsets = [0, 0], sizes = [8, 96], strides = [1, 1]} : vector<8x128xf32> to vector<8x96xf32>
    %24 = tpu.concatenate %22, %23 in 1 : vector<8x32xf32>, vector<8x96xf32> -> vector<8x128xf32>
    %25 = math.tanh %24 : vector<8x128xf32>
    %26 = vector.extract_strided_slice %25 {offsets = [0, 64], sizes = [8, 64], strides = [1, 1]} : vector<8x128xf32> to vector<8x64xf32>
    %27 = vector.extract_strided_slice %25 {offsets = [0, 0], sizes = [8, 64], strides = [1, 1]} : vector<8x128xf32> to vector<8x64xf32>
    %28 = tpu.concatenate %26, %27 in 1 : vector<8x64xf32>, vector<8x64xf32> -> vector<8x128xf32>
    %29 = arith.mulf %16, %28 : vector<8x128xf32>
    %30 = arith.negf %11 : vector<8x128xf32>
    %31 = math.exp %30 : vector<8x128xf32>
    %cst_14 = arith.constant 1.000000e+00 : f32
    %32 = vector.broadcast %cst_14 : f32 to vector<8x128xf32>
    %33 = arith.addf %32, %31 : vector<8x128xf32>
    %34 = arith.divf %32, %33 : vector<8x128xf32>
    %35 = math.tanh %11 : vector<8x128xf32>
    %36 = vector.extract_strided_slice %35 {offsets = [0, 64], sizes = [8, 64], strides = [1, 1]} : vector<8x128xf32> to vector<8x64xf32>
    %37 = vector.extract_strided_slice %35 {offsets = [0, 0], sizes = [8, 64], strides = [1, 1]} : vector<8x128xf32> to vector<8x64xf32>
    %38 = tpu.concatenate %36, %37 in 1 : vector<8x64xf32>, vector<8x64xf32> -> vector<8x128xf32>
    %39 = arith.mulf %34, %38 : vector<8x128xf32>
    %40 = vector.extract_strided_slice %39 {offsets = [0, 96], sizes = [8, 32], strides = [1, 1]} : vector<8x128xf32> to vector<8x32xf32>
    %41 = vector.extract_strided_slice %39 {offsets = [0, 0], sizes = [8, 96], strides = [1, 1]} : vector<8x128xf32> to vector<8x96xf32>
    %42 = tpu.concatenate %40, %41 in 1 : vector<8x32xf32>, vector<8x96xf32> -> vector<8x128xf32>
    %43 = math.tanh %42 : vector<8x128xf32>
    %44 = vector.extract_strided_slice %43 {offsets = [0, 64], sizes = [8, 64], strides = [1, 1]} : vector<8x128xf32> to vector<8x64xf32>
    %45 = vector.extract_strided_slice %43 {offsets = [0, 0], sizes = [8, 64], strides = [1, 1]} : vector<8x128xf32> to vector<8x64xf32>
    %46 = tpu.concatenate %44, %45 in 1 : vector<8x64xf32>, vector<8x64xf32> -> vector<8x128xf32>
    %47 = arith.mulf %34, %46 : vector<8x128xf32>
    %c0_15 = arith.constant 0 : index
    %c0_16 = arith.constant 0 : index
    %48 = vector.load %arg9[%c0_15, %c0_16] : memref<64x256xf32, #tpu.memory_space<vmem>>, vector<8x128xf32>
    tpu.vector_store %arg9[%c0_15, %c0_16], %29 {strides = array<i32>} : memref<64x256xf32, #tpu.memory_space<vmem>>, vector<8x128xf32>,
    %c56_17 = arith.constant 56 : index
    %c128_18 = arith.constant 128 : index
    %49 = vector.load %arg9[%c56_17, %c128_18] : memref<64x256xf32, #tpu.memory_space<vmem>>, vector<8x128xf32>
    tpu.vector_store %arg9[%c56_17, %c128_18], %47 {strides = array<i32>} : memref<64x256xf32, #tpu.memory_space<vmem>>, vector<8x128xf32>,
    %c8 = arith.constant 8 : index
    %c0_19 = arith.constant 0 : index
    %50 = vector.load %arg8[%c8, %c0_19] : memref<64x256xf32, #tpu.memory_space<vmem>>, vector<8x128xf32>
    %c48 = arith.constant 48 : index
    %c128_20 = arith.constant 128 : index
    %51 = vector.load %arg8[%c48, %c128_20] : memref<64x256xf32, #tpu.memory_space<vmem>>, vector<8x128xf32>
    %52 = tpu.concatenate %29, %47 in 1 : vector<8x128xf32>, vector<8x128xf32> -> vector<8x256xf32>
    %53 = arith.truncf %52 : vector<8x256xf32> to vector<8x256xbf16>
    %cst_21 = arith.constant dense<0.000000e+00> : vector<8x256xf32>
    %54 = tpu.matmul %53, %9, %cst_21 {dimension_numbers = #tpu.dot_dimension_numbers<[1], [0], [0], [1], [0, 0, 1, 1], [], []>} : vector<8x256xbf16>, vector<256x256xbf16>, vector<8x256xf32> -> vector<8x256xf32>
    %55 = vector.extract_strided_slice %54 {offsets = [0, 0], sizes = [8, 128], strides = [1, 1]} : vector<8x256xf32> to vector<8x128xf32>
    %56 = arith.addf %50, %55 : vector<8x128xf32>
    %57 = vector.extract_strided_slice %54 {offsets = [0, 128], sizes = [8, 128], strides = [1, 1]} : vector<8x256xf32> to vector<8x128xf32>
    %58 = arith.addf %51, %57 : vector<8x128xf32>
    %59 = arith.negf %56 : vector<8x128xf32>
    %60 = math.exp %59 : vector<8x128xf32>
    %cst_22 = arith.constant 1.000000e+00 : f32
    %61 = vector.broadcast %cst_22 : f32 to vector<8x128xf32>
    %62 = arith.addf %61, %60 : vector<8x128xf32>
    %63 = arith.divf %61, %62 : vector<8x128xf32>
    %64 = math.tanh %56 : vector<8x128xf32>
    %65 = vector.extract_strided_slice %64 {offsets = [0, 64], sizes = [8, 64], strides = [1, 1]} : vector<8x128xf32> to vector<8x64xf32>
    %66 = vector.extract_strided_slice %64 {offsets = [0, 0], sizes = [8, 64], strides = [1, 1]} : vector<8x128xf32> to vector<8x64xf32>
    %67 = tpu.concatenate %65, %66 in 1 : vector<8x64xf32>, vector<8x64xf32> -> vector<8x128xf32>
    %68 = arith.mulf %63, %67 : vector<8x128xf32>
    %69 = vector.extract_strided_slice %68 {offsets = [0, 96], sizes = [8, 32], strides = [1, 1]} : vector<8x128xf32> to vector<8x32xf32>
    %70 = vector.extract_strided_slice %68 {offsets = [0, 0], sizes = [8, 96], strides = [1, 1]} : vector<8x128xf32> to vector<8x96xf32>
    %71 = tpu.concatenate %69, %70 in 1 : vector<8x32xf32>, vector<8x96xf32> -> vector<8x128xf32>
    %72 = arith.mulf %63, %24 : vector<8x128xf32>
    %73 = arith.addf %71, %72 : vector<8x128xf32>
    %74 = math.tanh %73 : vector<8x128xf32>
    %75 = vector.extract_strided_slice %74 {offsets = [0, 64], sizes = [8, 64], strides = [1, 1]} : vector<8x128xf32> to vector<8x64xf32>
    %76 = vector.extract_strided_slice %74 {offsets = [0, 0], sizes = [8, 64], strides = [1, 1]} : vector<8x128xf32> to vector<8x64xf32>
    %77 = tpu.concatenate %75, %76 in 1 : vector<8x64xf32>, vector<8x64xf32> -> vector<8x128xf32>
    %78 = arith.mulf %63, %77 : vector<8x128xf32>
    %79 = arith.negf %58 : vector<8x128xf32>
    %80 = math.exp %79 : vector<8x128xf32>
    %cst_23 = arith.constant 1.000000e+00 : f32
    %81 = vector.broadcast %cst_23 : f32 to vector<8x128xf32>
    %82 = arith.addf %81, %80 : vector<8x128xf32>
    %83 = arith.divf %81, %82 : vector<8x128xf32>
    %84 = math.tanh %58 : vector<8x128xf32>
    %85 = vector.extract_strided_slice %84 {offsets = [0, 64], sizes = [8, 64], strides = [1, 1]} : vector<8x128xf32> to vector<8x64xf32>
    %86 = vector.extract_strided_slice %84 {offsets = [0, 0], sizes = [8, 64], strides = [1, 1]} : vector<8x128xf32> to vector<8x64xf32>
    %87 = tpu.concatenate %85, %86 in 1 : vector<8x64xf32>, vector<8x64xf32> -> vector<8x128xf32>
    %88 = arith.mulf %83, %87 : vector<8x128xf32>
    %89 = vector.extract_strided_slice %88 {offsets = [0, 96], sizes = [8, 32], strides = [1, 1]} : vector<8x128xf32> to vector<8x32xf32>
    %90 = vector.extract_strided_slice %88 {offsets = [0, 0], sizes = [8, 96], strides = [1, 1]} : vector<8x128xf32> to vector<8x96xf32>
    %91 = tpu.concatenate %89, %90 in 1 : vector<8x32xf32>, vector<8x96xf32> -> vector<8x128xf32>
    %92 = arith.mulf %83, %42 : vector<8x128xf32>
    %93 = arith.addf %91, %92 : vector<8x128xf32>
    %94 = math.tanh %93 : vector<8x128xf32>
    %95 = vector.extract_strided_slice %94 {offsets = [0, 64], sizes = [8, 64], strides = [1, 1]} : vector<8x128xf32> to vector<8x64xf32>
    %96 = vector.extract_strided_slice %94 {offsets = [0, 0], sizes = [8, 64], strides = [1, 1]} : vector<8x128xf32> to vector<8x64xf32>
    %97 = tpu.concatenate %95, %96 in 1 : vector<8x64xf32>, vector<8x64xf32> -> vector<8x128xf32>
    %98 = arith.mulf %83, %97 : vector<8x128xf32>
    %c8_24 = arith.constant 8 : index
    %c0_25 = arith.constant 0 : index
    %99 = vector.load %arg9[%c8_24, %c0_25] : memref<64x256xf32, #tpu.memory_space<vmem>>, vector<8x128xf32>
    tpu.vector_store %arg9[%c8_24, %c0_25], %78 {strides = array<i32>} : memref<64x256xf32, #tpu.memory_space<vmem>>, vector<8x128xf32>,
    %c48_26 = arith.constant 48 : index
    %c128_27 = arith.constant 128 : index
    %100 = vector.load %arg9[%c48_26, %c128_27] : memref<64x256xf32, #tpu.memory_space<vmem>>, vector<8x128xf32>
    tpu.vector_store %arg9[%c48_26, %c128_27], %98 {strides = array<i32>} : memref<64x256xf32, #tpu.memory_space<vmem>>, vector<8x128xf32>,
    %c16 = arith.constant 16 : index
    %c0_28 = arith.constant 0 : index
    %101 = vector.load %arg8[%c16, %c0_28] : memref<64x256xf32, #tpu.memory_space<vmem>>, vector<8x128xf32>
    %c40 = arith.constant 40 : index
    %c128_29 = arith.constant 128 : index
    %102 = vector.load %arg8[%c40, %c128_29] : memref<64x256xf32, #tpu.memory_space<vmem>>, vector<8x128xf32>
    %103 = tpu.concatenate %78, %98 in 1 : vector<8x128xf32>, vector<8x128xf32> -> vector<8x256xf32>
    %104 = arith.truncf %103 : vector<8x256xf32> to vector<8x256xbf16>
    %cst_30 = arith.constant dense<0.000000e+00> : vector<8x256xf32>
    %105 = tpu.matmul %104, %9, %cst_30 {dimension_numbers = #tpu.dot_dimension_numbers<[1], [0], [0], [1], [0, 0, 1, 1], [], []>} : vector<8x256xbf16>, vector<256x256xbf16>, vector<8x256xf32> -> vector<8x256xf32>
    %106 = vector.extract_strided_slice %105 {offsets = [0, 0], sizes = [8, 128], strides = [1, 1]} : vector<8x256xf32> to vector<8x128xf32>
    %107 = arith.addf %101, %106 : vector<8x128xf32>
    %108 = vector.extract_strided_slice %105 {offsets = [0, 128], sizes = [8, 128], strides = [1, 1]} : vector<8x256xf32> to vector<8x128xf32>
    %109 = arith.addf %102, %108 : vector<8x128xf32>
    %110 = arith.negf %107 : vector<8x128xf32>
    %111 = math.exp %110 : vector<8x128xf32>
    %cst_31 = arith.constant 1.000000e+00 : f32
    %112 = vector.broadcast %cst_31 : f32 to vector<8x128xf32>
    %113 = arith.addf %112, %111 : vector<8x128xf32>
    %114 = arith.divf %112, %113 : vector<8x128xf32>
    %115 = math.tanh %107 : vector<8x128xf32>
    %116 = vector.extract_strided_slice %115 {offsets = [0, 64], sizes = [8, 64], strides = [1, 1]} : vector<8x128xf32> to vector<8x64xf32>
    %117 = vector.extract_strided_slice %115 {offsets = [0, 0], sizes = [8, 64], strides = [1, 1]} : vector<8x128xf32> to vector<8x64xf32>
    %118 = tpu.concatenate %116, %117 in 1 : vector<8x64xf32>, vector<8x64xf32> -> vector<8x128xf32>
    %119 = arith.mulf %114, %118 : vector<8x128xf32>
    %120 = vector.extract_strided_slice %119 {offsets = [0, 96], sizes = [8, 32], strides = [1, 1]} : vector<8x128xf32> to vector<8x32xf32>
    %121 = vector.extract_strided_slice %119 {offsets = [0, 0], sizes = [8, 96], strides = [1, 1]} : vector<8x128xf32> to vector<8x96xf32>
    %122 = tpu.concatenate %120, %121 in 1 : vector<8x32xf32>, vector<8x96xf32> -> vector<8x128xf32>
    %123 = arith.mulf %114, %73 : vector<8x128xf32>
    %124 = arith.addf %122, %123 : vector<8x128xf32>
    %125 = math.tanh %124 : vector<8x128xf32>
    %126 = vector.extract_strided_slice %125 {offsets = [0, 64], sizes = [8, 64], strides = [1, 1]} : vector<8x128xf32> to vector<8x64xf32>
    %127 = vector.extract_strided_slice %125 {offsets = [0, 0], sizes = [8, 64], strides = [1, 1]} : vector<8x128xf32> to vector<8x64xf32>
    %128 = tpu.concatenate %126, %127 in 1 : vector<8x64xf32>, vector<8x64xf32> -> vector<8x128xf32>
    %129 = arith.mulf %114, %128 : vector<8x128xf32>
    %130 = arith.negf %109 : vector<8x128xf32>
    %131 = math.exp %130 : vector<8x128xf32>
    %cst_32 = arith.constant 1.000000e+00 : f32
    %132 = vector.broadcast %cst_32 : f32 to vector<8x128xf32>
    %133 = arith.addf %132, %131 : vector<8x128xf32>
    %134 = arith.divf %132, %133 : vector<8x128xf32>
    %135 = math.tanh %109 : vector<8x128xf32>
    %136 = vector.extract_strided_slice %135 {offsets = [0, 64], sizes = [8, 64], strides = [1, 1]} : vector<8x128xf32> to vector<8x64xf32>
    %137 = vector.extract_strided_slice %135 {offsets = [0, 0], sizes = [8, 64], strides = [1, 1]} : vector<8x128xf32> to vector<8x64xf32>
    %138 = tpu.concatenate %136, %137 in 1 : vector<8x64xf32>, vector<8x64xf32> -> vector<8x128xf32>
    %139 = arith.mulf %134, %138 : vector<8x128xf32>
    %140 = vector.extract_strided_slice %139 {offsets = [0, 96], sizes = [8, 32], strides = [1, 1]} : vector<8x128xf32> to vector<8x32xf32>
    %141 = vector.extract_strided_slice %139 {offsets = [0, 0], sizes = [8, 96], strides = [1, 1]} : vector<8x128xf32> to vector<8x96xf32>
    %142 = tpu.concatenate %140, %141 in 1 : vector<8x32xf32>, vector<8x96xf32> -> vector<8x128xf32>
    %143 = arith.mulf %134, %93 : vector<8x128xf32>
    %144 = arith.addf %142, %143 : vector<8x128xf32>
    %145 = math.tanh %144 : vector<8x128xf32>
    %146 = vector.extract_strided_slice %145 {offsets = [0, 64], sizes = [8, 64], strides = [1, 1]} : vector<8x128xf32> to vector<8x64xf32>
    %147 = vector.extract_strided_slice %145 {offsets = [0, 0], sizes = [8, 64], strides = [1, 1]} : vector<8x128xf32> to vector<8x64xf32>
    %148 = tpu.concatenate %146, %147 in 1 : vector<8x64xf32>, vector<8x64xf32> -> vector<8x128xf32>
    %149 = arith.mulf %134, %148 : vector<8x128xf32>
    %c16_33 = arith.constant 16 : index
    %c0_34 = arith.constant 0 : index
    %150 = vector.load %arg9[%c16_33, %c0_34] : memref<64x256xf32, #tpu.memory_space<vmem>>, vector<8x128xf32>
    tpu.vector_store %arg9[%c16_33, %c0_34], %129 {strides = array<i32>} : memref<64x256xf32, #tpu.memory_space<vmem>>, vector<8x128xf32>,
    %c40_35 = arith.constant 40 : index
    %c128_36 = arith.constant 128 : index
    %151 = vector.load %arg9[%c40_35, %c128_36] : memref<64x256xf32, #tpu.memory_space<vmem>>, vector<8x128xf32>
    tpu.vector_store %arg9[%c40_35, %c128_36], %149 {strides = array<i32>} : memref<64x256xf32, #tpu.memory_space<vmem>>, vector<8x128xf32>,
    %c24 = arith.constant 24 : index
    %c0_37 = arith.constant 0 : index
    %152 = vector.load %arg8[%c24, %c0_37] : memref<64x256xf32, #tpu.memory_space<vmem>>, vector<8x128xf32>
    %c32 = arith.constant 32 : index
    %c128_38 = arith.constant 128 : index
    %153 = vector.load %arg8[%c32, %c128_38] : memref<64x256xf32, #tpu.memory_space<vmem>>, vector<8x128xf32>
    %154 = tpu.concatenate %129, %149 in 1 : vector<8x128xf32>, vector<8x128xf32> -> vector<8x256xf32>
    %155 = arith.truncf %154 : vector<8x256xf32> to vector<8x256xbf16>
    %cst_39 = arith.constant dense<0.000000e+00> : vector<8x256xf32>
    %156 = tpu.matmul %155, %9, %cst_39 {dimension_numbers = #tpu.dot_dimension_numbers<[1], [0], [0], [1], [0, 0, 1, 1], [], []>} : vector<8x256xbf16>, vector<256x256xbf16>, vector<8x256xf32> -> vector<8x256xf32>
    %157 = vector.extract_strided_slice %156 {offsets = [0, 0], sizes = [8, 128], strides = [1, 1]} : vector<8x256xf32> to vector<8x128xf32>
    %158 = arith.addf %152, %157 : vector<8x128xf32>
    %159 = vector.extract_strided_slice %156 {offsets = [0, 128], sizes = [8, 128], strides = [1, 1]} : vector<8x256xf32> to vector<8x128xf32>
    %160 = arith.addf %153, %159 : vector<8x128xf32>
    %161 = arith.negf %158 : vector<8x128xf32>
    %162 = math.exp %161 : vector<8x128xf32>
    %cst_40 = arith.constant 1.000000e+00 : f32
    %163 = vector.broadcast %cst_40 : f32 to vector<8x128xf32>
    %164 = arith.addf %163, %162 : vector<8x128xf32>
    %165 = arith.divf %163, %164 : vector<8x128xf32>
    %166 = math.tanh %158 : vector<8x128xf32>
    %167 = vector.extract_strided_slice %166 {offsets = [0, 64], sizes = [8, 64], strides = [1, 1]} : vector<8x128xf32> to vector<8x64xf32>
    %168 = vector.extract_strided_slice %166 {offsets = [0, 0], sizes = [8, 64], strides = [1, 1]} : vector<8x128xf32> to vector<8x64xf32>
    %169 = tpu.concatenate %167, %168 in 1 : vector<8x64xf32>, vector<8x64xf32> -> vector<8x128xf32>
    %170 = arith.mulf %165, %169 : vector<8x128xf32>
    %171 = vector.extract_strided_slice %170 {offsets = [0, 96], sizes = [8, 32], strides = [1, 1]} : vector<8x128xf32> to vector<8x32xf32>
    %172 = vector.extract_strided_slice %170 {offsets = [0, 0], sizes = [8, 96], strides = [1, 1]} : vector<8x128xf32> to vector<8x96xf32>
    %173 = tpu.concatenate %171, %172 in 1 : vector<8x32xf32>, vector<8x96xf32> -> vector<8x128xf32>
    %174 = arith.mulf %165, %124 : vector<8x128xf32>
    %175 = arith.addf %173, %174 : vector<8x128xf32>
    %176 = math.tanh %175 : vector<8x128xf32>
    %177 = vector.extract_strided_slice %176 {offsets = [0, 64], sizes = [8, 64], strides = [1, 1]} : vector<8x128xf32> to vector<8x64xf32>
    %178 = vector.extract_strided_slice %176 {offsets = [0, 0], sizes = [8, 64], strides = [1, 1]} : vector<8x128xf32> to vector<8x64xf32>
    %179 = tpu.concatenate %177, %178 in 1 : vector<8x64xf32>, vector<8x64xf32> -> vector<8x128xf32>
    %180 = arith.mulf %165, %179 : vector<8x128xf32>
    %181 = arith.negf %160 : vector<8x128xf32>
    %182 = math.exp %181 : vector<8x128xf32>
    %cst_41 = arith.constant 1.000000e+00 : f32
    %183 = vector.broadcast %cst_41 : f32 to vector<8x128xf32>
    %184 = arith.addf %183, %182 : vector<8x128xf32>
    %185 = arith.divf %183, %184 : vector<8x128xf32>
    %186 = math.tanh %160 : vector<8x128xf32>
    %187 = vector.extract_strided_slice %186 {offsets = [0, 64], sizes = [8, 64], strides = [1, 1]} : vector<8x128xf32> to vector<8x64xf32>
    %188 = vector.extract_strided_slice %186 {offsets = [0, 0], sizes = [8, 64], strides = [1, 1]} : vector<8x128xf32> to vector<8x64xf32>
    %189 = tpu.concatenate %187, %188 in 1 : vector<8x64xf32>, vector<8x64xf32> -> vector<8x128xf32>
    %190 = arith.mulf %185, %189 : vector<8x128xf32>
    %191 = vector.extract_strided_slice %190 {offsets = [0, 96], sizes = [8, 32], strides = [1, 1]} : vector<8x128xf32> to vector<8x32xf32>
    %192 = vector.extract_strided_slice %190 {offsets = [0, 0], sizes = [8, 96], strides = [1, 1]} : vector<8x128xf32> to vector<8x96xf32>
    %193 = tpu.concatenate %191, %192 in 1 : vector<8x32xf32>, vector<8x96xf32> -> vector<8x128xf32>
    %194 = arith.mulf %185, %144 : vector<8x128xf32>
    %195 = arith.addf %193, %194 : vector<8x128xf32>
    %196 = math.tanh %195 : vector<8x128xf32>
    %197 = vector.extract_strided_slice %196 {offsets = [0, 64], sizes = [8, 64], strides = [1, 1]} : vector<8x128xf32> to vector<8x64xf32>
    %198 = vector.extract_strided_slice %196 {offsets = [0, 0], sizes = [8, 64], strides = [1, 1]} : vector<8x128xf32> to vector<8x64xf32>
    %199 = tpu.concatenate %197, %198 in 1 : vector<8x64xf32>, vector<8x64xf32> -> vector<8x128xf32>
    %200 = arith.mulf %185, %199 : vector<8x128xf32>
    %c24_42 = arith.constant 24 : index
    %c0_43 = arith.constant 0 : index
    %201 = vector.load %arg9[%c24_42, %c0_43] : memref<64x256xf32, #tpu.memory_space<vmem>>, vector<8x128xf32>
    tpu.vector_store %arg9[%c24_42, %c0_43], %180 {strides = array<i32>} : memref<64x256xf32, #tpu.memory_space<vmem>>, vector<8x128xf32>,
    %c32_44 = arith.constant 32 : index
    %c128_45 = arith.constant 128 : index
    %202 = vector.load %arg9[%c32_44, %c128_45] : memref<64x256xf32, #tpu.memory_space<vmem>>, vector<8x128xf32>
    tpu.vector_store %arg9[%c32_44, %c128_45], %200 {strides = array<i32>} : memref<64x256xf32, #tpu.memory_space<vmem>>, vector<8x128xf32>,
    %c32_46 = arith.constant 32 : index
    %c0_47 = arith.constant 0 : index
    %203 = vector.load %arg8[%c32_46, %c0_47] : memref<64x256xf32, #tpu.memory_space<vmem>>, vector<8x128xf32>
    %c24_48 = arith.constant 24 : index
    %c128_49 = arith.constant 128 : index
    %204 = vector.load %arg8[%c24_48, %c128_49] : memref<64x256xf32, #tpu.memory_space<vmem>>, vector<8x128xf32>
    %205 = tpu.concatenate %180, %200 in 1 : vector<8x128xf32>, vector<8x128xf32> -> vector<8x256xf32>
    %206 = arith.truncf %205 : vector<8x256xf32> to vector<8x256xbf16>
    %cst_50 = arith.constant dense<0.000000e+00> : vector<8x256xf32>
    %207 = tpu.matmul %206, %9, %cst_50 {dimension_numbers = #tpu.dot_dimension_numbers<[1], [0], [0], [1], [0, 0, 1, 1], [], []>} : vector<8x256xbf16>, vector<256x256xbf16>, vector<8x256xf32> -> vector<8x256xf32>
    %208 = vector.extract_strided_slice %207 {offsets = [0, 0], sizes = [8, 128], strides = [1, 1]} : vector<8x256xf32> to vector<8x128xf32>
    %209 = arith.addf %203, %208 : vector<8x128xf32>
    %210 = vector.extract_strided_slice %207 {offsets = [0, 128], sizes = [8, 128], strides = [1, 1]} : vector<8x256xf32> to vector<8x128xf32>
    %211 = arith.addf %204, %210 : vector<8x128xf32>
    %212 = arith.negf %209 : vector<8x128xf32>
    %213 = math.exp %212 : vector<8x128xf32>
    %cst_51 = arith.constant 1.000000e+00 : f32
    %214 = vector.broadcast %cst_51 : f32 to vector<8x128xf32>
    %215 = arith.addf %214, %213 : vector<8x128xf32>
    %216 = arith.divf %214, %215 : vector<8x128xf32>
    %217 = math.tanh %209 : vector<8x128xf32>
    %218 = vector.extract_strided_slice %217 {offsets = [0, 64], sizes = [8, 64], strides = [1, 1]} : vector<8x128xf32> to vector<8x64xf32>
    %219 = vector.extract_strided_slice %217 {offsets = [0, 0], sizes = [8, 64], strides = [1, 1]} : vector<8x128xf32> to vector<8x64xf32>
    %220 = tpu.concatenate %218, %219 in 1 : vector<8x64xf32>, vector<8x64xf32> -> vector<8x128xf32>
    %221 = arith.mulf %216, %220 : vector<8x128xf32>
    %222 = vector.extract_strided_slice %221 {offsets = [0, 96], sizes = [8, 32], strides = [1, 1]} : vector<8x128xf32> to vector<8x32xf32>
    %223 = vector.extract_strided_slice %221 {offsets = [0, 0], sizes = [8, 96], strides = [1, 1]} : vector<8x128xf32> to vector<8x96xf32>
    %224 = tpu.concatenate %222, %223 in 1 : vector<8x32xf32>, vector<8x96xf32> -> vector<8x128xf32>
    %225 = arith.mulf %216, %175 : vector<8x128xf32>
    %226 = arith.addf %224, %225 : vector<8x128xf32>
    %227 = math.tanh %226 : vector<8x128xf32>
    %228 = vector.extract_strided_slice %227 {offsets = [0, 64], sizes = [8, 64], strides = [1, 1]} : vector<8x128xf32> to vector<8x64xf32>
    %229 = vector.extract_strided_slice %227 {offsets = [0, 0], sizes = [8, 64], strides = [1, 1]} : vector<8x128xf32> to vector<8x64xf32>
    %230 = tpu.concatenate %228, %229 in 1 : vector<8x64xf32>, vector<8x64xf32> -> vector<8x128xf32>
    %231 = arith.mulf %216, %230 : vector<8x128xf32>
    %232 = arith.negf %211 : vector<8x128xf32>
    %233 = math.exp %232 : vector<8x128xf32>
    %cst_52 = arith.constant 1.000000e+00 : f32
    %234 = vector.broadcast %cst_52 : f32 to vector<8x128xf32>
    %235 = arith.addf %234, %233 : vector<8x128xf32>
    %236 = arith.divf %234, %235 : vector<8x128xf32>
    %237 = math.tanh %211 : vector<8x128xf32>
    %238 = vector.extract_strided_slice %237 {offsets = [0, 64], sizes = [8, 64], strides = [1, 1]} : vector<8x128xf32> to vector<8x64xf32>
    %239 = vector.extract_strided_slice %237 {offsets = [0, 0], sizes = [8, 64], strides = [1, 1]} : vector<8x128xf32> to vector<8x64xf32>
    %240 = tpu.concatenate %238, %239 in 1 : vector<8x64xf32>, vector<8x64xf32> -> vector<8x128xf32>
    %241 = arith.mulf %236, %240 : vector<8x128xf32>
    %242 = vector.extract_strided_slice %241 {offsets = [0, 96], sizes = [8, 32], strides = [1, 1]} : vector<8x128xf32> to vector<8x32xf32>
    %243 = vector.extract_strided_slice %241 {offsets = [0, 0], sizes = [8, 96], strides = [1, 1]} : vector<8x128xf32> to vector<8x96xf32>
    %244 = tpu.concatenate %242, %243 in 1 : vector<8x32xf32>, vector<8x96xf32> -> vector<8x128xf32>
    %245 = arith.mulf %236, %195 : vector<8x128xf32>
    %246 = arith.addf %244, %245 : vector<8x128xf32>
    %247 = math.tanh %246 : vector<8x128xf32>
    %248 = vector.extract_strided_slice %247 {offsets = [0, 64], sizes = [8, 64], strides = [1, 1]} : vector<8x128xf32> to vector<8x64xf32>
    %249 = vector.extract_strided_slice %247 {offsets = [0, 0], sizes = [8, 64], strides = [1, 1]} : vector<8x128xf32> to vector<8x64xf32>
    %250 = tpu.concatenate %248, %249 in 1 : vector<8x64xf32>, vector<8x64xf32> -> vector<8x128xf32>
    %251 = arith.mulf %236, %250 : vector<8x128xf32>
    %c32_53 = arith.constant 32 : index
    %c0_54 = arith.constant 0 : index
    %252 = vector.load %arg9[%c32_53, %c0_54] : memref<64x256xf32, #tpu.memory_space<vmem>>, vector<8x128xf32>
    tpu.vector_store %arg9[%c32_53, %c0_54], %231 {strides = array<i32>} : memref<64x256xf32, #tpu.memory_space<vmem>>, vector<8x128xf32>,
    %c24_55 = arith.constant 24 : index
    %c128_56 = arith.constant 128 : index
    %253 = vector.load %arg9[%c24_55, %c128_56] : memref<64x256xf32, #tpu.memory_space<vmem>>, vector<8x128xf32>
    tpu.vector_store %arg9[%c24_55, %c128_56], %251 {strides = array<i32>} : memref<64x256xf32, #tpu.memory_space<vmem>>, vector<8x128xf32>,
    %c40_57 = arith.constant 40 : index
    %c0_58 = arith.constant 0 : index
    %254 = vector.load %arg8[%c40_57, %c0_58] : memref<64x256xf32, #tpu.memory_space<vmem>>, vector<8x128xf32>
    %c16_59 = arith.constant 16 : index
    %c128_60 = arith.constant 128 : index
    %255 = vector.load %arg8[%c16_59, %c128_60] : memref<64x256xf32, #tpu.memory_space<vmem>>, vector<8x128xf32>
    %256 = tpu.concatenate %231, %251 in 1 : vector<8x128xf32>, vector<8x128xf32> -> vector<8x256xf32>
    %257 = arith.truncf %256 : vector<8x256xf32> to vector<8x256xbf16>
    %cst_61 = arith.constant dense<0.000000e+00> : vector<8x256xf32>
    %258 = tpu.matmul %257, %9, %cst_61 {dimension_numbers = #tpu.dot_dimension_numbers<[1], [0], [0], [1], [0, 0, 1, 1], [], []>} : vector<8x256xbf16>, vector<256x256xbf16>, vector<8x256xf32> -> vector<8x256xf32>
    %259 = vector.extract_strided_slice %258 {offsets = [0, 0], sizes = [8, 128], strides = [1, 1]} : vector<8x256xf32> to vector<8x128xf32>
    %260 = arith.addf %254, %259 : vector<8x128xf32>
    %261 = vector.extract_strided_slice %258 {offsets = [0, 128], sizes = [8, 128], strides = [1, 1]} : vector<8x256xf32> to vector<8x128xf32>
    %262 = arith.addf %255, %261 : vector<8x128xf32>
    %263 = arith.negf %260 : vector<8x128xf32>
    %264 = math.exp %263 : vector<8x128xf32>
    %cst_62 = arith.constant 1.000000e+00 : f32
    %265 = vector.broadcast %cst_62 : f32 to vector<8x128xf32>
    %266 = arith.addf %265, %264 : vector<8x128xf32>
    %267 = arith.divf %265, %266 : vector<8x128xf32>
    %268 = math.tanh %260 : vector<8x128xf32>
    %269 = vector.extract_strided_slice %268 {offsets = [0, 64], sizes = [8, 64], strides = [1, 1]} : vector<8x128xf32> to vector<8x64xf32>
    %270 = vector.extract_strided_slice %268 {offsets = [0, 0], sizes = [8, 64], strides = [1, 1]} : vector<8x128xf32> to vector<8x64xf32>
    %271 = tpu.concatenate %269, %270 in 1 : vector<8x64xf32>, vector<8x64xf32> -> vector<8x128xf32>
    %272 = arith.mulf %267, %271 : vector<8x128xf32>
    %273 = vector.extract_strided_slice %272 {offsets = [0, 96], sizes = [8, 32], strides = [1, 1]} : vector<8x128xf32> to vector<8x32xf32>
    %274 = vector.extract_strided_slice %272 {offsets = [0, 0], sizes = [8, 96], strides = [1, 1]} : vector<8x128xf32> to vector<8x96xf32>
    %275 = tpu.concatenate %273, %274 in 1 : vector<8x32xf32>, vector<8x96xf32> -> vector<8x128xf32>
    %276 = arith.mulf %267, %226 : vector<8x128xf32>
    %277 = arith.addf %275, %276 : vector<8x128xf32>
    %278 = math.tanh %277 : vector<8x128xf32>
    %279 = vector.extract_strided_slice %278 {offsets = [0, 64], sizes = [8, 64], strides = [1, 1]} : vector<8x128xf32> to vector<8x64xf32>
    %280 = vector.extract_strided_slice %278 {offsets = [0, 0], sizes = [8, 64], strides = [1, 1]} : vector<8x128xf32> to vector<8x64xf32>
    %281 = tpu.concatenate %279, %280 in 1 : vector<8x64xf32>, vector<8x64xf32> -> vector<8x128xf32>
    %282 = arith.mulf %267, %281 : vector<8x128xf32>
    %283 = arith.negf %262 : vector<8x128xf32>
    %284 = math.exp %283 : vector<8x128xf32>
    %cst_63 = arith.constant 1.000000e+00 : f32
    %285 = vector.broadcast %cst_63 : f32 to vector<8x128xf32>
    %286 = arith.addf %285, %284 : vector<8x128xf32>
    %287 = arith.divf %285, %286 : vector<8x128xf32>
    %288 = math.tanh %262 : vector<8x128xf32>
    %289 = vector.extract_strided_slice %288 {offsets = [0, 64], sizes = [8, 64], strides = [1, 1]} : vector<8x128xf32> to vector<8x64xf32>
    %290 = vector.extract_strided_slice %288 {offsets = [0, 0], sizes = [8, 64], strides = [1, 1]} : vector<8x128xf32> to vector<8x64xf32>
    %291 = tpu.concatenate %289, %290 in 1 : vector<8x64xf32>, vector<8x64xf32> -> vector<8x128xf32>
    %292 = arith.mulf %287, %291 : vector<8x128xf32>
    %293 = vector.extract_strided_slice %292 {offsets = [0, 96], sizes = [8, 32], strides = [1, 1]} : vector<8x128xf32> to vector<8x32xf32>
    %294 = vector.extract_strided_slice %292 {offsets = [0, 0], sizes = [8, 96], strides = [1, 1]} : vector<8x128xf32> to vector<8x96xf32>
    %295 = tpu.concatenate %293, %294 in 1 : vector<8x32xf32>, vector<8x96xf32> -> vector<8x128xf32>
    %296 = arith.mulf %287, %246 : vector<8x128xf32>
    %297 = arith.addf %295, %296 : vector<8x128xf32>
    %298 = math.tanh %297 : vector<8x128xf32>
    %299 = vector.extract_strided_slice %298 {offsets = [0, 64], sizes = [8, 64], strides = [1, 1]} : vector<8x128xf32> to vector<8x64xf32>
    %300 = vector.extract_strided_slice %298 {offsets = [0, 0], sizes = [8, 64], strides = [1, 1]} : vector<8x128xf32> to vector<8x64xf32>
    %301 = tpu.concatenate %299, %300 in 1 : vector<8x64xf32>, vector<8x64xf32> -> vector<8x128xf32>
    %302 = arith.mulf %287, %301 : vector<8x128xf32>
    %c40_64 = arith.constant 40 : index
    %c0_65 = arith.constant 0 : index
    %303 = vector.load %arg9[%c40_64, %c0_65] : memref<64x256xf32, #tpu.memory_space<vmem>>, vector<8x128xf32>
    tpu.vector_store %arg9[%c40_64, %c0_65], %282 {strides = array<i32>} : memref<64x256xf32, #tpu.memory_space<vmem>>, vector<8x128xf32>,
    %c16_66 = arith.constant 16 : index
    %c128_67 = arith.constant 128 : index
    %304 = vector.load %arg9[%c16_66, %c128_67] : memref<64x256xf32, #tpu.memory_space<vmem>>, vector<8x128xf32>
    tpu.vector_store %arg9[%c16_66, %c128_67], %302 {strides = array<i32>} : memref<64x256xf32, #tpu.memory_space<vmem>>, vector<8x128xf32>,
    %c48_68 = arith.constant 48 : index
    %c0_69 = arith.constant 0 : index
    %305 = vector.load %arg8[%c48_68, %c0_69] : memref<64x256xf32, #tpu.memory_space<vmem>>, vector<8x128xf32>
    %c8_70 = arith.constant 8 : index
    %c128_71 = arith.constant 128 : index
    %306 = vector.load %arg8[%c8_70, %c128_71] : memref<64x256xf32, #tpu.memory_space<vmem>>, vector<8x128xf32>
    %307 = tpu.concatenate %282, %302 in 1 : vector<8x128xf32>, vector<8x128xf32> -> vector<8x256xf32>
    %308 = arith.truncf %307 : vector<8x256xf32> to vector<8x256xbf16>
    %cst_72 = arith.constant dense<0.000000e+00> : vector<8x256xf32>
    %309 = tpu.matmul %308, %9, %cst_72 {dimension_numbers = #tpu.dot_dimension_numbers<[1], [0], [0], [1], [0, 0, 1, 1], [], []>} : vector<8x256xbf16>, vector<256x256xbf16>, vector<8x256xf32> -> vector<8x256xf32>
    %310 = vector.extract_strided_slice %309 {offsets = [0, 0], sizes = [8, 128], strides = [1, 1]} : vector<8x256xf32> to vector<8x128xf32>
    %311 = arith.addf %305, %310 : vector<8x128xf32>
    %312 = vector.extract_strided_slice %309 {offsets = [0, 128], sizes = [8, 128], strides = [1, 1]} : vector<8x256xf32> to vector<8x128xf32>
    %313 = arith.addf %306, %312 : vector<8x128xf32>
    %314 = arith.negf %311 : vector<8x128xf32>
    %315 = math.exp %314 : vector<8x128xf32>
    %cst_73 = arith.constant 1.000000e+00 : f32
    %316 = vector.broadcast %cst_73 : f32 to vector<8x128xf32>
    %317 = arith.addf %316, %315 : vector<8x128xf32>
    %318 = arith.divf %316, %317 : vector<8x128xf32>
    %319 = math.tanh %311 : vector<8x128xf32>
    %320 = vector.extract_strided_slice %319 {offsets = [0, 64], sizes = [8, 64], strides = [1, 1]} : vector<8x128xf32> to vector<8x64xf32>
    %321 = vector.extract_strided_slice %319 {offsets = [0, 0], sizes = [8, 64], strides = [1, 1]} : vector<8x128xf32> to vector<8x64xf32>
    %322 = tpu.concatenate %320, %321 in 1 : vector<8x64xf32>, vector<8x64xf32> -> vector<8x128xf32>
    %323 = arith.mulf %318, %322 : vector<8x128xf32>
    %324 = vector.extract_strided_slice %323 {offsets = [0, 96], sizes = [8, 32], strides = [1, 1]} : vector<8x128xf32> to vector<8x32xf32>
    %325 = vector.extract_strided_slice %323 {offsets = [0, 0], sizes = [8, 96], strides = [1, 1]} : vector<8x128xf32> to vector<8x96xf32>
    %326 = tpu.concatenate %324, %325 in 1 : vector<8x32xf32>, vector<8x96xf32> -> vector<8x128xf32>
    %327 = arith.mulf %318, %277 : vector<8x128xf32>
    %328 = arith.addf %326, %327 : vector<8x128xf32>
    %329 = math.tanh %328 : vector<8x128xf32>
    %330 = vector.extract_strided_slice %329 {offsets = [0, 64], sizes = [8, 64], strides = [1, 1]} : vector<8x128xf32> to vector<8x64xf32>
    %331 = vector.extract_strided_slice %329 {offsets = [0, 0], sizes = [8, 64], strides = [1, 1]} : vector<8x128xf32> to vector<8x64xf32>
    %332 = tpu.concatenate %330, %331 in 1 : vector<8x64xf32>, vector<8x64xf32> -> vector<8x128xf32>
    %333 = arith.mulf %318, %332 : vector<8x128xf32>
    %334 = arith.negf %313 : vector<8x128xf32>
    %335 = math.exp %334 : vector<8x128xf32>
    %cst_74 = arith.constant 1.000000e+00 : f32
    %336 = vector.broadcast %cst_74 : f32 to vector<8x128xf32>
    %337 = arith.addf %336, %335 : vector<8x128xf32>
    %338 = arith.divf %336, %337 : vector<8x128xf32>
    %339 = math.tanh %313 : vector<8x128xf32>
    %340 = vector.extract_strided_slice %339 {offsets = [0, 64], sizes = [8, 64], strides = [1, 1]} : vector<8x128xf32> to vector<8x64xf32>
    %341 = vector.extract_strided_slice %339 {offsets = [0, 0], sizes = [8, 64], strides = [1, 1]} : vector<8x128xf32> to vector<8x64xf32>
    %342 = tpu.concatenate %340, %341 in 1 : vector<8x64xf32>, vector<8x64xf32> -> vector<8x128xf32>
    %343 = arith.mulf %338, %342 : vector<8x128xf32>
    %344 = vector.extract_strided_slice %343 {offsets = [0, 96], sizes = [8, 32], strides = [1, 1]} : vector<8x128xf32> to vector<8x32xf32>
    %345 = vector.extract_strided_slice %343 {offsets = [0, 0], sizes = [8, 96], strides = [1, 1]} : vector<8x128xf32> to vector<8x96xf32>
    %346 = tpu.concatenate %344, %345 in 1 : vector<8x32xf32>, vector<8x96xf32> -> vector<8x128xf32>
    %347 = arith.mulf %338, %297 : vector<8x128xf32>
    %348 = arith.addf %346, %347 : vector<8x128xf32>
    %349 = math.tanh %348 : vector<8x128xf32>
    %350 = vector.extract_strided_slice %349 {offsets = [0, 64], sizes = [8, 64], strides = [1, 1]} : vector<8x128xf32> to vector<8x64xf32>
    %351 = vector.extract_strided_slice %349 {offsets = [0, 0], sizes = [8, 64], strides = [1, 1]} : vector<8x128xf32> to vector<8x64xf32>
    %352 = tpu.concatenate %350, %351 in 1 : vector<8x64xf32>, vector<8x64xf32> -> vector<8x128xf32>
    %353 = arith.mulf %338, %352 : vector<8x128xf32>
    %c48_75 = arith.constant 48 : index
    %c0_76 = arith.constant 0 : index
    %354 = vector.load %arg9[%c48_75, %c0_76] : memref<64x256xf32, #tpu.memory_space<vmem>>, vector<8x128xf32>
    tpu.vector_store %arg9[%c48_75, %c0_76], %333 {strides = array<i32>} : memref<64x256xf32, #tpu.memory_space<vmem>>, vector<8x128xf32>,
    %c8_77 = arith.constant 8 : index
    %c128_78 = arith.constant 128 : index
    %355 = vector.load %arg9[%c8_77, %c128_78] : memref<64x256xf32, #tpu.memory_space<vmem>>, vector<8x128xf32>
    tpu.vector_store %arg9[%c8_77, %c128_78], %353 {strides = array<i32>} : memref<64x256xf32, #tpu.memory_space<vmem>>, vector<8x128xf32>,
    %c56_79 = arith.constant 56 : index
    %c0_80 = arith.constant 0 : index
    %356 = vector.load %arg8[%c56_79, %c0_80] : memref<64x256xf32, #tpu.memory_space<vmem>>, vector<8x128xf32>
    %c0_81 = arith.constant 0 : index
    %c128_82 = arith.constant 128 : index
    %357 = vector.load %arg8[%c0_81, %c128_82] : memref<64x256xf32, #tpu.memory_space<vmem>>, vector<8x128xf32>
    %358 = tpu.concatenate %333, %353 in 1 : vector<8x128xf32>, vector<8x128xf32> -> vector<8x256xf32>
    %359 = arith.truncf %358 : vector<8x256xf32> to vector<8x256xbf16>
    %cst_83 = arith.constant dense<0.000000e+00> : vector<8x256xf32>
    %360 = tpu.matmul %359, %9, %cst_83 {dimension_numbers = #tpu.dot_dimension_numbers<[1], [0], [0], [1], [0, 0, 1, 1], [], []>} : vector<8x256xbf16>, vector<256x256xbf16>, vector<8x256xf32> -> vector<8x256xf32>
    %361 = vector.extract_strided_slice %360 {offsets = [0, 0], sizes = [8, 128], strides = [1, 1]} : vector<8x256xf32> to vector<8x128xf32>
    %362 = arith.addf %356, %361 : vector<8x128xf32>
    %363 = vector.extract_strided_slice %360 {offsets = [0, 128], sizes = [8, 128], strides = [1, 1]} : vector<8x256xf32> to vector<8x128xf32>
    %364 = arith.addf %357, %363 : vector<8x128xf32>
    %365 = arith.negf %362 : vector<8x128xf32>
    %366 = math.exp %365 : vector<8x128xf32>
    %cst_84 = arith.constant 1.000000e+00 : f32
    %367 = vector.broadcast %cst_84 : f32 to vector<8x128xf32>
    %368 = arith.addf %367, %366 : vector<8x128xf32>
    %369 = arith.divf %367, %368 : vector<8x128xf32>
    %370 = math.tanh %362 : vector<8x128xf32>
    %371 = vector.extract_strided_slice %370 {offsets = [0, 64], sizes = [8, 64], strides = [1, 1]} : vector<8x128xf32> to vector<8x64xf32>
    %372 = vector.extract_strided_slice %370 {offsets = [0, 0], sizes = [8, 64], strides = [1, 1]} : vector<8x128xf32> to vector<8x64xf32>
    %373 = tpu.concatenate %371, %372 in 1 : vector<8x64xf32>, vector<8x64xf32> -> vector<8x128xf32>
    %374 = arith.mulf %369, %373 : vector<8x128xf32>
    %375 = vector.extract_strided_slice %374 {offsets = [0, 96], sizes = [8, 32], strides = [1, 1]} : vector<8x128xf32> to vector<8x32xf32>
    %376 = vector.extract_strided_slice %374 {offsets = [0, 0], sizes = [8, 96], strides = [1, 1]} : vector<8x128xf32> to vector<8x96xf32>
    %377 = tpu.concatenate %375, %376 in 1 : vector<8x32xf32>, vector<8x96xf32> -> vector<8x128xf32>
    %378 = arith.mulf %369, %328 : vector<8x128xf32>
    %379 = arith.addf %377, %378 : vector<8x128xf32>
    %380 = math.tanh %379 : vector<8x128xf32>
    %381 = vector.extract_strided_slice %380 {offsets = [0, 64], sizes = [8, 64], strides = [1, 1]} : vector<8x128xf32> to vector<8x64xf32>
    %382 = vector.extract_strided_slice %380 {offsets = [0, 0], sizes = [8, 64], strides = [1, 1]} : vector<8x128xf32> to vector<8x64xf32>
    %383 = tpu.concatenate %381, %382 in 1 : vector<8x64xf32>, vector<8x64xf32> -> vector<8x128xf32>
    %384 = arith.mulf %369, %383 : vector<8x128xf32>
    %385 = arith.negf %364 : vector<8x128xf32>
    %386 = math.exp %385 : vector<8x128xf32>
    %cst_85 = arith.constant 1.000000e+00 : f32
    %387 = vector.broadcast %cst_85 : f32 to vector<8x128xf32>
    %388 = arith.addf %387, %386 : vector<8x128xf32>
    %389 = arith.divf %387, %388 : vector<8x128xf32>
    %390 = math.tanh %364 : vector<8x128xf32>
    %391 = vector.extract_strided_slice %390 {offsets = [0, 64], sizes = [8, 64], strides = [1, 1]} : vector<8x128xf32> to vector<8x64xf32>
    %392 = vector.extract_strided_slice %390 {offsets = [0, 0], sizes = [8, 64], strides = [1, 1]} : vector<8x128xf32> to vector<8x64xf32>
    %393 = tpu.concatenate %391, %392 in 1 : vector<8x64xf32>, vector<8x64xf32> -> vector<8x128xf32>
    %394 = arith.mulf %389, %393 : vector<8x128xf32>
    %395 = vector.extract_strided_slice %394 {offsets = [0, 96], sizes = [8, 32], strides = [1, 1]} : vector<8x128xf32> to vector<8x32xf32>
    %396 = vector.extract_strided_slice %394 {offsets = [0, 0], sizes = [8, 96], strides = [1, 1]} : vector<8x128xf32> to vector<8x96xf32>
    %397 = tpu.concatenate %395, %396 in 1 : vector<8x32xf32>, vector<8x96xf32> -> vector<8x128xf32>
    %398 = arith.mulf %389, %348 : vector<8x128xf32>
    %399 = arith.addf %397, %398 : vector<8x128xf32>
    %400 = math.tanh %399 : vector<8x128xf32>
    %401 = vector.extract_strided_slice %400 {offsets = [0, 64], sizes = [8, 64], strides = [1, 1]} : vector<8x128xf32> to vector<8x64xf32>
    %402 = vector.extract_strided_slice %400 {offsets = [0, 0], sizes = [8, 64], strides = [1, 1]} : vector<8x128xf32> to vector<8x64xf32>
    %403 = tpu.concatenate %401, %402 in 1 : vector<8x64xf32>, vector<8x64xf32> -> vector<8x128xf32>
    %404 = arith.mulf %389, %403 : vector<8x128xf32>
    %c56_86 = arith.constant 56 : index
    %c0_87 = arith.constant 0 : index
    %405 = vector.load %arg9[%c56_86, %c0_87] : memref<64x256xf32, #tpu.memory_space<vmem>>, vector<8x128xf32>
    tpu.vector_store %arg9[%c56_86, %c0_87], %384 {strides = array<i32>} : memref<64x256xf32, #tpu.memory_space<vmem>>, vector<8x128xf32>,
    %c0_88 = arith.constant 0 : index
    %c128_89 = arith.constant 128 : index
    %406 = vector.load %arg9[%c0_88, %c128_89] : memref<64x256xf32, #tpu.memory_space<vmem>>, vector<8x128xf32>
    tpu.vector_store %arg9[%c0_88, %c128_89], %404 {strides = array<i32>} : memref<64x256xf32, #tpu.memory_space<vmem>>, vector<8x128xf32>,
    %407 = vector.extract_strided_slice %384 {offsets = [0, 96], sizes = [8, 32], strides = [1, 1]} : vector<8x128xf32> to vector<8x32xf32>
    %408 = vector.extract_strided_slice %404 {offsets = [0, 96], sizes = [8, 32], strides = [1, 1]} : vector<8x128xf32> to vector<8x32xf32>
    %409 = vector.extract_strided_slice %379 {offsets = [0, 32], sizes = [8, 32], strides = [1, 1]} : vector<8x128xf32> to vector<8x32xf32>
    %410 = vector.extract_strided_slice %399 {offsets = [0, 32], sizes = [8, 32], strides = [1, 1]} : vector<8x128xf32> to vector<8x32xf32>
    %c0_90 = arith.constant 0 : index
    %c0_91 = arith.constant 0 : index
    %411 = vector.load %arg9[%c0_90, %c0_91] : memref<64x256xf32, #tpu.memory_space<vmem>>, vector<64x256xf32>
    %412 = arith.truncf %411 : vector<64x256xf32> to vector<64x256xbf16>
    %c0_92 = arith.constant 0 : index
    %c0_93 = arith.constant 0 : index
    %c0_94 = arith.constant 0 : index
    %413 = vector.load %arg3[%c0_92, %c0_93, %c0_94] : memref<1x256x256xbf16, #tpu.memory_space<vmem>>, vector<1x256x256xbf16>
    %414 = vector.shape_cast %413 : vector<1x256x256xbf16> to vector<256x256xbf16>
    %cst_95 = arith.constant dense<0.000000e+00> : vector<64x256xf32>
    %415 = tpu.matmul %412, %414, %cst_95 {dimension_numbers = #tpu.dot_dimension_numbers<[1], [0], [0], [1], [0, 0, 1, 1], [], []>} : vector<64x256xbf16>, vector<256x256xbf16>, vector<64x256xf32> -> vector<64x256xf32>
    %c1 = arith.constant 1 : index
    %c0_96 = arith.constant 0 : index
    %c0_97 = arith.constant 0 : index
    %416 = vector.load %arg5[%c1, %c0_96, %c0_97] : memref<2x1x256xf32, #tpu.memory_space<vmem>>, vector<1x1x256xf32>
    %417 = vector.shape_cast %416 : vector<1x1x256xf32> to vector<1x256xf32>
    %418 = vector.broadcast %417 : vector<1x256xf32> to vector<64x256xf32>
    %419 = arith.addf %415, %418 : vector<64x256xf32>
    %c0_98 = arith.constant 0 : index
    %c0_99 = arith.constant 0 : index
    %420 = vector.load %arg8[%c0_98, %c0_99] : memref<64x256xf32, #tpu.memory_space<vmem>>, vector<64x256xf32>
    tpu.vector_store %arg8[%c0_98, %c0_99], %419 {strides = array<i32>} : memref<64x256xf32, #tpu.memory_space<vmem>>, vector<64x256xf32>,
    %c1_100 = arith.constant 1 : index
    %c0_101 = arith.constant 0 : index
    %c0_102 = arith.constant 0 : index
    %421 = vector.load %arg4[%c1_100, %c0_101, %c0_102] : memref<2x256x256xbf16, #tpu.memory_space<vmem>>, vector<1x256x256xbf16>
    %422 = vector.shape_cast %421 : vector<1x256x256xbf16> to vector<256x256xbf16>
    %c0_103 = arith.constant 0 : index
    %c0_104 = arith.constant 0 : index
    %423 = vector.load %arg8[%c0_103, %c0_104] : memref<64x256xf32, #tpu.memory_space<vmem>>, vector<8x128xf32>
    %c56_105 = arith.constant 56 : index
    %c128_106 = arith.constant 128 : index
    %424 = vector.load %arg8[%c56_105, %c128_106] : memref<64x256xf32, #tpu.memory_space<vmem>>, vector<8x128xf32>
    %425 = arith.negf %423 : vector<8x128xf32>
    %426 = math.exp %425 : vector<8x128xf32>
    %cst_107 = arith.constant 1.000000e+00 : f32
    %427 = vector.broadcast %cst_107 : f32 to vector<8x128xf32>
    %428 = arith.addf %427, %426 : vector<8x128xf32>
    %429 = arith.divf %427, %428 : vector<8x128xf32>
    %430 = math.tanh %423 : vector<8x128xf32>
    %431 = vector.extract_strided_slice %430 {offsets = [0, 64], sizes = [8, 64], strides = [1, 1]} : vector<8x128xf32> to vector<8x64xf32>
    %432 = vector.extract_strided_slice %430 {offsets = [0, 0], sizes = [8, 64], strides = [1, 1]} : vector<8x128xf32> to vector<8x64xf32>
    %433 = tpu.concatenate %431, %432 in 1 : vector<8x64xf32>, vector<8x64xf32> -> vector<8x128xf32>
    %434 = arith.mulf %429, %433 : vector<8x128xf32>
    %435 = vector.extract_strided_slice %434 {offsets = [0, 96], sizes = [8, 32], strides = [1, 1]} : vector<8x128xf32> to vector<8x32xf32>
    %436 = vector.extract_strided_slice %434 {offsets = [0, 0], sizes = [8, 96], strides = [1, 1]} : vector<8x128xf32> to vector<8x96xf32>
    %437 = tpu.concatenate %435, %436 in 1 : vector<8x32xf32>, vector<8x96xf32> -> vector<8x128xf32>
    %438 = math.tanh %437 : vector<8x128xf32>
    %439 = vector.extract_strided_slice %438 {offsets = [0, 64], sizes = [8, 64], strides = [1, 1]} : vector<8x128xf32> to vector<8x64xf32>
    %440 = vector.extract_strided_slice %438 {offsets = [0, 0], sizes = [8, 64], strides = [1, 1]} : vector<8x128xf32> to vector<8x64xf32>
    %441 = tpu.concatenate %439, %440 in 1 : vector<8x64xf32>, vector<8x64xf32> -> vector<8x128xf32>
    %442 = arith.mulf %429, %441 : vector<8x128xf32>
    %443 = arith.negf %424 : vector<8x128xf32>
    %444 = math.exp %443 : vector<8x128xf32>
    %cst_108 = arith.constant 1.000000e+00 : f32
    %445 = vector.broadcast %cst_108 : f32 to vector<8x128xf32>
    %446 = arith.addf %445, %444 : vector<8x128xf32>
    %447 = arith.divf %445, %446 : vector<8x128xf32>
    %448 = math.tanh %424 : vector<8x128xf32>
    %449 = vector.extract_strided_slice %448 {offsets = [0, 64], sizes = [8, 64], strides = [1, 1]} : vector<8x128xf32> to vector<8x64xf32>
    %450 = vector.extract_strided_slice %448 {offsets = [0, 0], sizes = [8, 64], strides = [1, 1]} : vector<8x128xf32> to vector<8x64xf32>
    %451 = tpu.concatenate %449, %450 in 1 : vector<8x64xf32>, vector<8x64xf32> -> vector<8x128xf32>
    %452 = arith.mulf %447, %451 : vector<8x128xf32>
    %453 = vector.extract_strided_slice %452 {offsets = [0, 96], sizes = [8, 32], strides = [1, 1]} : vector<8x128xf32> to vector<8x32xf32>
    %454 = vector.extract_strided_slice %452 {offsets = [0, 0], sizes = [8, 96], strides = [1, 1]} : vector<8x128xf32> to vector<8x96xf32>
    %455 = tpu.concatenate %453, %454 in 1 : vector<8x32xf32>, vector<8x96xf32> -> vector<8x128xf32>
    %456 = math.tanh %455 : vector<8x128xf32>
    %457 = vector.extract_strided_slice %456 {offsets = [0, 64], sizes = [8, 64], strides = [1, 1]} : vector<8x128xf32> to vector<8x64xf32>
    %458 = vector.extract_strided_slice %456 {offsets = [0, 0], sizes = [8, 64], strides = [1, 1]} : vector<8x128xf32> to vector<8x64xf32>
    %459 = tpu.concatenate %457, %458 in 1 : vector<8x64xf32>, vector<8x64xf32> -> vector<8x128xf32>
    %460 = arith.mulf %447, %459 : vector<8x128xf32>
    %c8_109 = arith.constant 8 : index
    %c0_110 = arith.constant 0 : index
    %461 = vector.load %arg8[%c8_109, %c0_110] : memref<64x256xf32, #tpu.memory_space<vmem>>, vector<8x128xf32>
    %c48_111 = arith.constant 48 : index
    %c128_112 = arith.constant 128 : index
    %462 = vector.load %arg8[%c48_111, %c128_112] : memref<64x256xf32, #tpu.memory_space<vmem>>, vector<8x128xf32>
    %463 = tpu.concatenate %442, %460 in 1 : vector<8x128xf32>, vector<8x128xf32> -> vector<8x256xf32>
    %464 = arith.truncf %463 : vector<8x256xf32> to vector<8x256xbf16>
    %cst_113 = arith.constant dense<0.000000e+00> : vector<8x256xf32>
    %465 = tpu.matmul %464, %422, %cst_113 {dimension_numbers = #tpu.dot_dimension_numbers<[1], [0], [0], [1], [0, 0, 1, 1], [], []>} : vector<8x256xbf16>, vector<256x256xbf16>, vector<8x256xf32> -> vector<8x256xf32>
    %466 = vector.extract_strided_slice %465 {offsets = [0, 0], sizes = [8, 128], strides = [1, 1]} : vector<8x256xf32> to vector<8x128xf32>
    %467 = arith.addf %461, %466 : vector<8x128xf32>
    %468 = vector.extract_strided_slice %465 {offsets = [0, 128], sizes = [8, 128], strides = [1, 1]} : vector<8x256xf32> to vector<8x128xf32>
    %469 = arith.addf %462, %468 : vector<8x128xf32>
    %470 = arith.negf %467 : vector<8x128xf32>
    %471 = math.exp %470 : vector<8x128xf32>
    %cst_114 = arith.constant 1.000000e+00 : f32
    %472 = vector.broadcast %cst_114 : f32 to vector<8x128xf32>
    %473 = arith.addf %472, %471 : vector<8x128xf32>
    %474 = arith.divf %472, %473 : vector<8x128xf32>
    %475 = math.tanh %467 : vector<8x128xf32>
    %476 = vector.extract_strided_slice %475 {offsets = [0, 64], sizes = [8, 64], strides = [1, 1]} : vector<8x128xf32> to vector<8x64xf32>
    %477 = vector.extract_strided_slice %475 {offsets = [0, 0], sizes = [8, 64], strides = [1, 1]} : vector<8x128xf32> to vector<8x64xf32>
    %478 = tpu.concatenate %476, %477 in 1 : vector<8x64xf32>, vector<8x64xf32> -> vector<8x128xf32>
    %479 = arith.mulf %474, %478 : vector<8x128xf32>
    %480 = vector.extract_strided_slice %479 {offsets = [0, 96], sizes = [8, 32], strides = [1, 1]} : vector<8x128xf32> to vector<8x32xf32>
    %481 = vector.extract_strided_slice %479 {offsets = [0, 0], sizes = [8, 96], strides = [1, 1]} : vector<8x128xf32> to vector<8x96xf32>
    %482 = tpu.concatenate %480, %481 in 1 : vector<8x32xf32>, vector<8x96xf32> -> vector<8x128xf32>
    %483 = arith.mulf %474, %437 : vector<8x128xf32>
    %484 = arith.addf %482, %483 : vector<8x128xf32>
    %485 = math.tanh %484 : vector<8x128xf32>
    %486 = vector.extract_strided_slice %485 {offsets = [0, 64], sizes = [8, 64], strides = [1, 1]} : vector<8x128xf32> to vector<8x64xf32>
    %487 = vector.extract_strided_slice %485 {offsets = [0, 0], sizes = [8, 64], strides = [1, 1]} : vector<8x128xf32> to vector<8x64xf32>
    %488 = tpu.concatenate %486, %487 in 1 : vector<8x64xf32>, vector<8x64xf32> -> vector<8x128xf32>
    %489 = arith.mulf %474, %488 : vector<8x128xf32>
    %490 = arith.negf %469 : vector<8x128xf32>
    %491 = math.exp %490 : vector<8x128xf32>
    %cst_115 = arith.constant 1.000000e+00 : f32
    %492 = vector.broadcast %cst_115 : f32 to vector<8x128xf32>
    %493 = arith.addf %492, %491 : vector<8x128xf32>
    %494 = arith.divf %492, %493 : vector<8x128xf32>
    %495 = math.tanh %469 : vector<8x128xf32>
    %496 = vector.extract_strided_slice %495 {offsets = [0, 64], sizes = [8, 64], strides = [1, 1]} : vector<8x128xf32> to vector<8x64xf32>
    %497 = vector.extract_strided_slice %495 {offsets = [0, 0], sizes = [8, 64], strides = [1, 1]} : vector<8x128xf32> to vector<8x64xf32>
    %498 = tpu.concatenate %496, %497 in 1 : vector<8x64xf32>, vector<8x64xf32> -> vector<8x128xf32>
    %499 = arith.mulf %494, %498 : vector<8x128xf32>
    %500 = vector.extract_strided_slice %499 {offsets = [0, 96], sizes = [8, 32], strides = [1, 1]} : vector<8x128xf32> to vector<8x32xf32>
    %501 = vector.extract_strided_slice %499 {offsets = [0, 0], sizes = [8, 96], strides = [1, 1]} : vector<8x128xf32> to vector<8x96xf32>
    %502 = tpu.concatenate %500, %501 in 1 : vector<8x32xf32>, vector<8x96xf32> -> vector<8x128xf32>
    %503 = arith.mulf %494, %455 : vector<8x128xf32>
    %504 = arith.addf %502, %503 : vector<8x128xf32>
    %505 = math.tanh %504 : vector<8x128xf32>
    %506 = vector.extract_strided_slice %505 {offsets = [0, 64], sizes = [8, 64], strides = [1, 1]} : vector<8x128xf32> to vector<8x64xf32>
    %507 = vector.extract_strided_slice %505 {offsets = [0, 0], sizes = [8, 64], strides = [1, 1]} : vector<8x128xf32> to vector<8x64xf32>
    %508 = tpu.concatenate %506, %507 in 1 : vector<8x64xf32>, vector<8x64xf32> -> vector<8x128xf32>
    %509 = arith.mulf %494, %508 : vector<8x128xf32>
    %c16_116 = arith.constant 16 : index
    %c0_117 = arith.constant 0 : index
    %510 = vector.load %arg8[%c16_116, %c0_117] : memref<64x256xf32, #tpu.memory_space<vmem>>, vector<8x128xf32>
    %c40_118 = arith.constant 40 : index
    %c128_119 = arith.constant 128 : index
    %511 = vector.load %arg8[%c40_118, %c128_119] : memref<64x256xf32, #tpu.memory_space<vmem>>, vector<8x128xf32>
    %512 = tpu.concatenate %489, %509 in 1 : vector<8x128xf32>, vector<8x128xf32> -> vector<8x256xf32>
    %513 = arith.truncf %512 : vector<8x256xf32> to vector<8x256xbf16>
    %cst_120 = arith.constant dense<0.000000e+00> : vector<8x256xf32>
    %514 = tpu.matmul %513, %422, %cst_120 {dimension_numbers = #tpu.dot_dimension_numbers<[1], [0], [0], [1], [0, 0, 1, 1], [], []>} : vector<8x256xbf16>, vector<256x256xbf16>, vector<8x256xf32> -> vector<8x256xf32>
    %515 = vector.extract_strided_slice %514 {offsets = [0, 0], sizes = [8, 128], strides = [1, 1]} : vector<8x256xf32> to vector<8x128xf32>
    %516 = arith.addf %510, %515 : vector<8x128xf32>
    %517 = vector.extract_strided_slice %514 {offsets = [0, 128], sizes = [8, 128], strides = [1, 1]} : vector<8x256xf32> to vector<8x128xf32>
    %518 = arith.addf %511, %517 : vector<8x128xf32>
    %519 = arith.negf %516 : vector<8x128xf32>
    %520 = math.exp %519 : vector<8x128xf32>
    %cst_121 = arith.constant 1.000000e+00 : f32
    %521 = vector.broadcast %cst_121 : f32 to vector<8x128xf32>
    %522 = arith.addf %521, %520 : vector<8x128xf32>
    %523 = arith.divf %521, %522 : vector<8x128xf32>
    %524 = math.tanh %516 : vector<8x128xf32>
    %525 = vector.extract_strided_slice %524 {offsets = [0, 64], sizes = [8, 64], strides = [1, 1]} : vector<8x128xf32> to vector<8x64xf32>
    %526 = vector.extract_strided_slice %524 {offsets = [0, 0], sizes = [8, 64], strides = [1, 1]} : vector<8x128xf32> to vector<8x64xf32>
    %527 = tpu.concatenate %525, %526 in 1 : vector<8x64xf32>, vector<8x64xf32> -> vector<8x128xf32>
    %528 = arith.mulf %523, %527 : vector<8x128xf32>
    %529 = vector.extract_strided_slice %528 {offsets = [0, 96], sizes = [8, 32], strides = [1, 1]} : vector<8x128xf32> to vector<8x32xf32>
    %530 = vector.extract_strided_slice %528 {offsets = [0, 0], sizes = [8, 96], strides = [1, 1]} : vector<8x128xf32> to vector<8x96xf32>
    %531 = tpu.concatenate %529, %530 in 1 : vector<8x32xf32>, vector<8x96xf32> -> vector<8x128xf32>
    %532 = arith.mulf %523, %484 : vector<8x128xf32>
    %533 = arith.addf %531, %532 : vector<8x128xf32>
    %534 = math.tanh %533 : vector<8x128xf32>
    %535 = vector.extract_strided_slice %534 {offsets = [0, 64], sizes = [8, 64], strides = [1, 1]} : vector<8x128xf32> to vector<8x64xf32>
    %536 = vector.extract_strided_slice %534 {offsets = [0, 0], sizes = [8, 64], strides = [1, 1]} : vector<8x128xf32> to vector<8x64xf32>
    %537 = tpu.concatenate %535, %536 in 1 : vector<8x64xf32>, vector<8x64xf32> -> vector<8x128xf32>
    %538 = arith.mulf %523, %537 : vector<8x128xf32>
    %539 = arith.negf %518 : vector<8x128xf32>
    %540 = math.exp %539 : vector<8x128xf32>
    %cst_122 = arith.constant 1.000000e+00 : f32
    %541 = vector.broadcast %cst_122 : f32 to vector<8x128xf32>
    %542 = arith.addf %541, %540 : vector<8x128xf32>
    %543 = arith.divf %541, %542 : vector<8x128xf32>
    %544 = math.tanh %518 : vector<8x128xf32>
    %545 = vector.extract_strided_slice %544 {offsets = [0, 64], sizes = [8, 64], strides = [1, 1]} : vector<8x128xf32> to vector<8x64xf32>
    %546 = vector.extract_strided_slice %544 {offsets = [0, 0], sizes = [8, 64], strides = [1, 1]} : vector<8x128xf32> to vector<8x64xf32>
    %547 = tpu.concatenate %545, %546 in 1 : vector<8x64xf32>, vector<8x64xf32> -> vector<8x128xf32>
    %548 = arith.mulf %543, %547 : vector<8x128xf32>
    %549 = vector.extract_strided_slice %548 {offsets = [0, 96], sizes = [8, 32], strides = [1, 1]} : vector<8x128xf32> to vector<8x32xf32>
    %550 = vector.extract_strided_slice %548 {offsets = [0, 0], sizes = [8, 96], strides = [1, 1]} : vector<8x128xf32> to vector<8x96xf32>
    %551 = tpu.concatenate %549, %550 in 1 : vector<8x32xf32>, vector<8x96xf32> -> vector<8x128xf32>
    %552 = arith.mulf %543, %504 : vector<8x128xf32>
    %553 = arith.addf %551, %552 : vector<8x128xf32>
    %554 = math.tanh %553 : vector<8x128xf32>
    %555 = vector.extract_strided_slice %554 {offsets = [0, 64], sizes = [8, 64], strides = [1, 1]} : vector<8x128xf32> to vector<8x64xf32>
    %556 = vector.extract_strided_slice %554 {offsets = [0, 0], sizes = [8, 64], strides = [1, 1]} : vector<8x128xf32> to vector<8x64xf32>
    %557 = tpu.concatenate %555, %556 in 1 : vector<8x64xf32>, vector<8x64xf32> -> vector<8x128xf32>
    %558 = arith.mulf %543, %557 : vector<8x128xf32>
    %c24_123 = arith.constant 24 : index
    %c0_124 = arith.constant 0 : index
    %559 = vector.load %arg8[%c24_123, %c0_124] : memref<64x256xf32, #tpu.memory_space<vmem>>, vector<8x128xf32>
    %c32_125 = arith.constant 32 : index
    %c128_126 = arith.constant 128 : index
    %560 = vector.load %arg8[%c32_125, %c128_126] : memref<64x256xf32, #tpu.memory_space<vmem>>, vector<8x128xf32>
    %561 = tpu.concatenate %538, %558 in 1 : vector<8x128xf32>, vector<8x128xf32> -> vector<8x256xf32>
    %562 = arith.truncf %561 : vector<8x256xf32> to vector<8x256xbf16>
    %cst_127 = arith.constant dense<0.000000e+00> : vector<8x256xf32>
    %563 = tpu.matmul %562, %422, %cst_127 {dimension_numbers = #tpu.dot_dimension_numbers<[1], [0], [0], [1], [0, 0, 1, 1], [], []>} : vector<8x256xbf16>, vector<256x256xbf16>, vector<8x256xf32> -> vector<8x256xf32>
    %564 = vector.extract_strided_slice %563 {offsets = [0, 0], sizes = [8, 128], strides = [1, 1]} : vector<8x256xf32> to vector<8x128xf32>
    %565 = arith.addf %559, %564 : vector<8x128xf32>
    %566 = vector.extract_strided_slice %563 {offsets = [0, 128], sizes = [8, 128], strides = [1, 1]} : vector<8x256xf32> to vector<8x128xf32>
    %567 = arith.addf %560, %566 : vector<8x128xf32>
    %568 = arith.negf %565 : vector<8x128xf32>
    %569 = math.exp %568 : vector<8x128xf32>
    %cst_128 = arith.constant 1.000000e+00 : f32
    %570 = vector.broadcast %cst_128 : f32 to vector<8x128xf32>
    %571 = arith.addf %570, %569 : vector<8x128xf32>
    %572 = arith.divf %570, %571 : vector<8x128xf32>
    %573 = math.tanh %565 : vector<8x128xf32>
    %574 = vector.extract_strided_slice %573 {offsets = [0, 64], sizes = [8, 64], strides = [1, 1]} : vector<8x128xf32> to vector<8x64xf32>
    %575 = vector.extract_strided_slice %573 {offsets = [0, 0], sizes = [8, 64], strides = [1, 1]} : vector<8x128xf32> to vector<8x64xf32>
    %576 = tpu.concatenate %574, %575 in 1 : vector<8x64xf32>, vector<8x64xf32> -> vector<8x128xf32>
    %577 = arith.mulf %572, %576 : vector<8x128xf32>
    %578 = vector.extract_strided_slice %577 {offsets = [0, 96], sizes = [8, 32], strides = [1, 1]} : vector<8x128xf32> to vector<8x32xf32>
    %579 = vector.extract_strided_slice %577 {offsets = [0, 0], sizes = [8, 96], strides = [1, 1]} : vector<8x128xf32> to vector<8x96xf32>
    %580 = tpu.concatenate %578, %579 in 1 : vector<8x32xf32>, vector<8x96xf32> -> vector<8x128xf32>
    %581 = arith.mulf %572, %533 : vector<8x128xf32>
    %582 = arith.addf %580, %581 : vector<8x128xf32>
    %583 = math.tanh %582 : vector<8x128xf32>
    %584 = vector.extract_strided_slice %583 {offsets = [0, 64], sizes = [8, 64], strides = [1, 1]} : vector<8x128xf32> to vector<8x64xf32>
    %585 = vector.extract_strided_slice %583 {offsets = [0, 0], sizes = [8, 64], strides = [1, 1]} : vector<8x128xf32> to vector<8x64xf32>
    %586 = tpu.concatenate %584, %585 in 1 : vector<8x64xf32>, vector<8x64xf32> -> vector<8x128xf32>
    %587 = arith.mulf %572, %586 : vector<8x128xf32>
    %588 = arith.negf %567 : vector<8x128xf32>
    %589 = math.exp %588 : vector<8x128xf32>
    %cst_129 = arith.constant 1.000000e+00 : f32
    %590 = vector.broadcast %cst_129 : f32 to vector<8x128xf32>
    %591 = arith.addf %590, %589 : vector<8x128xf32>
    %592 = arith.divf %590, %591 : vector<8x128xf32>
    %593 = math.tanh %567 : vector<8x128xf32>
    %594 = vector.extract_strided_slice %593 {offsets = [0, 64], sizes = [8, 64], strides = [1, 1]} : vector<8x128xf32> to vector<8x64xf32>
    %595 = vector.extract_strided_slice %593 {offsets = [0, 0], sizes = [8, 64], strides = [1, 1]} : vector<8x128xf32> to vector<8x64xf32>
    %596 = tpu.concatenate %594, %595 in 1 : vector<8x64xf32>, vector<8x64xf32> -> vector<8x128xf32>
    %597 = arith.mulf %592, %596 : vector<8x128xf32>
    %598 = vector.extract_strided_slice %597 {offsets = [0, 96], sizes = [8, 32], strides = [1, 1]} : vector<8x128xf32> to vector<8x32xf32>
    %599 = vector.extract_strided_slice %597 {offsets = [0, 0], sizes = [8, 96], strides = [1, 1]} : vector<8x128xf32> to vector<8x96xf32>
    %600 = tpu.concatenate %598, %599 in 1 : vector<8x32xf32>, vector<8x96xf32> -> vector<8x128xf32>
    %601 = arith.mulf %592, %553 : vector<8x128xf32>
    %602 = arith.addf %600, %601 : vector<8x128xf32>
    %603 = math.tanh %602 : vector<8x128xf32>
    %604 = vector.extract_strided_slice %603 {offsets = [0, 64], sizes = [8, 64], strides = [1, 1]} : vector<8x128xf32> to vector<8x64xf32>
    %605 = vector.extract_strided_slice %603 {offsets = [0, 0], sizes = [8, 64], strides = [1, 1]} : vector<8x128xf32> to vector<8x64xf32>
    %606 = tpu.concatenate %604, %605 in 1 : vector<8x64xf32>, vector<8x64xf32> -> vector<8x128xf32>
    %607 = arith.mulf %592, %606 : vector<8x128xf32>
    %c32_130 = arith.constant 32 : index
    %c0_131 = arith.constant 0 : index
    %608 = vector.load %arg8[%c32_130, %c0_131] : memref<64x256xf32, #tpu.memory_space<vmem>>, vector<8x128xf32>
    %c24_132 = arith.constant 24 : index
    %c128_133 = arith.constant 128 : index
    %609 = vector.load %arg8[%c24_132, %c128_133] : memref<64x256xf32, #tpu.memory_space<vmem>>, vector<8x128xf32>
    %610 = tpu.concatenate %587, %607 in 1 : vector<8x128xf32>, vector<8x128xf32> -> vector<8x256xf32>
    %611 = arith.truncf %610 : vector<8x256xf32> to vector<8x256xbf16>
    %cst_134 = arith.constant dense<0.000000e+00> : vector<8x256xf32>
    %612 = tpu.matmul %611, %422, %cst_134 {dimension_numbers = #tpu.dot_dimension_numbers<[1], [0], [0], [1], [0, 0, 1, 1], [], []>} : vector<8x256xbf16>, vector<256x256xbf16>, vector<8x256xf32> -> vector<8x256xf32>
    %613 = vector.extract_strided_slice %612 {offsets = [0, 0], sizes = [8, 128], strides = [1, 1]} : vector<8x256xf32> to vector<8x128xf32>
    %614 = arith.addf %608, %613 : vector<8x128xf32>
    %615 = vector.extract_strided_slice %612 {offsets = [0, 128], sizes = [8, 128], strides = [1, 1]} : vector<8x256xf32> to vector<8x128xf32>
    %616 = arith.addf %609, %615 : vector<8x128xf32>
    %617 = arith.negf %614 : vector<8x128xf32>
    %618 = math.exp %617 : vector<8x128xf32>
    %cst_135 = arith.constant 1.000000e+00 : f32
    %619 = vector.broadcast %cst_135 : f32 to vector<8x128xf32>
    %620 = arith.addf %619, %618 : vector<8x128xf32>
    %621 = arith.divf %619, %620 : vector<8x128xf32>
    %622 = math.tanh %614 : vector<8x128xf32>
    %623 = vector.extract_strided_slice %622 {offsets = [0, 64], sizes = [8, 64], strides = [1, 1]} : vector<8x128xf32> to vector<8x64xf32>
    %624 = vector.extract_strided_slice %622 {offsets = [0, 0], sizes = [8, 64], strides = [1, 1]} : vector<8x128xf32> to vector<8x64xf32>
    %625 = tpu.concatenate %623, %624 in 1 : vector<8x64xf32>, vector<8x64xf32> -> vector<8x128xf32>
    %626 = arith.mulf %621, %625 : vector<8x128xf32>
    %627 = vector.extract_strided_slice %626 {offsets = [0, 96], sizes = [8, 32], strides = [1, 1]} : vector<8x128xf32> to vector<8x32xf32>
    %628 = vector.extract_strided_slice %626 {offsets = [0, 0], sizes = [8, 96], strides = [1, 1]} : vector<8x128xf32> to vector<8x96xf32>
    %629 = tpu.concatenate %627, %628 in 1 : vector<8x32xf32>, vector<8x96xf32> -> vector<8x128xf32>
    %630 = arith.mulf %621, %582 : vector<8x128xf32>
    %631 = arith.addf %629, %630 : vector<8x128xf32>
    %632 = math.tanh %631 : vector<8x128xf32>
    %633 = vector.extract_strided_slice %632 {offsets = [0, 64], sizes = [8, 64], strides = [1, 1]} : vector<8x128xf32> to vector<8x64xf32>
    %634 = vector.extract_strided_slice %632 {offsets = [0, 0], sizes = [8, 64], strides = [1, 1]} : vector<8x128xf32> to vector<8x64xf32>
    %635 = tpu.concatenate %633, %634 in 1 : vector<8x64xf32>, vector<8x64xf32> -> vector<8x128xf32>
    %636 = arith.mulf %621, %635 : vector<8x128xf32>
    %637 = arith.negf %616 : vector<8x128xf32>
    %638 = math.exp %637 : vector<8x128xf32>
    %cst_136 = arith.constant 1.000000e+00 : f32
    %639 = vector.broadcast %cst_136 : f32 to vector<8x128xf32>
    %640 = arith.addf %639, %638 : vector<8x128xf32>
    %641 = arith.divf %639, %640 : vector<8x128xf32>
    %642 = math.tanh %616 : vector<8x128xf32>
    %643 = vector.extract_strided_slice %642 {offsets = [0, 64], sizes = [8, 64], strides = [1, 1]} : vector<8x128xf32> to vector<8x64xf32>
    %644 = vector.extract_strided_slice %642 {offsets = [0, 0], sizes = [8, 64], strides = [1, 1]} : vector<8x128xf32> to vector<8x64xf32>
    %645 = tpu.concatenate %643, %644 in 1 : vector<8x64xf32>, vector<8x64xf32> -> vector<8x128xf32>
    %646 = arith.mulf %641, %645 : vector<8x128xf32>
    %647 = vector.extract_strided_slice %646 {offsets = [0, 96], sizes = [8, 32], strides = [1, 1]} : vector<8x128xf32> to vector<8x32xf32>
    %648 = vector.extract_strided_slice %646 {offsets = [0, 0], sizes = [8, 96], strides = [1, 1]} : vector<8x128xf32> to vector<8x96xf32>
    %649 = tpu.concatenate %647, %648 in 1 : vector<8x32xf32>, vector<8x96xf32> -> vector<8x128xf32>
    %650 = arith.mulf %641, %602 : vector<8x128xf32>
    %651 = arith.addf %649, %650 : vector<8x128xf32>
    %652 = math.tanh %651 : vector<8x128xf32>
    %653 = vector.extract_strided_slice %652 {offsets = [0, 64], sizes = [8, 64], strides = [1, 1]} : vector<8x128xf32> to vector<8x64xf32>
    %654 = vector.extract_strided_slice %652 {offsets = [0, 0], sizes = [8, 64], strides = [1, 1]} : vector<8x128xf32> to vector<8x64xf32>
    %655 = tpu.concatenate %653, %654 in 1 : vector<8x64xf32>, vector<8x64xf32> -> vector<8x128xf32>
    %656 = arith.mulf %641, %655 : vector<8x128xf32>
    %c40_137 = arith.constant 40 : index
    %c0_138 = arith.constant 0 : index
    %657 = vector.load %arg8[%c40_137, %c0_138] : memref<64x256xf32, #tpu.memory_space<vmem>>, vector<8x128xf32>
    %c16_139 = arith.constant 16 : index
    %c128_140 = arith.constant 128 : index
    %658 = vector.load %arg8[%c16_139, %c128_140] : memref<64x256xf32, #tpu.memory_space<vmem>>, vector<8x128xf32>
    %659 = tpu.concatenate %636, %656 in 1 : vector<8x128xf32>, vector<8x128xf32> -> vector<8x256xf32>
    %660 = arith.truncf %659 : vector<8x256xf32> to vector<8x256xbf16>
    %cst_141 = arith.constant dense<0.000000e+00> : vector<8x256xf32>
    %661 = tpu.matmul %660, %422, %cst_141 {dimension_numbers = #tpu.dot_dimension_numbers<[1], [0], [0], [1], [0, 0, 1, 1], [], []>} : vector<8x256xbf16>, vector<256x256xbf16>, vector<8x256xf32> -> vector<8x256xf32>
    %662 = vector.extract_strided_slice %661 {offsets = [0, 0], sizes = [8, 128], strides = [1, 1]} : vector<8x256xf32> to vector<8x128xf32>
    %663 = arith.addf %657, %662 : vector<8x128xf32>
    %664 = vector.extract_strided_slice %661 {offsets = [0, 128], sizes = [8, 128], strides = [1, 1]} : vector<8x256xf32> to vector<8x128xf32>
    %665 = arith.addf %658, %664 : vector<8x128xf32>
    %666 = arith.negf %663 : vector<8x128xf32>
    %667 = math.exp %666 : vector<8x128xf32>
    %cst_142 = arith.constant 1.000000e+00 : f32
    %668 = vector.broadcast %cst_142 : f32 to vector<8x128xf32>
    %669 = arith.addf %668, %667 : vector<8x128xf32>
    %670 = arith.divf %668, %669 : vector<8x128xf32>
    %671 = math.tanh %663 : vector<8x128xf32>
    %672 = vector.extract_strided_slice %671 {offsets = [0, 64], sizes = [8, 64], strides = [1, 1]} : vector<8x128xf32> to vector<8x64xf32>
    %673 = vector.extract_strided_slice %671 {offsets = [0, 0], sizes = [8, 64], strides = [1, 1]} : vector<8x128xf32> to vector<8x64xf32>
    %674 = tpu.concatenate %672, %673 in 1 : vector<8x64xf32>, vector<8x64xf32> -> vector<8x128xf32>
    %675 = arith.mulf %670, %674 : vector<8x128xf32>
    %676 = vector.extract_strided_slice %675 {offsets = [0, 96], sizes = [8, 32], strides = [1, 1]} : vector<8x128xf32> to vector<8x32xf32>
    %677 = vector.extract_strided_slice %675 {offsets = [0, 0], sizes = [8, 96], strides = [1, 1]} : vector<8x128xf32> to vector<8x96xf32>
    %678 = tpu.concatenate %676, %677 in 1 : vector<8x32xf32>, vector<8x96xf32> -> vector<8x128xf32>
    %679 = arith.mulf %670, %631 : vector<8x128xf32>
    %680 = arith.addf %678, %679 : vector<8x128xf32>
    %681 = math.tanh %680 : vector<8x128xf32>
    %682 = vector.extract_strided_slice %681 {offsets = [0, 64], sizes = [8, 64], strides = [1, 1]} : vector<8x128xf32> to vector<8x64xf32>
    %683 = vector.extract_strided_slice %681 {offsets = [0, 0], sizes = [8, 64], strides = [1, 1]} : vector<8x128xf32> to vector<8x64xf32>
    %684 = tpu.concatenate %682, %683 in 1 : vector<8x64xf32>, vector<8x64xf32> -> vector<8x128xf32>
    %685 = arith.mulf %670, %684 : vector<8x128xf32>
    %686 = arith.negf %665 : vector<8x128xf32>
    %687 = math.exp %686 : vector<8x128xf32>
    %cst_143 = arith.constant 1.000000e+00 : f32
    %688 = vector.broadcast %cst_143 : f32 to vector<8x128xf32>
    %689 = arith.addf %688, %687 : vector<8x128xf32>
    %690 = arith.divf %688, %689 : vector<8x128xf32>
    %691 = math.tanh %665 : vector<8x128xf32>
    %692 = vector.extract_strided_slice %691 {offsets = [0, 64], sizes = [8, 64], strides = [1, 1]} : vector<8x128xf32> to vector<8x64xf32>
    %693 = vector.extract_strided_slice %691 {offsets = [0, 0], sizes = [8, 64], strides = [1, 1]} : vector<8x128xf32> to vector<8x64xf32>
    %694 = tpu.concatenate %692, %693 in 1 : vector<8x64xf32>, vector<8x64xf32> -> vector<8x128xf32>
    %695 = arith.mulf %690, %694 : vector<8x128xf32>
    %696 = vector.extract_strided_slice %695 {offsets = [0, 96], sizes = [8, 32], strides = [1, 1]} : vector<8x128xf32> to vector<8x32xf32>
    %697 = vector.extract_strided_slice %695 {offsets = [0, 0], sizes = [8, 96], strides = [1, 1]} : vector<8x128xf32> to vector<8x96xf32>
    %698 = tpu.concatenate %696, %697 in 1 : vector<8x32xf32>, vector<8x96xf32> -> vector<8x128xf32>
    %699 = arith.mulf %690, %651 : vector<8x128xf32>
    %700 = arith.addf %698, %699 : vector<8x128xf32>
    %701 = math.tanh %700 : vector<8x128xf32>
    %702 = vector.extract_strided_slice %701 {offsets = [0, 64], sizes = [8, 64], strides = [1, 1]} : vector<8x128xf32> to vector<8x64xf32>
    %703 = vector.extract_strided_slice %701 {offsets = [0, 0], sizes = [8, 64], strides = [1, 1]} : vector<8x128xf32> to vector<8x64xf32>
    %704 = tpu.concatenate %702, %703 in 1 : vector<8x64xf32>, vector<8x64xf32> -> vector<8x128xf32>
    %705 = arith.mulf %690, %704 : vector<8x128xf32>
    %c48_144 = arith.constant 48 : index
    %c0_145 = arith.constant 0 : index
    %706 = vector.load %arg8[%c48_144, %c0_145] : memref<64x256xf32, #tpu.memory_space<vmem>>, vector<8x128xf32>
    %c8_146 = arith.constant 8 : index
    %c128_147 = arith.constant 128 : index
    %707 = vector.load %arg8[%c8_146, %c128_147] : memref<64x256xf32, #tpu.memory_space<vmem>>, vector<8x128xf32>
    %708 = tpu.concatenate %685, %705 in 1 : vector<8x128xf32>, vector<8x128xf32> -> vector<8x256xf32>
    %709 = arith.truncf %708 : vector<8x256xf32> to vector<8x256xbf16>
    %cst_148 = arith.constant dense<0.000000e+00> : vector<8x256xf32>
    %710 = tpu.matmul %709, %422, %cst_148 {dimension_numbers = #tpu.dot_dimension_numbers<[1], [0], [0], [1], [0, 0, 1, 1], [], []>} : vector<8x256xbf16>, vector<256x256xbf16>, vector<8x256xf32> -> vector<8x256xf32>
    %711 = vector.extract_strided_slice %710 {offsets = [0, 0], sizes = [8, 128], strides = [1, 1]} : vector<8x256xf32> to vector<8x128xf32>
    %712 = arith.addf %706, %711 : vector<8x128xf32>
    %713 = vector.extract_strided_slice %710 {offsets = [0, 128], sizes = [8, 128], strides = [1, 1]} : vector<8x256xf32> to vector<8x128xf32>
    %714 = arith.addf %707, %713 : vector<8x128xf32>
    %715 = arith.negf %712 : vector<8x128xf32>
    %716 = math.exp %715 : vector<8x128xf32>
    %cst_149 = arith.constant 1.000000e+00 : f32
    %717 = vector.broadcast %cst_149 : f32 to vector<8x128xf32>
    %718 = arith.addf %717, %716 : vector<8x128xf32>
    %719 = arith.divf %717, %718 : vector<8x128xf32>
    %720 = math.tanh %712 : vector<8x128xf32>
    %721 = vector.extract_strided_slice %720 {offsets = [0, 64], sizes = [8, 64], strides = [1, 1]} : vector<8x128xf32> to vector<8x64xf32>
    %722 = vector.extract_strided_slice %720 {offsets = [0, 0], sizes = [8, 64], strides = [1, 1]} : vector<8x128xf32> to vector<8x64xf32>
    %723 = tpu.concatenate %721, %722 in 1 : vector<8x64xf32>, vector<8x64xf32> -> vector<8x128xf32>
    %724 = arith.mulf %719, %723 : vector<8x128xf32>
    %725 = vector.extract_strided_slice %724 {offsets = [0, 96], sizes = [8, 32], strides = [1, 1]} : vector<8x128xf32> to vector<8x32xf32>
    %726 = vector.extract_strided_slice %724 {offsets = [0, 0], sizes = [8, 96], strides = [1, 1]} : vector<8x128xf32> to vector<8x96xf32>
    %727 = tpu.concatenate %725, %726 in 1 : vector<8x32xf32>, vector<8x96xf32> -> vector<8x128xf32>
    %728 = arith.mulf %719, %680 : vector<8x128xf32>
    %729 = arith.addf %727, %728 : vector<8x128xf32>
    %730 = math.tanh %729 : vector<8x128xf32>
    %731 = vector.extract_strided_slice %730 {offsets = [0, 64], sizes = [8, 64], strides = [1, 1]} : vector<8x128xf32> to vector<8x64xf32>
    %732 = vector.extract_strided_slice %730 {offsets = [0, 0], sizes = [8, 64], strides = [1, 1]} : vector<8x128xf32> to vector<8x64xf32>
    %733 = tpu.concatenate %731, %732 in 1 : vector<8x64xf32>, vector<8x64xf32> -> vector<8x128xf32>
    %734 = arith.mulf %719, %733 : vector<8x128xf32>
    %735 = arith.negf %714 : vector<8x128xf32>
    %736 = math.exp %735 : vector<8x128xf32>
    %cst_150 = arith.constant 1.000000e+00 : f32
    %737 = vector.broadcast %cst_150 : f32 to vector<8x128xf32>
    %738 = arith.addf %737, %736 : vector<8x128xf32>
    %739 = arith.divf %737, %738 : vector<8x128xf32>
    %740 = math.tanh %714 : vector<8x128xf32>
    %741 = vector.extract_strided_slice %740 {offsets = [0, 64], sizes = [8, 64], strides = [1, 1]} : vector<8x128xf32> to vector<8x64xf32>
    %742 = vector.extract_strided_slice %740 {offsets = [0, 0], sizes = [8, 64], strides = [1, 1]} : vector<8x128xf32> to vector<8x64xf32>
    %743 = tpu.concatenate %741, %742 in 1 : vector<8x64xf32>, vector<8x64xf32> -> vector<8x128xf32>
    %744 = arith.mulf %739, %743 : vector<8x128xf32>
    %745 = vector.extract_strided_slice %744 {offsets = [0, 96], sizes = [8, 32], strides = [1, 1]} : vector<8x128xf32> to vector<8x32xf32>
    %746 = vector.extract_strided_slice %744 {offsets = [0, 0], sizes = [8, 96], strides = [1, 1]} : vector<8x128xf32> to vector<8x96xf32>
    %747 = tpu.concatenate %745, %746 in 1 : vector<8x32xf32>, vector<8x96xf32> -> vector<8x128xf32>
    %748 = arith.mulf %739, %700 : vector<8x128xf32>
    %749 = arith.addf %747, %748 : vector<8x128xf32>
    %750 = math.tanh %749 : vector<8x128xf32>
    %751 = vector.extract_strided_slice %750 {offsets = [0, 64], sizes = [8, 64], strides = [1, 1]} : vector<8x128xf32> to vector<8x64xf32>
    %752 = vector.extract_strided_slice %750 {offsets = [0, 0], sizes = [8, 64], strides = [1, 1]} : vector<8x128xf32> to vector<8x64xf32>
    %753 = tpu.concatenate %751, %752 in 1 : vector<8x64xf32>, vector<8x64xf32> -> vector<8x128xf32>
    %754 = arith.mulf %739, %753 : vector<8x128xf32>
    %c56_151 = arith.constant 56 : index
    %c0_152 = arith.constant 0 : index
    %755 = vector.load %arg8[%c56_151, %c0_152] : memref<64x256xf32, #tpu.memory_space<vmem>>, vector<8x128xf32>
    %c0_153 = arith.constant 0 : index
    %c128_154 = arith.constant 128 : index
    %756 = vector.load %arg8[%c0_153, %c128_154] : memref<64x256xf32, #tpu.memory_space<vmem>>, vector<8x128xf32>
    %757 = tpu.concatenate %734, %754 in 1 : vector<8x128xf32>, vector<8x128xf32> -> vector<8x256xf32>
    %758 = arith.truncf %757 : vector<8x256xf32> to vector<8x256xbf16>
    %cst_155 = arith.constant dense<0.000000e+00> : vector<8x256xf32>
    %759 = tpu.matmul %758, %422, %cst_155 {dimension_numbers = #tpu.dot_dimension_numbers<[1], [0], [0], [1], [0, 0, 1, 1], [], []>} : vector<8x256xbf16>, vector<256x256xbf16>, vector<8x256xf32> -> vector<8x256xf32>
    %760 = vector.extract_strided_slice %759 {offsets = [0, 0], sizes = [8, 128], strides = [1, 1]} : vector<8x256xf32> to vector<8x128xf32>
    %761 = arith.addf %755, %760 : vector<8x128xf32>
    %762 = vector.extract_strided_slice %759 {offsets = [0, 128], sizes = [8, 128], strides = [1, 1]} : vector<8x256xf32> to vector<8x128xf32>
    %763 = arith.addf %756, %762 : vector<8x128xf32>
    %764 = arith.negf %761 : vector<8x128xf32>
    %765 = math.exp %764 : vector<8x128xf32>
    %cst_156 = arith.constant 1.000000e+00 : f32
    %766 = vector.broadcast %cst_156 : f32 to vector<8x128xf32>
    %767 = arith.addf %766, %765 : vector<8x128xf32>
    %768 = arith.divf %766, %767 : vector<8x128xf32>
    %769 = math.tanh %761 : vector<8x128xf32>
    %770 = vector.extract_strided_slice %769 {offsets = [0, 64], sizes = [8, 64], strides = [1, 1]} : vector<8x128xf32> to vector<8x64xf32>
    %771 = vector.extract_strided_slice %769 {offsets = [0, 0], sizes = [8, 64], strides = [1, 1]} : vector<8x128xf32> to vector<8x64xf32>
    %772 = tpu.concatenate %770, %771 in 1 : vector<8x64xf32>, vector<8x64xf32> -> vector<8x128xf32>
    %773 = arith.mulf %768, %772 : vector<8x128xf32>
    %774 = vector.extract_strided_slice %773 {offsets = [0, 96], sizes = [8, 32], strides = [1, 1]} : vector<8x128xf32> to vector<8x32xf32>
    %775 = vector.extract_strided_slice %773 {offsets = [0, 0], sizes = [8, 96], strides = [1, 1]} : vector<8x128xf32> to vector<8x96xf32>
    %776 = tpu.concatenate %774, %775 in 1 : vector<8x32xf32>, vector<8x96xf32> -> vector<8x128xf32>
    %777 = arith.mulf %768, %729 : vector<8x128xf32>
    %778 = arith.addf %776, %777 : vector<8x128xf32>
    %779 = math.tanh %778 : vector<8x128xf32>
    %780 = vector.extract_strided_slice %779 {offsets = [0, 64], sizes = [8, 64], strides = [1, 1]} : vector<8x128xf32> to vector<8x64xf32>
    %781 = vector.extract_strided_slice %779 {offsets = [0, 0], sizes = [8, 64], strides = [1, 1]} : vector<8x128xf32> to vector<8x64xf32>
    %782 = tpu.concatenate %780, %781 in 1 : vector<8x64xf32>, vector<8x64xf32> -> vector<8x128xf32>
    %783 = arith.mulf %768, %782 : vector<8x128xf32>
    %784 = arith.negf %763 : vector<8x128xf32>
    %785 = math.exp %784 : vector<8x128xf32>
    %cst_157 = arith.constant 1.000000e+00 : f32
    %786 = vector.broadcast %cst_157 : f32 to vector<8x128xf32>
    %787 = arith.addf %786, %785 : vector<8x128xf32>
    %788 = arith.divf %786, %787 : vector<8x128xf32>
    %789 = math.tanh %763 : vector<8x128xf32>
    %790 = vector.extract_strided_slice %789 {offsets = [0, 64], sizes = [8, 64], strides = [1, 1]} : vector<8x128xf32> to vector<8x64xf32>
    %791 = vector.extract_strided_slice %789 {offsets = [0, 0], sizes = [8, 64], strides = [1, 1]} : vector<8x128xf32> to vector<8x64xf32>
    %792 = tpu.concatenate %790, %791 in 1 : vector<8x64xf32>, vector<8x64xf32> -> vector<8x128xf32>
    %793 = arith.mulf %788, %792 : vector<8x128xf32>
    %794 = vector.extract_strided_slice %793 {offsets = [0, 96], sizes = [8, 32], strides = [1, 1]} : vector<8x128xf32> to vector<8x32xf32>
    %795 = vector.extract_strided_slice %793 {offsets = [0, 0], sizes = [8, 96], strides = [1, 1]} : vector<8x128xf32> to vector<8x96xf32>
    %796 = tpu.concatenate %794, %795 in 1 : vector<8x32xf32>, vector<8x96xf32> -> vector<8x128xf32>
    %797 = arith.mulf %788, %749 : vector<8x128xf32>
    %798 = arith.addf %796, %797 : vector<8x128xf32>
    %799 = math.tanh %798 : vector<8x128xf32>
    %800 = vector.extract_strided_slice %799 {offsets = [0, 64], sizes = [8, 64], strides = [1, 1]} : vector<8x128xf32> to vector<8x64xf32>
    %801 = vector.extract_strided_slice %799 {offsets = [0, 0], sizes = [8, 64], strides = [1, 1]} : vector<8x128xf32> to vector<8x64xf32>
    %802 = tpu.concatenate %800, %801 in 1 : vector<8x64xf32>, vector<8x64xf32> -> vector<8x128xf32>
    %803 = arith.mulf %788, %802 : vector<8x128xf32>
    %804 = vector.extract_strided_slice %783 {offsets = [0, 96], sizes = [8, 32], strides = [1, 1]} : vector<8x128xf32> to vector<8x32xf32>
    %805 = vector.extract_strided_slice %803 {offsets = [0, 96], sizes = [8, 32], strides = [1, 1]} : vector<8x128xf32> to vector<8x32xf32>
    %806 = vector.extract_strided_slice %778 {offsets = [0, 32], sizes = [8, 32], strides = [1, 1]} : vector<8x128xf32> to vector<8x32xf32>
    %807 = vector.extract_strided_slice %798 {offsets = [0, 32], sizes = [8, 32], strides = [1, 1]} : vector<8x128xf32> to vector<8x32xf32>
    %808 = tpu.concatenate %407, %408, %804, %805 in 1 : vector<8x32xf32>, vector<8x32xf32>, vector<8x32xf32>, vector<8x32xf32> -> vector<8x128xf32>
    %c0_158 = arith.constant 0 : index
    %c0_159 = arith.constant 0 : index
    %809 = vector.load %arg6[%c0_158, %c0_159] : memref<8x128xf32, #tpu.memory_space<vmem>>, vector<8x128xf32>
    tpu.vector_store %arg6[%c0_158, %c0_159], %808 {strides = array<i32>} : memref<8x128xf32, #tpu.memory_space<vmem>>, vector<8x128xf32>,
    %810 = tpu.concatenate %409, %410, %806, %807 in 1 : vector<8x32xf32>, vector<8x32xf32>, vector<8x32xf32>, vector<8x32xf32> -> vector<8x128xf32>
    %c0_160 = arith.constant 0 : index
    %c0_161 = arith.constant 0 : index
    %811 = vector.load %arg7[%c0_160, %c0_161] : memref<8x128xf32, #tpu.memory_space<vmem>>, vector<8x128xf32>
    tpu.vector_store %arg7[%c0_160, %c0_161], %810 {strides = array<i32>} : memref<8x128xf32, #tpu.memory_space<vmem>>, vector<8x128xf32>,
    return
  }
  func.func @transform_0(%arg0: i32) -> (i32, i32) {
    %c0_i32 = arith.constant 0 : i32
    %c0_i32_0 = arith.constant 0 : i32
    %c0_i32_1 = arith.constant 0 : i32
    return %c0_i32, %c0_i32_0 : i32, i32
  }
  func.func @transform_1(%arg0: i32) -> (i32, i32) {
    %c0_i32 = arith.constant 0 : i32
    %c0_i32_0 = arith.constant 0 : i32
    %c0_i32_1 = arith.constant 0 : i32
    return %c0_i32, %c0_i32_0 : i32, i32
  }
  func.func @transform_2(%arg0: i32) -> (i32, i32, i32) {
    %c0_i32 = arith.constant 0 : i32
    %c0_i32_0 = arith.constant 0 : i32
    %c0_i32_1 = arith.constant 0 : i32
    %c0_i32_2 = arith.constant 0 : i32
    return %c0_i32, %c0_i32_0, %c0_i32_1 : i32, i32, i32
  }
  func.func @transform_3(%arg0: i32) -> (i32, i32, i32) {
    %c0_i32 = arith.constant 0 : i32
    %c0_i32_0 = arith.constant 0 : i32
    %c0_i32_1 = arith.constant 0 : i32
    %c0_i32_2 = arith.constant 0 : i32
    return %c0_i32, %c0_i32_0, %c0_i32_1 : i32, i32, i32
  }
  func.func @transform_4(%arg0: i32) -> (i32, i32, i32) {
    %c0_i32 = arith.constant 0 : i32
    %c0_i32_0 = arith.constant 0 : i32
    %c0_i32_1 = arith.constant 0 : i32
    %c0_i32_2 = arith.constant 0 : i32
    return %c0_i32, %c0_i32_0, %c0_i32_1 : i32, i32, i32
  }
  func.func @transform_5(%arg0: i32) -> (i32, i32) {
    %c0_i32 = arith.constant 0 : i32
    %c0_i32_0 = arith.constant 0 : i32
    %c0_i32_1 = arith.constant 0 : i32
    return %c0_i32, %c0_i32_0 : i32, i32
  }
  func.func @transform_6(%arg0: i32) -> (i32, i32) {
    %c0_i32 = arith.constant 0 : i32
    %c0_i32_0 = arith.constant 0 : i32
    %c0_i32_1 = arith.constant 0 : i32
    return %c0_i32, %c0_i32_0 : i32, i32
  }
}

</mosaic_0001>

<llo_original>
// kernel: tpu_custom_call.1
$region0: #{tpu_custom_call.1}
  #allocation0 [shape = 'u32[]', space=smem, size = 0x4, offset = 0x4, fixed_abs, tag = 'smem constant byte address 0x4 - core index']
  #allocation1 [shape = 'u32[144,128]{1,0:T(1,128)}', space=vmem, size = 0x12000, scoped, tag = 'internal scratch']
  %s0 = inlined_call_operand.hbm [shape: f32[8,128], index: 0, kind: input, shape index: {}]
  %s1 = inlined_call_operand.hbm [shape: f32[8,128], index: 1, kind: output, shape index: {}]
  %s2 = sld [smem:[#allocation0]]
  $region18: #{tpu_custom_call.1} parent=0
    _
  %s4 = ssub.s32 1, %s2
  %s5 = scalar_select 0, %s4, %s2
  $region1: #{tpu_custom_call.1} parent=0
    #allocation2 [shape = 'u8[4096]{0}', space=vmem, size = 0x1000, scoped, tag = 'input window, operand 0, single buffered']
    #allocation3 [shape = 's32[1]{0}', space=sflag, size = 0x4, scoped, tag = 'scoped memory for tpu_custom_call.1']
    #allocation4 [shape = 's32[1]{0}', space=sflag, size = 0x4, scoped, tag = 'scoped memory for tpu_custom_call.1']
    #allocation5 [shape = 'u8[4096]{0}', space=vmem, size = 0x1000, scoped, tag = 'output window, operand 0, single buffered']
    %6 = vsyncpa [#allocation3], 0
    %7 = vsyncpa [#allocation4], 0
    // Predicated region
    $region2: #{tpu_custom_call.1} parent=1 // pred_check
      _
    $region3: #{tpu_custom_call.1} parent=1 // pred_check_branch
      %9 = sbr.rel (0) target = $region5
    $region4: #{tpu_custom_call.1} parent=1 // pred_region
      %s11 = ssub.s32 128, 128
      %12 = vsyncadd [#allocation3], %s11
      %s14 = sshll.u32 [#allocation2], 4
      %s15 = int_to_ptr.vmem [resolvable:$true] %s14
      %17 = dma.hbm_to_vmem [thread:$0]  %s0, 128, %s15, [#allocation3]
    $region5: #{tpu_custom_call.1} parent=1 // pred_fallthru
      _
    // Predicated region
    $region6: #{tpu_custom_call.1} parent=1 // pred_check
      _
    $region7: #{tpu_custom_call.1} parent=1 // pred_check_branch
      %19 = sbr.rel (0) target = $region9
    $region8: #{tpu_custom_call.1} parent=1 // pred_region
      %20 = dma.done [#allocation3], 128
    $region9: #{tpu_custom_call.1} parent=1 // pred_fallthru
      _
    %v21 = vld [vmem:[#allocation2] sm:$0xff]
    %22 = vrot.lane.b32.xlu0 %v21, 1
    %v23 = vpop.permute.xlu0 %22
    %24 = vst [vmem:[#allocation5] sm:$0xff] %v23
    // Predicated region
    $region10: #{tpu_custom_call.1} parent=1 // pred_check
      _
    $region11: #{tpu_custom_call.1} parent=1 // pred_check_branch
      %26 = sbr.rel (0) target = $region13
    $region12: #{tpu_custom_call.1} parent=1 // pred_region
      %s28 = ssub.s32 128, 128
      %29 = vsyncadd [#allocation4], %s28
      %s31 = sshll.u32 [#allocation5], 4
      %s32 = int_to_ptr.vmem [resolvable:$true] %s31
      %34 = dma.vmem_to_hbm [thread:$0]  %s32, 128, %s1, [#allocation4]
    $region13: #{tpu_custom_call.1} parent=1 // pred_fallthru
      _
    // Predicated region
    $region14: #{tpu_custom_call.1} parent=1 // pred_check
      _
    $region15: #{tpu_custom_call.1} parent=1 // pred_check_branch
      %36 = sbr.rel (0) target = $region17
    $region16: #{tpu_custom_call.1} parent=1 // pred_region
      %37 = dma.done [#allocation4], 128
    $region17: #{tpu_custom_call.1} parent=1 // pred_fallthru
      _
    %38 = vsyncpa [#allocation3], 1
    %39 = vsyncpa [#allocation4], 1

// kernel: encoder_forward.1
$region0: #{encoder_forward.1}
  #allocation0 [shape = 'u32[]', space=smem, size = 0x4, offset = 0x4, fixed_abs, tag = 'smem constant byte address 0x4 - core index']
  #allocation1 [shape = 'u32[144,128]{1,0:T(1,128)}', space=vmem, size = 0x12000, scoped, tag = 'internal scratch']
  #allocation2 [shape = 'f32[64,256]{1,0:T(8,128)}', space=vmem, size = 0x10000, scoped, tag = 'scratch operand']
  #allocation3 [shape = 'f32[64,256]{1,0:T(8,128)}', space=vmem, size = 0x10000, scoped, tag = 'scratch operand']
  %s0 = inlined_call_operand.vmem [shape: bf16[64,32], index: 0, kind: input, shape index: {}]
  %s1 = inlined_call_operand.vmem [shape: bf16[32,256], index: 1, kind: input, shape index: {}]
  %s2 = inlined_call_operand.hbm [shape: bf16[1,256,256], index: 2, kind: input, shape index: {}]
  %s3 = inlined_call_operand.hbm [shape: bf16[2,256,256], index: 3, kind: input, shape index: {}]
  %s4 = inlined_call_operand.vmem [shape: f32[2,1,256], index: 4, kind: input, shape index: {}]
  %s5 = inlined_call_operand.vmem [shape: f32[8,128], index: 5, kind: output, shape index: {0}]
  %s6 = inlined_call_operand.vmem [shape: f32[8,128], index: 6, kind: output, shape index: {1}]
  %7 = xla_tuple %s5, %s6
  %s8 = sld [smem:[#allocation0]]
  $region46: #{encoder_forward.1} parent=0
    _
  %s10 = ssub.s32 1, %s8
  %s11 = scalar_select 0, %s10, %s8
  $region1: #{encoder_forward.1} parent=0
    #allocation4 [shape = 'u8[131072]{0}', space=vmem, size = 0x20000, scoped, tag = 'input window, operand 2, single buffered']
    #allocation5 [shape = 's32[1]{0}', space=sflag, size = 0x4, scoped, tag = 'scoped memory for encoder_forward.1']
    #allocation6 [shape = 'u8[262144]{0}', space=vmem, size = 0x40000, scoped, tag = 'input window, operand 3, single buffered']
    #allocation7 [shape = 's32[1]{0}', space=sflag, size = 0x4, scoped, tag = 'scoped memory for encoder_forward.1']
    %12 = vsyncpa [#allocation5], 0
    %13 = vsyncpa [#allocation7], 0
    // Predicated region
    $region2: #{encoder_forward.1} parent=1 // pred_check
      _
    $region3: #{encoder_forward.1} parent=1 // pred_check_branch
      %15 = sbr.rel (0) target = $region5
    $region4: #{encoder_forward.1} parent=1 // pred_region
      _
    $region5: #{encoder_forward.1} parent=1 // pred_fallthru
      _
    // Predicated region
    $region6: #{encoder_forward.1} parent=1 // pred_check
      _
    $region7: #{encoder_forward.1} parent=1 // pred_check_branch
      %17 = sbr.rel (0) target = $region9
    $region8: #{encoder_forward.1} parent=1 // pred_region
      _
    $region9: #{encoder_forward.1} parent=1 // pred_fallthru
      _
    // Predicated region
    $region10: #{encoder_forward.1} parent=1 // pred_check
      _
    $region11: #{encoder_forward.1} parent=1 // pred_check_branch
      %19 = sbr.rel (0) target = $region13
    $region12: #{encoder_forward.1} parent=1 // pred_region
      %s21 = ssub.s32 4096, 4096
      %22 = vsyncadd [#allocation5], %s21
      %s23 = sshll.u32 [#allocation4], 4
      %s24 = int_to_ptr.vmem [resolvable:$true] %s23
      %29 = dma.hbm_to_vmem [thread:$0]  %s2, 4096, %s24, [#allocation5], 128, 128, 8
    $region13: #{encoder_forward.1} parent=1 // pred_fallthru
      _
    // Predicated region
    $region14: #{encoder_forward.1} parent=1 // pred_check
      _
    $region15: #{encoder_forward.1} parent=1 // pred_check_branch
      %31 = sbr.rel (0) target = $region17
    $region16: #{encoder_forward.1} parent=1 // pred_region
      %s33 = ssub.s32 8192, 8192
      %34 = vsyncadd [#allocation7], %s33
      %s35 = sshll.u32 [#allocation6], 4
      %s36 = int_to_ptr.vmem [resolvable:$true] %s35
      %41 = dma.hbm_to_vmem [thread:$0]  %s3, 8192, %s36, [#allocation7], 128, 128, 8
    $region17: #{encoder_forward.1} parent=1 // pred_fallthru
      _
    // Predicated region
    $region18: #{encoder_forward.1} parent=1 // pred_check
      _
    $region19: #{encoder_forward.1} parent=1 // pred_check_branch
      %43 = sbr.rel (0) target = $region21
    $region20: #{encoder_forward.1} parent=1 // pred_region
      _
    $region21: #{encoder_forward.1} parent=1 // pred_fallthru
      _
    // Predicated region
    $region22: #{encoder_forward.1} parent=1 // pred_check
      _
    $region23: #{encoder_forward.1} parent=1 // pred_check_branch
      %45 = sbr.rel (0) target = $region25
    $region24: #{encoder_forward.1} parent=1 // pred_region
      %46 = dma.done [#allocation5], 4096
    $region25: #{encoder_forward.1} parent=1 // pred_fallthru
      _
    // Predicated region
    $region26: #{encoder_forward.1} parent=1 // pred_check
      _
    $region27: #{encoder_forward.1} parent=1 // pred_check_branch
      %48 = sbr.rel (0) target = $region29
    $region28: #{encoder_forward.1} parent=1 // pred_region
      %49 = dma.done [#allocation7], 8192
    $region29: #{encoder_forward.1} parent=1 // pred_fallthru
      _
    %v51 = vld [vmem:[%s0] sm:$0xf]
    %v52 = vld [vmem:[%s0 + $0x4] sm:$0xf]
    %v53 = vld [vmem:[%s0 + $0x8] sm:$0xf]
    %v54 = vld [vmem:[%s0 + $0xc] sm:$0xf]
    %v55 = vld [vmem:[%s0 + $0x10] sm:$0xf]
    %v56 = vld [vmem:[%s0 + $0x14] sm:$0xf]
    %v57 = vld [vmem:[%s0 + $0x18] sm:$0xf]
    %v58 = vld [vmem:[%s0 + $0x1c] sm:$0xf]
    %v59 = vld [vmem:[%s1] sm:$0xff]
    %v60 = vld [vmem:[%s1 + $0x8] sm:$0xff]
    %v61 = vld [vmem:[%s1 + $0x10] sm:$0xff]
    %v62 = vld [vmem:[%s1 + $0x18] sm:$0xff]
    %v63 = vld [vmem:[%s4] sm:$0x3]
    %v65 = vlaneseq
    %v66 = vshrl.u32 %v65, 7
    %v67 = vsub.s32 0, %v66
    %v68 = vrot.slane %v63, %v67
    %v69 = vlaneseq
    %v70 = vshrl.u32 %v69, 7
    %v71 = vsub.s32 1, %v70
    %v72 = vrot.slane %v63, %v71
    %v83 = vunpack.c.l.b16 %v51
    %v84 = vunpack.c.l.b16 %v52
    %v85 = vunpack.c.l.b16 %v53
    %v86 = vunpack.c.l.b16 %v54
    %v87 = vunpack.c.l.b16 %v55
    %v88 = vunpack.c.l.b16 %v56
    %v89 = vunpack.c.l.b16 %v57
    %v90 = vunpack.c.l.b16 %v58
    %v91 = vpack.c.b16 %v84, %v83
    %v92 = vpack.c.b16 %v86, %v85
    %v93 = vpack.c.b16 %v88, %v87
    %v94 = vpack.c.b16 %v90, %v89
    %v99 = vunpack.c.l.b16 %v59
    %v100 = vunpack.c.h.b16 %v59
    %v101 = vunpack.c.l.b16 %v60
    %v102 = vunpack.c.h.b16 %v60
    %v103 = vunpack.c.l.b16 %v61
    %v104 = vunpack.c.h.b16 %v61
    %v105 = vunpack.c.l.b16 %v62
    %v106 = vunpack.c.h.b16 %v62
    %v107 = vpack.c.b16 %v101, %v99
    %v108 = vpack.c.b16 %v102, %v100
    %v109 = vpack.c.b16 %v105, %v103
    %v110 = vpack.c.b16 %v106, %v104
    %vm115 = vcmask 261120
    %v117 = vsel %vm115, %v91, 0
    %v120 = vsel %vm115, %v92, 0
    %v123 = vsel %vm115, %v93, 0
    %v126 = vsel %vm115, %v94, 0
    %128 = vmatprep.subr.bf16.mxu0 %v108
    %129 = vmatpush1.bf16.msra.mxu0 %v107
    %130 = vmatprep.subr.bf16.mxu0 %v110
    %131 = vmatpush1.bf16.msra.mxu0 %v109
    %132 = vmatprep.subr.bf16.mxu0 0
    %133 = vmatpush1.bf16.msra.mxu0 0
    %134 = vmatprep.subr.bf16.mxu0 0
    %135 = vmatpush1.bf16.msra.mxu0 0
    %136 = vmatprep.subr.bf16.mxu0 0
    %137 = vmatpush1.bf16.msra.mxu0 0
    %138 = vmatprep.subr.bf16.mxu0 0
    %139 = vmatpush1.bf16.msra.mxu0 0
    %140 = vmatprep.subr.bf16.mxu0 0
    %141 = vmatpush1.bf16.msra.mxu0 0
    %142 = vmatprep.subr.bf16.mxu0 0
    %143 = vmatpush1.bf16.msra.mxu0 0
    %144 = vmatprep.subr.bf16.mxu0 0
    %145 = vmatpush1.bf16.msra.mxu0 0
    %146 = vmatprep.subr.bf16.mxu0 0
    %147 = vmatpush1.bf16.msra.mxu0 0
    %148 = vmatprep.subr.bf16.mxu0 0
    %149 = vmatpush1.bf16.msra.mxu0 0
    %150 = vmatprep.subr.bf16.mxu0 0
    %151 = vmatpush1.bf16.msra.mxu0 0
    %152 = vmatprep.subr.bf16.mxu0 0
    %153 = vmatpush1.bf16.msra.mxu0 0
    %154 = vmatprep.subr.bf16.mxu0 0
    %155 = vmatpush1.bf16.msra.mxu0 0
    %156 = vmatprep.subr.bf16.mxu0 0
    %157 = vmatpush1.bf16.msra.mxu0 0
    %158 = vmatprep.subr.bf16.mxu0 0
    %159 = vmatpush1.bf16.msra.mxu0 0
    %160 = vmatprep.mubr.bf16.mxu0 0
    %161 = vmatmul.mubr.bf16.gmra.mrb[0].mxu0 %v117
    %v162 = vpop.f32.mrb[0].mxu0
    %v163 = vadd.f32 %v68, %v162
    %v164 = vpop.f32.mrb[0].mxu0
    %v165 = vadd.f32 %v72, %v164
    %v166 = vpop.f32.mrb[0].mxu0
    %v167 = vadd.f32 %v68, %v166
    %v168 = vpop.f32.mrb[0].mxu0
    %v169 = vadd.f32 %v72, %v168
    %170 = vmatprep.mubr.bf16.mxu0 0
    %171 = vmatmul.mubr.bf16.gmra.mrb[0].mxu0 %v120
    %v172 = vpop.f32.mrb[0].mxu0
    %v173 = vadd.f32 %v68, %v172
    %v174 = vpop.f32.mrb[0].mxu0
    %v175 = vadd.f32 %v72, %v174
    %v176 = vpop.f32.mrb[0].mxu0
    %v177 = vadd.f32 %v68, %v176
    %v178 = vpop.f32.mrb[0].mxu0
    %v179 = vadd.f32 %v72, %v178
    %180 = vmatprep.mubr.bf16.mxu0 0
    %181 = vmatmul.mubr.bf16.gmra.mrb[0].mxu0 %v123
    %v182 = vpop.f32.mrb[0].mxu0
    %v183 = vadd.f32 %v68, %v182
    %v184 = vpop.f32.mrb[0].mxu0
    %v185 = vadd.f32 %v72, %v184
    %v186 = vpop.f32.mrb[0].mxu0
    %v187 = vadd.f32 %v68, %v186
    %v188 = vpop.f32.mrb[0].mxu0
    %v189 = vadd.f32 %v72, %v188
    %190 = vmatprep.mubr.bf16.mxu0 0
    %191 = vmatmul.mubr.bf16.gmra.mrb[0].mxu0 %v126
    %v192 = vpop.f32.mrb[0].mxu0
    %v193 = vadd.f32 %v68, %v192
    %v194 = vpop.f32.mrb[0].mxu0
    %v195 = vadd.f32 %v72, %v194
    %v196 = vpop.f32.mrb[0].mxu0
    %v197 = vadd.f32 %v68, %v196
    %v198 = vpop.f32.mrb[0].mxu0
    %v199 = vadd.f32 %v72, %v198
    %200 = vdwg.mxu0
    %201 = vst [vmem:[#allocation2] sm:$0xff] %v163
    %202 = vst [vmem:[#allocation2 + $0x8] sm:$0xff] %v165
    %203 = vst [vmem:[#allocation2 + $0x10] sm:$0xff] %v167
    %204 = vst [vmem:[#allocation2 + $0x18] sm:$0xff] %v169
    %205 = vst [vmem:[#allocation2 + $0x20] sm:$0xff] %v173
    %206 = vst [vmem:[#allocation2 + $0x28] sm:$0xff] %v175
    %207 = vst [vmem:[#allocation2 + $0x30] sm:$0xff] %v177
    %208 = vst [vmem:[#allocation2 + $0x38] sm:$0xff] %v179
    %209 = vst [vmem:[#allocation2 + $0x40] sm:$0xff] %v183
    %210 = vst [vmem:[#allocation2 + $0x48] sm:$0xff] %v185
    %211 = vst [vmem:[#allocation2 + $0x50] sm:$0xff] %v187
    %212 = vst [vmem:[#allocation2 + $0x58] sm:$0xff] %v189
    %213 = vst [vmem:[#allocation2 + $0x60] sm:$0xff] %v193
    %214 = vst [vmem:[#allocation2 + $0x68] sm:$0xff] %v195
    %215 = vst [vmem:[#allocation2 + $0x70] sm:$0xff] %v197
    %216 = vst [vmem:[#allocation2 + $0x78] sm:$0xff] %v199
    %v217 = vld [vmem:[#allocation6] sm:$0xff]
    %v218 = vld [vmem:[#allocation6 + $0x8] sm:$0xff]
    %v219 = vld [vmem:[#allocation6 + $0x10] sm:$0xff]
    %v220 = vld [vmem:[#allocation6 + $0x18] sm:$0xff]
    %v221 = vld [vmem:[#allocation6 + $0x20] sm:$0xff]
    %v222 = vld [vmem:[#allocation6 + $0x28] sm:$0xff]
    %v223 = vld [vmem:[#allocation6 + $0x30] sm:$0xff]
    %v224 = vld [vmem:[#allocation6 + $0x38] sm:$0xff]
    %v225 = vld [vmem:[#allocation6 + $0x40] sm:$0xff]
    %v226 = vld [vmem:[#allocation6 + $0x48] sm:$0xff]
    %v227 = vld [vmem:[#allocation6 + $0x50] sm:$0xff]
    %v228 = vld [vmem:[#allocation6 + $0x58] sm:$0xff]
    %v229 = vld [vmem:[#allocation6 + $0x60] sm:$0xff]
    %v230 = vld [vmem:[#allocation6 + $0x68] sm:$0xff]
    %v231 = vld [vmem:[#allocation6 + $0x70] sm:$0xff]
    %v232 = vld [vmem:[#allocation6 + $0x78] sm:$0xff]
    %v233 = vld [vmem:[#allocation6 + $0x80] sm:$0xff]
    %v234 = vld [vmem:[#allocation6 + $0x88] sm:$0xff]
    %v235 = vld [vmem:[#allocation6 + $0x90] sm:$0xff]
    %v236 = vld [vmem:[#allocation6 + $0x98] sm:$0xff]
    %v237 = vld [vmem:[#allocation6 + $0xa0] sm:$0xff]
    %v238 = vld [vmem:[#allocation6 + $0xa8] sm:$0xff]
    %v239 = vld [vmem:[#allocation6 + $0xb0] sm:$0xff]
    %v240 = vld [vmem:[#allocation6 + $0xb8] sm:$0xff]
    %v241 = vld [vmem:[#allocation6 + $0xc0] sm:$0xff]
    %v242 = vld [vmem:[#allocation6 + $0xc8] sm:$0xff]
    %v243 = vld [vmem:[#allocation6 + $0xd0] sm:$0xff]
    %v244 = vld [vmem:[#allocation6 + $0xd8] sm:$0xff]
    %v245 = vld [vmem:[#allocation6 + $0xe0] sm:$0xff]
    %v246 = vld [vmem:[#allocation6 + $0xe8] sm:$0xff]
    %v247 = vld [vmem:[#allocation6 + $0xf0] sm:$0xff]
    %v248 = vld [vmem:[#allocation6 + $0xf8] sm:$0xff]
    %v249 = vld [vmem:[#allocation2] sm:$0xff]
    %v250 = vld [vmem:[#allocation2 + $0x78] sm:$0xff]
    %v251 = vxor.u32 %v249, 2147483648
    %v252 = vmul.f32 %v251, 1.442695
    %v253 = vpow.pop %v252
    %v254 = vadd.f32 %v253, 1.0
    %v255 = vrcp.pop %v254
    %v256 = vmul.f32 1.0, %v255
    %v257 = vtanh.pop %v249
    %259 = vrot.lane.b32.xlu0 %v257, 64
    %v260 = vpop.permute.xlu0 %259
    %vm262 = vcmask 523264
    %v263 = vmul.f32 %v256, %v260
    %265 = vrot.lane.b32.xlu0 %v263, 32
    %v266 = vpop.permute.xlu0 %265
    %v268 = vtanh.pop %v266
    %270 = vrot.lane.b32.xlu0 %v268, 64
    %v271 = vpop.permute.xlu0 %270
    %v273 = vmul.f32 %v256, %v271
    %v274 = vxor.u32 %v250, 2147483648
    %v275 = vmul.f32 %v274, 1.442695
    %v276 = vpow.pop %v275
    %v277 = vadd.f32 %v276, 1.0
    %v278 = vrcp.pop %v277
    %v279 = vmul.f32 1.0, %v278
    %v280 = vtanh.pop %v250
    %282 = vrot.lane.b32.xlu0 %v280, 64
    %v283 = vpop.permute.xlu0 %282
    %v285 = vmul.f32 %v279, %v283
    %287 = vrot.lane.b32.xlu0 %v285, 32
    %v288 = vpop.permute.xlu0 %287
    %v290 = vtanh.pop %v288
    %292 = vrot.lane.b32.xlu0 %v290, 64
    %v293 = vpop.permute.xlu0 %292
    %v295 = vmul.f32 %v279, %v293
    %296 = vst [vmem:[#allocation3] sm:$0xff] %v273
    %297 = vst [vmem:[#allocation3 + $0x78] sm:$0xff] %v295
    %v298 = vld [vmem:[#allocation2 + $0x10] sm:$0xff]
    %v299 = vld [vmem:[#allocation2 + $0x68] sm:$0xff]
    %v300 = vpack.c.bf16 %v273, %v273
    %v301 = vpack.c.bf16 %v295, %v295
    %v334 = vunpack.c.l.b16 %v217
    %v335 = vunpack.c.h.b16 %v217
    %v336 = vunpack.c.l.b16 %v218
    %v337 = vunpack.c.h.b16 %v218
    %v338 = vunpack.c.l.b16 %v219
    %v339 = vunpack.c.h.b16 %v219
    %v340 = vunpack.c.l.b16 %v220
    %v341 = vunpack.c.h.b16 %v220
    %v342 = vunpack.c.l.b16 %v221
    %v343 = vunpack.c.h.b16 %v221
    %v344 = vunpack.c.l.b16 %v222
    %v345 = vunpack.c.h.b16 %v222
    %v346 = vunpack.c.l.b16 %v223
    %v347 = vunpack.c.h.b16 %v223
    %v348 = vunpack.c.l.b16 %v224
    %v349 = vunpack.c.h.b16 %v224
    %v350 = vunpack.c.l.b16 %v225
    %v351 = vunpack.c.h.b16 %v225
    %v352 = vunpack.c.l.b16 %v226
    %v353 = vunpack.c.h.b16 %v226
    %v354 = vunpack.c.l.b16 %v227
    %v355 = vunpack.c.h.b16 %v227
    %v356 = vunpack.c.l.b16 %v228
    %v357 = vunpack.c.h.b16 %v228
    %v358 = vunpack.c.l.b16 %v229
    %v359 = vunpack.c.h.b16 %v229
    %v360 = vunpack.c.l.b16 %v230
    %v361 = vunpack.c.h.b16 %v230
    %v362 = vunpack.c.l.b16 %v231
    %v363 = vunpack.c.h.b16 %v231
    %v364 = vunpack.c.l.b16 %v232
    %v365 = vunpack.c.h.b16 %v232
    %v366 = vunpack.c.l.b16 %v233
    %v367 = vunpack.c.h.b16 %v233
    %v368 = vunpack.c.l.b16 %v234
    %v369 = vunpack.c.h.b16 %v234
    %v370 = vunpack.c.l.b16 %v235
    %v371 = vunpack.c.h.b16 %v235
    %v372 = vunpack.c.l.b16 %v236
    %v373 = vunpack.c.h.b16 %v236
    %v374 = vunpack.c.l.b16 %v237
    %v375 = vunpack.c.h.b16 %v237
    %v376 = vunpack.c.l.b16 %v238
    %v377 = vunpack.c.h.b16 %v238
    %v378 = vunpack.c.l.b16 %v239
    %v379 = vunpack.c.h.b16 %v239
    %v380 = vunpack.c.l.b16 %v240
    %v381 = vunpack.c.h.b16 %v240
    %v382 = vunpack.c.l.b16 %v241
    %v383 = vunpack.c.h.b16 %v241
    %v384 = vunpack.c.l.b16 %v242
    %v385 = vunpack.c.h.b16 %v242
    %v386 = vunpack.c.l.b16 %v243
    %v387 = vunpack.c.h.b16 %v243
    %v388 = vunpack.c.l.b16 %v244
    %v389 = vunpack.c.h.b16 %v244
    %v390 = vunpack.c.l.b16 %v245
    %v391 = vunpack.c.h.b16 %v245
    %v392 = vunpack.c.l.b16 %v246
    %v393 = vunpack.c.h.b16 %v246
    %v394 = vunpack.c.l.b16 %v247
    %v395 = vunpack.c.h.b16 %v247
    %v396 = vunpack.c.l.b16 %v248
    %v397 = vunpack.c.h.b16 %v248
    %v398 = vpack.c.b16 %v336, %v334
    %v399 = vpack.c.b16 %v337, %v335
    %v400 = vpack.c.b16 %v340, %v338
    %v401 = vpack.c.b16 %v341, %v339
    %v402 = vpack.c.b16 %v344, %v342
    %v403 = vpack.c.b16 %v345, %v343
    %v404 = vpack.c.b16 %v348, %v346
    %v405 = vpack.c.b16 %v349, %v347
    %v406 = vpack.c.b16 %v352, %v350
    %v407 = vpack.c.b16 %v353, %v351
    %v408 = vpack.c.b16 %v356, %v354
    %v409 = vpack.c.b16 %v357, %v355
    %v410 = vpack.c.b16 %v360, %v358
    %v411 = vpack.c.b16 %v361, %v359
    %v412 = vpack.c.b16 %v364, %v362
    %v413 = vpack.c.b16 %v365, %v363
    %v414 = vpack.c.b16 %v368, %v366
    %v415 = vpack.c.b16 %v369, %v367
    %v416 = vpack.c.b16 %v372, %v370
    %v417 = vpack.c.b16 %v373, %v371
    %v418 = vpack.c.b16 %v376, %v374
    %v419 = vpack.c.b16 %v377, %v375
    %v420 = vpack.c.b16 %v380, %v378
    %v421 = vpack.c.b16 %v381, %v379
    %v422 = vpack.c.b16 %v384, %v382
    %v423 = vpack.c.b16 %v385, %v383
    %v424 = vpack.c.b16 %v388, %v386
    %v425 = vpack.c.b16 %v389, %v387
    %v426 = vpack.c.b16 %v392, %v390
    %v427 = vpack.c.b16 %v393, %v391
    %v428 = vpack.c.b16 %v396, %v394
    %v429 = vpack.c.b16 %v397, %v395
    %462 = vmatprep.subr.bf16.mxu0 %v399
    %463 = vmatpush1.bf16.msra.mxu0 %v398
    %464 = vmatprep.subr.bf16.mxu0 %v401
    %465 = vmatpush1.bf16.msra.mxu0 %v400
    %466 = vmatprep.subr.bf16.mxu0 %v403
    %467 = vmatpush1.bf16.msra.mxu0 %v402
    %468 = vmatprep.subr.bf16.mxu0 %v405
    %469 = vmatpush1.bf16.msra.mxu0 %v404
    %470 = vmatprep.subr.bf16.mxu0 %v407
    %471 = vmatpush1.bf16.msra.mxu0 %v406
    %472 = vmatprep.subr.bf16.mxu0 %v409
    %473 = vmatpush1.bf16.msra.mxu0 %v408
    %474 = vmatprep.subr.bf16.mxu0 %v411
    %475 = vmatpush1.bf16.msra.mxu0 %v410
    %476 = vmatprep.subr.bf16.mxu0 %v413
    %477 = vmatpush1.bf16.msra.mxu0 %v412
    %478 = vmatprep.subr.bf16.mxu0 %v415
    %479 = vmatpush1.bf16.msra.mxu0 %v414
    %480 = vmatprep.subr.bf16.mxu0 %v417
    %481 = vmatpush1.bf16.msra.mxu0 %v416
    %482 = vmatprep.subr.bf16.mxu0 %v419
    %483 = vmatpush1.bf16.msra.mxu0 %v418
    %484 = vmatprep.subr.bf16.mxu0 %v421
    %485 = vmatpush1.bf16.msra.mxu0 %v420
    %486 = vmatprep.subr.bf16.mxu0 %v423
    %487 = vmatpush1.bf16.msra.mxu0 %v422
    %488 = vmatprep.subr.bf16.mxu0 %v425
    %489 = vmatpush1.bf16.msra.mxu0 %v424
    %490 = vmatprep.subr.bf16.mxu0 %v427
    %491 = vmatpush1.bf16.msra.mxu0 %v426
    %492 = vmatprep.subr.bf16.mxu0 %v429
    %493 = vmatpush1.bf16.msra.mxu0 %v428
    %494 = vmatprep.mubr.bf16.mxu0 %v301
    %495 = vmatmul.mubr.bf16.gmra.mrb[0].mxu0 %v300
    %v496 = vpop.f32.mrb[0].mxu0
    %v497 = vadd.f32 0.0, %v496
    %v498 = vpop.f32.mrb[0].mxu0
    %v499 = vadd.f32 0.0, %v498
    %v500 = vpop.f32.mrb[0].mxu0
    %v501 = vpop.f32.mrb[0].mxu0
    %502 = vdwg.mxu0
    %v503 = vadd.f32 %v298, %v497
    %v504 = vadd.f32 %v299, %v499
    %v505 = vxor.u32 %v503, 2147483648
    %v506 = vmul.f32 %v505, 1.442695
    %v507 = vpow.pop %v506
    %v508 = vadd.f32 %v507, 1.0
    %v509 = vrcp.pop %v508
    %v510 = vmul.f32 1.0, %v509
    %v511 = vtanh.pop %v503
    %513 = vrot.lane.b32.xlu0 %v511, 64
    %v514 = vpop.permute.xlu0 %513
    %v516 = vmul.f32 %v510, %v514
    %518 = vrot.lane.b32.xlu0 %v516, 32
    %v519 = vpop.permute.xlu0 %518
    %v521 = vmul.f32 %v510, %v266
    %v522 = vadd.f32 %v519, %v521
    %v523 = vtanh.pop %v522
    %525 = vrot.lane.b32.xlu0 %v523, 64
    %v526 = vpop.permute.xlu0 %525
    %v528 = vmul.f32 %v510, %v526
    %v529 = vxor.u32 %v504, 2147483648
    %v530 = vmul.f32 %v529, 1.442695
    %v531 = vpow.pop %v530
    %v532 = vadd.f32 %v531, 1.0
    %v533 = vrcp.pop %v532
    %v534 = vmul.f32 1.0, %v533
    %v535 = vtanh.pop %v504
    %537 = vrot.lane.b32.xlu0 %v535, 64
    %v538 = vpop.permute.xlu0 %537
    %v540 = vmul.f32 %v534, %v538
    %542 = vrot.lane.b32.xlu0 %v540, 32
    %v543 = vpop.permute.xlu0 %542
    %v545 = vmul.f32 %v534, %v288
    %v546 = vadd.f32 %v543, %v545
    %v547 = vtanh.pop %v546
    %549 = vrot.lane.b32.xlu0 %v547, 64
    %v550 = vpop.permute.xlu0 %549
    %v552 = vmul.f32 %v534, %v550
    %553 = vst [vmem:[#allocation3 + $0x10] sm:$0xff] %v528
    %554 = vst [vmem:[#allocation3 + $0x68] sm:$0xff] %v552
    %v555 = vld [vmem:[#allocation2 + $0x20] sm:$0xff]
    %v556 = vld [vmem:[#allocation2 + $0x58] sm:$0xff]
    %v557 = vpack.c.bf16 %v528, %v528
    %v558 = vpack.c.bf16 %v552, %v552
    %559 = vmatprep.subr.bf16.mxu0 %v399
    %560 = vmatpush1.bf16.msra.mxu0 %v398
    %561 = vmatprep.subr.bf16.mxu0 %v401
    %562 = vmatpush1.bf16.msra.mxu0 %v400
    %563 = vmatprep.subr.bf16.mxu0 %v403
    %564 = vmatpush1.bf16.msra.mxu0 %v402
    %565 = vmatprep.subr.bf16.mxu0 %v405
    %566 = vmatpush1.bf16.msra.mxu0 %v404
    %567 = vmatprep.subr.bf16.mxu0 %v407
    %568 = vmatpush1.bf16.msra.mxu0 %v406
    %569 = vmatprep.subr.bf16.mxu0 %v409
    %570 = vmatpush1.bf16.msra.mxu0 %v408
    %571 = vmatprep.subr.bf16.mxu0 %v411
    %572 = vmatpush1.bf16.msra.mxu0 %v410
    %573 = vmatprep.subr.bf16.mxu0 %v413
    %574 = vmatpush1.bf16.msra.mxu0 %v412
    %575 = vmatprep.subr.bf16.mxu0 %v415
    %576 = vmatpush1.bf16.msra.mxu0 %v414
    %577 = vmatprep.subr.bf16.mxu0 %v417
    %578 = vmatpush1.bf16.msra.mxu0 %v416
    %579 = vmatprep.subr.bf16.mxu0 %v419
    %580 = vmatpush1.bf16.msra.mxu0 %v418
    %581 = vmatprep.subr.bf16.mxu0 %v421
    %582 = vmatpush1.bf16.msra.mxu0 %v420
    %583 = vmatprep.subr.bf16.mxu0 %v423
    %584 = vmatpush1.bf16.msra.mxu0 %v422
    %585 = vmatprep.subr.bf16.mxu0 %v425
    %586 = vmatpush1.bf16.msra.mxu0 %v424
    %587 = vmatprep.subr.bf16.mxu0 %v427
    %588 = vmatpush1.bf16.msra.mxu0 %v426
    %589 = vmatprep.subr.bf16.mxu0 %v429
    %590 = vmatpush1.bf16.msra.mxu0 %v428
    %591 = vmatprep.mubr.bf16.mxu0 %v558
    %592 = vmatmul.mubr.bf16.gmra.mrb[0].mxu0 %v557
    %v593 = vpop.f32.mrb[0].mxu0
    %v594 = vadd.f32 0.0, %v593
    %v595 = vpop.f32.mrb[0].mxu0
    %v596 = vadd.f32 0.0, %v595
    %v597 = vpop.f32.mrb[0].mxu0
    %v598 = vpop.f32.mrb[0].mxu0
    %599 = vdwg.mxu0
    %v600 = vadd.f32 %v555, %v594
    %v601 = vadd.f32 %v556, %v596
    %v602 = vxor.u32 %v600, 2147483648
    %v603 = vmul.f32 %v602, 1.442695
    %v604 = vpow.pop %v603
    %v605 = vadd.f32 %v604, 1.0
    %v606 = vrcp.pop %v605
    %v607 = vmul.f32 1.0, %v606
    %v608 = vtanh.pop %v600
    %610 = vrot.lane.b32.xlu0 %v608, 64
    %v611 = vpop.permute.xlu0 %610
    %v613 = vmul.f32 %v607, %v611
    %615 = vrot.lane.b32.xlu0 %v613, 32
    %v616 = vpop.permute.xlu0 %615
    %v618 = vmul.f32 %v607, %v522
    %v619 = vadd.f32 %v616, %v618
    %v620 = vtanh.pop %v619
    %622 = vrot.lane.b32.xlu0 %v620, 64
    %v623 = vpop.permute.xlu0 %622
    %v625 = vmul.f32 %v607, %v623
    %v626 = vxor.u32 %v601, 2147483648
    %v627 = vmul.f32 %v626, 1.442695
    %v628 = vpow.pop %v627
    %v629 = vadd.f32 %v628, 1.0
    %v630 = vrcp.pop %v629
    %v631 = vmul.f32 1.0, %v630
    %v632 = vtanh.pop %v601
    %634 = vrot.lane.b32.xlu0 %v632, 64
    %v635 = vpop.permute.xlu0 %634
    %v637 = vmul.f32 %v631, %v635
    %639 = vrot.lane.b32.xlu0 %v637, 32
    %v640 = vpop.permute.xlu0 %639
    %v642 = vmul.f32 %v631, %v546
    %v643 = vadd.f32 %v640, %v642
    %v644 = vtanh.pop %v643
    %646 = vrot.lane.b32.xlu0 %v644, 64
    %v647 = vpop.permute.xlu0 %646
    %v649 = vmul.f32 %v631, %v647
    %650 = vst [vmem:[#allocation3 + $0x20] sm:$0xff] %v625
    %651 = vst [vmem:[#allocation3 + $0x58] sm:$0xff] %v649
    %v652 = vld [vmem:[#allocation2 + $0x30] sm:$0xff]
    %v653 = vld [vmem:[#allocation2 + $0x48] sm:$0xff]
    %v654 = vpack.c.bf16 %v625, %v625
    %v655 = vpack.c.bf16 %v649, %v649
    %656 = vmatprep.subr.bf16.mxu0 %v399
    %657 = vmatpush1.bf16.msra.mxu0 %v398
    %658 = vmatprep.subr.bf16.mxu0 %v401
    %659 = vmatpush1.bf16.msra.mxu0 %v400
    %660 = vmatprep.subr.bf16.mxu0 %v403
    %661 = vmatpush1.bf16.msra.mxu0 %v402
    %662 = vmatprep.subr.bf16.mxu0 %v405
    %663 = vmatpush1.bf16.msra.mxu0 %v404
    %664 = vmatprep.subr.bf16.mxu0 %v407
    %665 = vmatpush1.bf16.msra.mxu0 %v406
    %666 = vmatprep.subr.bf16.mxu0 %v409
    %667 = vmatpush1.bf16.msra.mxu0 %v408
    %668 = vmatprep.subr.bf16.mxu0 %v411
    %669 = vmatpush1.bf16.msra.mxu0 %v410
    %670 = vmatprep.subr.bf16.mxu0 %v413
    %671 = vmatpush1.bf16.msra.mxu0 %v412
    %672 = vmatprep.subr.bf16.mxu0 %v415
    %673 = vmatpush1.bf16.msra.mxu0 %v414
    %674 = vmatprep.subr.bf16.mxu0 %v417
    %675 = vmatpush1.bf16.msra.mxu0 %v416
    %676 = vmatprep.subr.bf16.mxu0 %v419
    %677 = vmatpush1.bf16.msra.mxu0 %v418
    %678 = vmatprep.subr.bf16.mxu0 %v421
    %679 = vmatpush1.bf16.msra.mxu0 %v420
    %680 = vmatprep.subr.bf16.mxu0 %v423
    %681 = vmatpush1.bf16.msra.mxu0 %v422
    %682 = vmatprep.subr.bf16.mxu0 %v425
    %683 = vmatpush1.bf16.msra.mxu0 %v424
    %684 = vmatprep.subr.bf16.mxu0 %v427
    %685 = vmatpush1.bf16.msra.mxu0 %v426
    %686 = vmatprep.subr.bf16.mxu0 %v429
    %687 = vmatpush1.bf16.msra.mxu0 %v428
    %688 = vmatprep.mubr.bf16.mxu0 %v655
    %689 = vmatmul.mubr.bf16.gmra.mrb[0].mxu0 %v654
    %v690 = vpop.f32.mrb[0].mxu0
    %v691 = vadd.f32 0.0, %v690
    %v692 = vpop.f32.mrb[0].mxu0
    %v693 = vadd.f32 0.0, %v692
    %v694 = vpop.f32.mrb[0].mxu0
    %v695 = vpop.f32.mrb[0].mxu0
    %696 = vdwg.mxu0
    %v697 = vadd.f32 %v652, %v691
    %v698 = vadd.f32 %v653, %v693
    %v699 = vxor.u32 %v697, 2147483648
    %v700 = vmul.f32 %v699, 1.442695
    %v701 = vpow.pop %v700
    %v702 = vadd.f32 %v701, 1.0
    %v703 = vrcp.pop %v702
    %v704 = vmul.f32 1.0, %v703
    %v705 = vtanh.pop %v697
    %707 = vrot.lane.b32.xlu0 %v705, 64
    %v708 = vpop.permute.xlu0 %707
    %v710 = vmul.f32 %v704, %v708
    %712 = vrot.lane.b32.xlu0 %v710, 32
    %v713 = vpop.permute.xlu0 %712
    %v715 = vmul.f32 %v704, %v619
    %v716 = vadd.f32 %v713, %v715
    %v717 = vtanh.pop %v716
    %719 = vrot.lane.b32.xlu0 %v717, 64
    %v720 = vpop.permute.xlu0 %719
    %v722 = vmul.f32 %v704, %v720
    %v723 = vxor.u32 %v698, 2147483648
    %v724 = vmul.f32 %v723, 1.442695
    %v725 = vpow.pop %v724
    %v726 = vadd.f32 %v725, 1.0
    %v727 = vrcp.pop %v726
    %v728 = vmul.f32 1.0, %v727
    %v729 = vtanh.pop %v698
    %731 = vrot.lane.b32.xlu0 %v729, 64
    %v732 = vpop.permute.xlu0 %731
    %v734 = vmul.f32 %v728, %v732
    %736 = vrot.lane.b32.xlu0 %v734, 32
    %v737 = vpop.permute.xlu0 %736
    %v739 = vmul.f32 %v728, %v643
    %v740 = vadd.f32 %v737, %v739
    %v741 = vtanh.pop %v740
    %743 = vrot.lane.b32.xlu0 %v741, 64
    %v744 = vpop.permute.xlu0 %743
    %v746 = vmul.f32 %v728, %v744
    %747 = vst [vmem:[#allocation3 + $0x30] sm:$0xff] %v722
    %748 = vst [vmem:[#allocation3 + $0x48] sm:$0xff] %v746
    %v749 = vld [vmem:[#allocation2 + $0x40] sm:$0xff]
    %v750 = vld [vmem:[#allocation2 + $0x38] sm:$0xff]
    %v751 = vpack.c.bf16 %v722, %v722
    %v752 = vpack.c.bf16 %v746, %v746
    %753 = vmatprep.subr.bf16.mxu0 %v399
    %754 = vmatpush1.bf16.msra.mxu0 %v398
    %755 = vmatprep.subr.bf16.mxu0 %v401
    %756 = vmatpush1.bf16.msra.mxu0 %v400
    %757 = vmatprep.subr.bf16.mxu0 %v403
    %758 = vmatpush1.bf16.msra.mxu0 %v402
    %759 = vmatprep.subr.bf16.mxu0 %v405
    %760 = vmatpush1.bf16.msra.mxu0 %v404
    %761 = vmatprep.subr.bf16.mxu0 %v407
    %762 = vmatpush1.bf16.msra.mxu0 %v406
    %763 = vmatprep.subr.bf16.mxu0 %v409
    %764 = vmatpush1.bf16.msra.mxu0 %v408
    %765 = vmatprep.subr.bf16.mxu0 %v411
    %766 = vmatpush1.bf16.msra.mxu0 %v410
    %767 = vmatprep.subr.bf16.mxu0 %v413
    %768 = vmatpush1.bf16.msra.mxu0 %v412
    %769 = vmatprep.subr.bf16.mxu0 %v415
    %770 = vmatpush1.bf16.msra.mxu0 %v414
    %771 = vmatprep.subr.bf16.mxu0 %v417
    %772 = vmatpush1.bf16.msra.mxu0 %v416
    %773 = vmatprep.subr.bf16.mxu0 %v419
    %774 = vmatpush1.bf16.msra.mxu0 %v418
    %775 = vmatprep.subr.bf16.mxu0 %v421
    %776 = vmatpush1.bf16.msra.mxu0 %v420
    %777 = vmatprep.subr.bf16.mxu0 %v423
    %778 = vmatpush1.bf16.msra.mxu0 %v422
    %779 = vmatprep.subr.bf16.mxu0 %v425
    %780 = vmatpush1.bf16.msra.mxu0 %v424
    %781 = vmatprep.subr.bf16.mxu0 %v427
    %782 = vmatpush1.bf16.msra.mxu0 %v426
    %783 = vmatprep.subr.bf16.mxu0 %v429
    %784 = vmatpush1.bf16.msra.mxu0 %v428
    %785 = vmatprep.mubr.bf16.mxu0 %v752
    %786 = vmatmul.mubr.bf16.gmra.mrb[0].mxu0 %v751
    %v787 = vpop.f32.mrb[0].mxu0
    %v788 = vadd.f32 0.0, %v787
    %v789 = vpop.f32.mrb[0].mxu0
    %v790 = vadd.f32 0.0, %v789
    %v791 = vpop.f32.mrb[0].mxu0
    %v792 = vpop.f32.mrb[0].mxu0
    %793 = vdwg.mxu0
    %v794 = vadd.f32 %v749, %v788
    %v795 = vadd.f32 %v750, %v790
    %v796 = vxor.u32 %v794, 2147483648
    %v797 = vmul.f32 %v796, 1.442695
    %v798 = vpow.pop %v797
    %v799 = vadd.f32 %v798, 1.0
    %v800 = vrcp.pop %v799
    %v801 = vmul.f32 1.0, %v800
    %v802 = vtanh.pop %v794
    %804 = vrot.lane.b32.xlu0 %v802, 64
    %v805 = vpop.permute.xlu0 %804
    %v807 = vmul.f32 %v801, %v805
    %809 = vrot.lane.b32.xlu0 %v807, 32
    %v810 = vpop.permute.xlu0 %809
    %v812 = vmul.f32 %v801, %v716
    %v813 = vadd.f32 %v810, %v812
    %v814 = vtanh.pop %v813
    %816 = vrot.lane.b32.xlu0 %v814, 64
    %v817 = vpop.permute.xlu0 %816
    %v819 = vmul.f32 %v801, %v817
    %v820 = vxor.u32 %v795, 2147483648
    %v821 = vmul.f32 %v820, 1.442695
    %v822 = vpow.pop %v821
    %v823 = vadd.f32 %v822, 1.0
    %v824 = vrcp.pop %v823
    %v825 = vmul.f32 1.0, %v824
    %v826 = vtanh.pop %v795
    %828 = vrot.lane.b32.xlu0 %v826, 64
    %v829 = vpop.permute.xlu0 %828
    %v831 = vmul.f32 %v825, %v829
    %833 = vrot.lane.b32.xlu0 %v831, 32
    %v834 = vpop.permute.xlu0 %833
    %v836 = vmul.f32 %v825, %v740
    %v837 = vadd.f32 %v834, %v836
    %v838 = vtanh.pop %v837
    %840 = vrot.lane.b32.xlu0 %v838, 64
    %v841 = vpop.permute.xlu0 %840
    %v843 = vmul.f32 %v825, %v841
    %844 = vst [vmem:[#allocation3 + $0x40] sm:$0xff] %v819
    %845 = vst [vmem:[#allocation3 + $0x38] sm:$0xff] %v843
    %v846 = vld [vmem:[#allocation2 + $0x50] sm:$0xff]
    %v847 = vld [vmem:[#allocation2 + $0x28] sm:$0xff]
    %v848 = vpack.c.bf16 %v819, %v819
    %v849 = vpack.c.bf16 %v843, %v843
    %850 = vmatprep.subr.bf16.mxu0 %v399
    %851 = vmatpush1.bf16.msra.mxu0 %v398
    %852 = vmatprep.subr.bf16.mxu0 %v401
    %853 = vmatpush1.bf16.msra.mxu0 %v400
    %854 = vmatprep.subr.bf16.mxu0 %v403
    %855 = vmatpush1.bf16.msra.mxu0 %v402
    %856 = vmatprep.subr.bf16.mxu0 %v405
    %857 = vmatpush1.bf16.msra.mxu0 %v404
    %858 = vmatprep.subr.bf16.mxu0 %v407
    %859 = vmatpush1.bf16.msra.mxu0 %v406
    %860 = vmatprep.subr.bf16.mxu0 %v409
    %861 = vmatpush1.bf16.msra.mxu0 %v408
    %862 = vmatprep.subr.bf16.mxu0 %v411
    %863 = vmatpush1.bf16.msra.mxu0 %v410
    %864 = vmatprep.subr.bf16.mxu0 %v413
    %865 = vmatpush1.bf16.msra.mxu0 %v412
    %866 = vmatprep.subr.bf16.mxu0 %v415
    %867 = vmatpush1.bf16.msra.mxu0 %v414
    %868 = vmatprep.subr.bf16.mxu0 %v417
    %869 = vmatpush1.bf16.msra.mxu0 %v416
    %870 = vmatprep.subr.bf16.mxu0 %v419
    %871 = vmatpush1.bf16.msra.mxu0 %v418
    %872 = vmatprep.subr.bf16.mxu0 %v421
    %873 = vmatpush1.bf16.msra.mxu0 %v420
    %874 = vmatprep.subr.bf16.mxu0 %v423
    %875 = vmatpush1.bf16.msra.mxu0 %v422
    %876 = vmatprep.subr.bf16.mxu0 %v425
    %877 = vmatpush1.bf16.msra.mxu0 %v424
    %878 = vmatprep.subr.bf16.mxu0 %v427
    %879 = vmatpush1.bf16.msra.mxu0 %v426
    %880 = vmatprep.subr.bf16.mxu0 %v429
    %881 = vmatpush1.bf16.msra.mxu0 %v428
    %882 = vmatprep.mubr.bf16.mxu0 %v849
    %883 = vmatmul.mubr.bf16.gmra.mrb[0].mxu0 %v848
    %v884 = vpop.f32.mrb[0].mxu0
    %v885 = vadd.f32 0.0, %v884
    %v886 = vpop.f32.mrb[0].mxu0
    %v887 = vadd.f32 0.0, %v886
    %v888 = vpop.f32.mrb[0].mxu0
    %v889 = vpop.f32.mrb[0].mxu0
    %890 = vdwg.mxu0
    %v891 = vadd.f32 %v846, %v885
    %v892 = vadd.f32 %v847, %v887
    %v893 = vxor.u32 %v891, 2147483648
    %v894 = vmul.f32 %v893, 1.442695
    %v895 = vpow.pop %v894
    %v896 = vadd.f32 %v895, 1.0
    %v897 = vrcp.pop %v896
    %v898 = vmul.f32 1.0, %v897
    %v899 = vtanh.pop %v891
    %901 = vrot.lane.b32.xlu0 %v899, 64
    %v902 = vpop.permute.xlu0 %901
    %v904 = vmul.f32 %v898, %v902
    %906 = vrot.lane.b32.xlu0 %v904, 32
    %v907 = vpop.permute.xlu0 %906
    %v909 = vmul.f32 %v898, %v813
    %v910 = vadd.f32 %v907, %v909
    %v911 = vtanh.pop %v910
    %913 = vrot.lane.b32.xlu0 %v911, 64
    %v914 = vpop.permute.xlu0 %913
    %v916 = vmul.f32 %v898, %v914
    %v917 = vxor.u32 %v892, 2147483648
    %v918 = vmul.f32 %v917, 1.442695
    %v919 = vpow.pop %v918
    %v920 = vadd.f32 %v919, 1.0
    %v921 = vrcp.pop %v920
    %v922 = vmul.f32 1.0, %v921
    %v923 = vtanh.pop %v892
    %925 = vrot.lane.b32.xlu0 %v923, 64
    %v926 = vpop.permute.xlu0 %925
    %v928 = vmul.f32 %v922, %v926
    %930 = vrot.lane.b32.xlu0 %v928, 32
    %v931 = vpop.permute.xlu0 %930
    %v933 = vmul.f32 %v922, %v837
    %v934 = vadd.f32 %v931, %v933
    %v935 = vtanh.pop %v934
    %937 = vrot.lane.b32.xlu0 %v935, 64
    %v938 = vpop.permute.xlu0 %937
    %v940 = vmul.f32 %v922, %v938
    %941 = vst [vmem:[#allocation3 + $0x50] sm:$0xff] %v916
    %942 = vst [vmem:[#allocation3 + $0x28] sm:$0xff] %v940
    %v943 = vld [vmem:[#allocation2 + $0x60] sm:$0xff]
    %v944 = vld [vmem:[#allocation2 + $0x18] sm:$0xff]
    %v945 = vpack.c.bf16 %v916, %v916
    %v946 = vpack.c.bf16 %v940, %v940
    %947 = vmatprep.subr.bf16.mxu0 %v399
    %948 = vmatpush1.bf16.msra.mxu0 %v398
    %949 = vmatprep.subr.bf16.mxu0 %v401
    %950 = vmatpush1.bf16.msra.mxu0 %v400
    %951 = vmatprep.subr.bf16.mxu0 %v403
    %952 = vmatpush1.bf16.msra.mxu0 %v402
    %953 = vmatprep.subr.bf16.mxu0 %v405
    %954 = vmatpush1.bf16.msra.mxu0 %v404
    %955 = vmatprep.subr.bf16.mxu0 %v407
    %956 = vmatpush1.bf16.msra.mxu0 %v406
    %957 = vmatprep.subr.bf16.mxu0 %v409
    %958 = vmatpush1.bf16.msra.mxu0 %v408
    %959 = vmatprep.subr.bf16.mxu0 %v411
    %960 = vmatpush1.bf16.msra.mxu0 %v410
    %961 = vmatprep.subr.bf16.mxu0 %v413
    %962 = vmatpush1.bf16.msra.mxu0 %v412
    %963 = vmatprep.subr.bf16.mxu0 %v415
    %964 = vmatpush1.bf16.msra.mxu0 %v414
    %965 = vmatprep.subr.bf16.mxu0 %v417
    %966 = vmatpush1.bf16.msra.mxu0 %v416
    %967 = vmatprep.subr.bf16.mxu0 %v419
    %968 = vmatpush1.bf16.msra.mxu0 %v418
    %969 = vmatprep.subr.bf16.mxu0 %v421
    %970 = vmatpush1.bf16.msra.mxu0 %v420
    %971 = vmatprep.subr.bf16.mxu0 %v423
    %972 = vmatpush1.bf16.msra.mxu0 %v422
    %973 = vmatprep.subr.bf16.mxu0 %v425
    %974 = vmatpush1.bf16.msra.mxu0 %v424
    %975 = vmatprep.subr.bf16.mxu0 %v427
    %976 = vmatpush1.bf16.msra.mxu0 %v426
    %977 = vmatprep.subr.bf16.mxu0 %v429
    %978 = vmatpush1.bf16.msra.mxu0 %v428
    %979 = vmatprep.mubr.bf16.mxu0 %v946
    %980 = vmatmul.mubr.bf16.gmra.mrb[0].mxu0 %v945
    %v981 = vpop.f32.mrb[0].mxu0
    %v982 = vadd.f32 0.0, %v981
    %v983 = vpop.f32.mrb[0].mxu0
    %v984 = vadd.f32 0.0, %v983
    %v985 = vpop.f32.mrb[0].mxu0
    %v986 = vpop.f32.mrb[0].mxu0
    %987 = vdwg.mxu0
    %v988 = vadd.f32 %v943, %v982
    %v989 = vadd.f32 %v944, %v984
    %v990 = vxor.u32 %v988, 2147483648
    %v991 = vmul.f32 %v990, 1.442695
    %v992 = vpow.pop %v991
    %v993 = vadd.f32 %v992, 1.0
    %v994 = vrcp.pop %v993
    %v995 = vmul.f32 1.0, %v994
    %v996 = vtanh.pop %v988
    %998 = vrot.lane.b32.xlu0 %v996, 64
    %v999 = vpop.permute.xlu0 %998
    %v1001 = vmul.f32 %v995, %v999
    %1003 = vrot.lane.b32.xlu0 %v1001, 32
    %v1004 = vpop.permute.xlu0 %1003
    %v1006 = vmul.f32 %v995, %v910
    %v1007 = vadd.f32 %v1004, %v1006
    %v1008 = vtanh.pop %v1007
    %1010 = vrot.lane.b32.xlu0 %v1008, 64
    %v1011 = vpop.permute.xlu0 %1010
    %v1013 = vmul.f32 %v995, %v1011
    %v1014 = vxor.u32 %v989, 2147483648
    %v1015 = vmul.f32 %v1014, 1.442695
    %v1016 = vpow.pop %v1015
    %v1017 = vadd.f32 %v1016, 1.0
    %v1018 = vrcp.pop %v1017
    %v1019 = vmul.f32 1.0, %v1018
    %v1020 = vtanh.pop %v989
    %1022 = vrot.lane.b32.xlu0 %v1020, 64
    %v1023 = vpop.permute.xlu0 %1022
    %v1025 = vmul.f32 %v1019, %v1023
    %1027 = vrot.lane.b32.xlu0 %v1025, 32
    %v1028 = vpop.permute.xlu0 %1027
    %v1030 = vmul.f32 %v1019, %v934
    %v1031 = vadd.f32 %v1028, %v1030
    %v1032 = vtanh.pop %v1031
    %1034 = vrot.lane.b32.xlu0 %v1032, 64
    %v1035 = vpop.permute.xlu0 %1034
    %v1037 = vmul.f32 %v1019, %v1035
    %1038 = vst [vmem:[#allocation3 + $0x60] sm:$0xff] %v1013
    %1039 = vst [vmem:[#allocation3 + $0x18] sm:$0xff] %v1037
    %v1040 = vld [vmem:[#allocation2 + $0x70] sm:$0xff]
    %v1041 = vld [vmem:[#allocation2 + $0x8] sm:$0xff]
    %v1042 = vpack.c.bf16 %v1013, %v1013
    %v1043 = vpack.c.bf16 %v1037, %v1037
    %1044 = vmatprep.subr.bf16.mxu0 %v399
    %1045 = vmatpush1.bf16.msra.mxu0 %v398
    %1046 = vmatprep.subr.bf16.mxu0 %v401
    %1047 = vmatpush1.bf16.msra.mxu0 %v400
    %1048 = vmatprep.subr.bf16.mxu0 %v403
    %1049 = vmatpush1.bf16.msra.mxu0 %v402
    %1050 = vmatprep.subr.bf16.mxu0 %v405
    %1051 = vmatpush1.bf16.msra.mxu0 %v404
    %1052 = vmatprep.subr.bf16.mxu0 %v407
    %1053 = vmatpush1.bf16.msra.mxu0 %v406
    %1054 = vmatprep.subr.bf16.mxu0 %v409
    %1055 = vmatpush1.bf16.msra.mxu0 %v408
    %1056 = vmatprep.subr.bf16.mxu0 %v411
    %1057 = vmatpush1.bf16.msra.mxu0 %v410
    %1058 = vmatprep.subr.bf16.mxu0 %v413
    %1059 = vmatpush1.bf16.msra.mxu0 %v412
    %1060 = vmatprep.subr.bf16.mxu0 %v415
    %1061 = vmatpush1.bf16.msra.mxu0 %v414
    %1062 = vmatprep.subr.bf16.mxu0 %v417
    %1063 = vmatpush1.bf16.msra.mxu0 %v416
    %1064 = vmatprep.subr.bf16.mxu0 %v419
    %1065 = vmatpush1.bf16.msra.mxu0 %v418
    %1066 = vmatprep.subr.bf16.mxu0 %v421
    %1067 = vmatpush1.bf16.msra.mxu0 %v420
    %1068 = vmatprep.subr.bf16.mxu0 %v423
    %1069 = vmatpush1.bf16.msra.mxu0 %v422
    %1070 = vmatprep.subr.bf16.mxu0 %v425
    %1071 = vmatpush1.bf16.msra.mxu0 %v424
    %1072 = vmatprep.subr.bf16.mxu0 %v427
    %1073 = vmatpush1.bf16.msra.mxu0 %v426
    %1074 = vmatprep.subr.bf16.mxu0 %v429
    %1075 = vmatpush1.bf16.msra.mxu0 %v428
    %1076 = vmatprep.mubr.bf16.mxu0 %v1043
    %1077 = vmatmul.mubr.bf16.gmra.mrb[0].mxu0 %v1042
    %v1078 = vpop.f32.mrb[0].mxu0
    %v1079 = vadd.f32 0.0, %v1078
    %v1080 = vpop.f32.mrb[0].mxu0
    %v1081 = vadd.f32 0.0, %v1080
    %v1082 = vpop.f32.mrb[0].mxu0
    %v1083 = vpop.f32.mrb[0].mxu0
    %1084 = vdwg.mxu0
    %v1085 = vadd.f32 %v1040, %v1079
    %v1086 = vadd.f32 %v1041, %v1081
    %v1087 = vxor.u32 %v1085, 2147483648
    %v1088 = vmul.f32 %v1087, 1.442695
    %v1089 = vpow.pop %v1088
    %v1090 = vadd.f32 %v1089, 1.0
    %v1091 = vrcp.pop %v1090
    %v1092 = vmul.f32 1.0, %v1091
    %v1093 = vtanh.pop %v1085
    %1095 = vrot.lane.b32.xlu0 %v1093, 64
    %v1096 = vpop.permute.xlu0 %1095
    %v1098 = vmul.f32 %v1092, %v1096
    %1100 = vrot.lane.b32.xlu0 %v1098, 32
    %v1101 = vpop.permute.xlu0 %1100
    %v1103 = vmul.f32 %v1092, %v1007
    %v1104 = vadd.f32 %v1101, %v1103
    %v1105 = vtanh.pop %v1104
    %1107 = vrot.lane.b32.xlu0 %v1105, 64
    %v1108 = vpop.permute.xlu0 %1107
    %v1110 = vmul.f32 %v1092, %v1108
    %v1111 = vxor.u32 %v1086, 2147483648
    %v1112 = vmul.f32 %v1111, 1.442695
    %v1113 = vpow.pop %v1112
    %v1114 = vadd.f32 %v1113, 1.0
    %v1115 = vrcp.pop %v1114
    %v1116 = vmul.f32 1.0, %v1115
    %v1117 = vtanh.pop %v1086
    %1119 = vrot.lane.b32.xlu0 %v1117, 64
    %v1120 = vpop.permute.xlu0 %1119
    %v1122 = vmul.f32 %v1116, %v1120
    %1124 = vrot.lane.b32.xlu0 %v1122, 32
    %v1125 = vpop.permute.xlu0 %1124
    %v1127 = vmul.f32 %v1116, %v1031
    %v1128 = vadd.f32 %v1125, %v1127
    %v1129 = vtanh.pop %v1128
    %1131 = vrot.lane.b32.xlu0 %v1129, 64
    %v1132 = vpop.permute.xlu0 %1131
    %v1134 = vmul.f32 %v1116, %v1132
    %1135 = vst [vmem:[#allocation3 + $0x70] sm:$0xff] %v1110
    %1136 = vst [vmem:[#allocation3 + $0x8] sm:$0xff] %v1134
    %v1137 = vld [vmem:[#allocation3] sm:$0xff]
    %v1138 = vld [vmem:[#allocation3 + $0x8] sm:$0xff]
    %v1139 = vld [vmem:[#allocation3 + $0x10] sm:$0xff]
    %v1140 = vld [vmem:[#allocation3 + $0x18] sm:$0xff]
    %v1141 = vld [vmem:[#allocation3 + $0x20] sm:$0xff]
    %v1142 = vld [vmem:[#allocation3 + $0x28] sm:$0xff]
    %v1143 = vld [vmem:[#allocation3 + $0x30] sm:$0xff]
    %v1144 = vld [vmem:[#allocation3 + $0x38] sm:$0xff]
    %v1145 = vld [vmem:[#allocation3 + $0x40] sm:$0xff]
    %v1146 = vld [vmem:[#allocation3 + $0x48] sm:$0xff]
    %v1147 = vld [vmem:[#allocation3 + $0x50] sm:$0xff]
    %v1148 = vld [vmem:[#allocation3 + $0x58] sm:$0xff]
    %v1149 = vld [vmem:[#allocation3 + $0x60] sm:$0xff]
    %v1150 = vld [vmem:[#allocation3 + $0x68] sm:$0xff]
    %v1151 = vld [vmem:[#allocation3 + $0x70] sm:$0xff]
    %v1152 = vld [vmem:[#allocation3 + $0x78] sm:$0xff]
    %v1153 = vpack.c.bf16 %v1139, %v1137
    %v1154 = vpack.c.bf16 %v1140, %v1138
    %v1155 = vpack.c.bf16 %v1143, %v1141
    %v1156 = vpack.c.bf16 %v1144, %v1142
    %v1157 = vpack.c.bf16 %v1147, %v1145
    %v1158 = vpack.c.bf16 %v1148, %v1146
    %v1159 = vpack.c.bf16 %v1151, %v1149
    %v1160 = vpack.c.bf16 %v1152, %v1150
    %v1161 = vld [vmem:[#allocation4] sm:$0xff]
    %v1162 = vld [vmem:[#allocation4 + $0x8] sm:$0xff]
    %v1163 = vld [vmem:[#allocation4 + $0x10] sm:$0xff]
    %v1164 = vld [vmem:[#allocation4 + $0x18] sm:$0xff]
    %v1165 = vld [vmem:[#allocation4 + $0x20] sm:$0xff]
    %v1166 = vld [vmem:[#allocation4 + $0x28] sm:$0xff]
    %v1167 = vld [vmem:[#allocation4 + $0x30] sm:$0xff]
    %v1168 = vld [vmem:[#allocation4 + $0x38] sm:$0xff]
    %v1169 = vld [vmem:[#allocation4 + $0x40] sm:$0xff]
    %v1170 = vld [vmem:[#allocation4 + $0x48] sm:$0xff]
    %v1171 = vld [vmem:[#allocation4 + $0x50] sm:$0xff]
    %v1172 = vld [vmem:[#allocation4 + $0x58] sm:$0xff]
    %v1173 = vld [vmem:[#allocation4 + $0x60] sm:$0xff]
    %v1174 = vld [vmem:[#allocation4 + $0x68] sm:$0xff]
    %v1175 = vld [vmem:[#allocation4 + $0x70] sm:$0xff]
    %v1176 = vld [vmem:[#allocation4 + $0x78] sm:$0xff]
    %v1177 = vld [vmem:[#allocation4 + $0x80] sm:$0xff]
    %v1178 = vld [vmem:[#allocation4 + $0x88] sm:$0xff]
    %v1179 = vld [vmem:[#allocation4 + $0x90] sm:$0xff]
    %v1180 = vld [vmem:[#allocation4 + $0x98] sm:$0xff]
    %v1181 = vld [vmem:[#allocation4 + $0xa0] sm:$0xff]
    %v1182 = vld [vmem:[#allocation4 + $0xa8] sm:$0xff]
    %v1183 = vld [vmem:[#allocation4 + $0xb0] sm:$0xff]
    %v1184 = vld [vmem:[#allocation4 + $0xb8] sm:$0xff]
    %v1185 = vld [vmem:[#allocation4 + $0xc0] sm:$0xff]
    %v1186 = vld [vmem:[#allocation4 + $0xc8] sm:$0xff]
    %v1187 = vld [vmem:[#allocation4 + $0xd0] sm:$0xff]
    %v1188 = vld [vmem:[#allocation4 + $0xd8] sm:$0xff]
    %v1189 = vld [vmem:[#allocation4 + $0xe0] sm:$0xff]
    %v1190 = vld [vmem:[#allocation4 + $0xe8] sm:$0xff]
    %v1191 = vld [vmem:[#allocation4 + $0xf0] sm:$0xff]
    %v1192 = vld [vmem:[#allocation4 + $0xf8] sm:$0xff]
    %s1193 = scalar_lea.vmem %s4, 2
    %v1194 = vld [vmem:[%s1193] sm:$0x3]
    %v1196 = vlaneseq
    %v1197 = vshrl.u32 %v1196, 7
    %v1198 = vsub.s32 0, %v1197
    %v1199 = vrot.slane %v1194, %v1198
    %v1200 = vlaneseq
    %v1201 = vshrl.u32 %v1200, 7
    %v1202 = vsub.s32 1, %v1201
    %v1203 = vrot.slane %v1194, %v1202
    %v1238 = vunpack.c.l.b16 %v1161
    %v1239 = vunpack.c.h.b16 %v1161
    %v1240 = vunpack.c.l.b16 %v1162
    %v1241 = vunpack.c.h.b16 %v1162
    %v1242 = vunpack.c.l.b16 %v1163
    %v1243 = vunpack.c.h.b16 %v1163
    %v1244 = vunpack.c.l.b16 %v1164
    %v1245 = vunpack.c.h.b16 %v1164
    %v1246 = vunpack.c.l.b16 %v1165
    %v1247 = vunpack.c.h.b16 %v1165
    %v1248 = vunpack.c.l.b16 %v1166
    %v1249 = vunpack.c.h.b16 %v1166
    %v1250 = vunpack.c.l.b16 %v1167
    %v1251 = vunpack.c.h.b16 %v1167
    %v1252 = vunpack.c.l.b16 %v1168
    %v1253 = vunpack.c.h.b16 %v1168
    %v1254 = vunpack.c.l.b16 %v1169
    %v1255 = vunpack.c.h.b16 %v1169
    %v1256 = vunpack.c.l.b16 %v1170
    %v1257 = vunpack.c.h.b16 %v1170
    %v1258 = vunpack.c.l.b16 %v1171
    %v1259 = vunpack.c.h.b16 %v1171
    %v1260 = vunpack.c.l.b16 %v1172
    %v1261 = vunpack.c.h.b16 %v1172
    %v1262 = vunpack.c.l.b16 %v1173
    %v1263 = vunpack.c.h.b16 %v1173
    %v1264 = vunpack.c.l.b16 %v1174
    %v1265 = vunpack.c.h.b16 %v1174
    %v1266 = vunpack.c.l.b16 %v1175
    %v1267 = vunpack.c.h.b16 %v1175
    %v1268 = vunpack.c.l.b16 %v1176
    %v1269 = vunpack.c.h.b16 %v1176
    %v1270 = vunpack.c.l.b16 %v1177
    %v1271 = vunpack.c.h.b16 %v1177
    %v1272 = vunpack.c.l.b16 %v1178
    %v1273 = vunpack.c.h.b16 %v1178
    %v1274 = vunpack.c.l.b16 %v1179
    %v1275 = vunpack.c.h.b16 %v1179
    %v1276 = vunpack.c.l.b16 %v1180
    %v1277 = vunpack.c.h.b16 %v1180
    %v1278 = vunpack.c.l.b16 %v1181
    %v1279 = vunpack.c.h.b16 %v1181
    %v1280 = vunpack.c.l.b16 %v1182
    %v1281 = vunpack.c.h.b16 %v1182
    %v1282 = vunpack.c.l.b16 %v1183
    %v1283 = vunpack.c.h.b16 %v1183
    %v1284 = vunpack.c.l.b16 %v1184
    %v1285 = vunpack.c.h.b16 %v1184
    %v1286 = vunpack.c.l.b16 %v1185
    %v1287 = vunpack.c.h.b16 %v1185
    %v1288 = vunpack.c.l.b16 %v1186
    %v1289 = vunpack.c.h.b16 %v1186
    %v1290 = vunpack.c.l.b16 %v1187
    %v1291 = vunpack.c.h.b16 %v1187
    %v1292 = vunpack.c.l.b16 %v1188
    %v1293 = vunpack.c.h.b16 %v1188
    %v1294 = vunpack.c.l.b16 %v1189
    %v1295 = vunpack.c.h.b16 %v1189
    %v1296 = vunpack.c.l.b16 %v1190
    %v1297 = vunpack.c.h.b16 %v1190
    %v1298 = vunpack.c.l.b16 %v1191
    %v1299 = vunpack.c.h.b16 %v1191
    %v1300 = vunpack.c.l.b16 %v1192
    %v1301 = vunpack.c.h.b16 %v1192
    %v1302 = vpack.c.b16 %v1240, %v1238
    %v1303 = vpack.c.b16 %v1241, %v1239
    %v1304 = vpack.c.b16 %v1244, %v1242
    %v1305 = vpack.c.b16 %v1245, %v1243
    %v1306 = vpack.c.b16 %v1248, %v1246
    %v1307 = vpack.c.b16 %v1249, %v1247
    %v1308 = vpack.c.b16 %v1252, %v1250
    %v1309 = vpack.c.b16 %v1253, %v1251
    %v1310 = vpack.c.b16 %v1256, %v1254
    %v1311 = vpack.c.b16 %v1257, %v1255
    %v1312 = vpack.c.b16 %v1260, %v1258
    %v1313 = vpack.c.b16 %v1261, %v1259
    %v1314 = vpack.c.b16 %v1264, %v1262
    %v1315 = vpack.c.b16 %v1265, %v1263
    %v1316 = vpack.c.b16 %v1268, %v1266
    %v1317 = vpack.c.b16 %v1269, %v1267
    %v1318 = vpack.c.b16 %v1272, %v1270
    %v1319 = vpack.c.b16 %v1273, %v1271
    %v1320 = vpack.c.b16 %v1276, %v1274
    %v1321 = vpack.c.b16 %v1277, %v1275
    %v1322 = vpack.c.b16 %v1280, %v1278
    %v1323 = vpack.c.b16 %v1281, %v1279
    %v1324 = vpack.c.b16 %v1284, %v1282
    %v1325 = vpack.c.b16 %v1285, %v1283
    %v1326 = vpack.c.b16 %v1288, %v1286
    %v1327 = vpack.c.b16 %v1289, %v1287
    %v1328 = vpack.c.b16 %v1292, %v1290
    %v1329 = vpack.c.b16 %v1293, %v1291
    %v1330 = vpack.c.b16 %v1296, %v1294
    %v1331 = vpack.c.b16 %v1297, %v1295
    %v1332 = vpack.c.b16 %v1300, %v1298
    %v1333 = vpack.c.b16 %v1301, %v1299
    %1366 = vmatprep.subr.bf16.mxu0 %v1303
    %1367 = vmatpush1.bf16.msra.mxu0 %v1302
    %1368 = vmatprep.subr.bf16.mxu0 %v1305
    %1369 = vmatpush1.bf16.msra.mxu0 %v1304
    %1370 = vmatprep.subr.bf16.mxu0 %v1307
    %1371 = vmatpush1.bf16.msra.mxu0 %v1306
    %1372 = vmatprep.subr.bf16.mxu0 %v1309
    %1373 = vmatpush1.bf16.msra.mxu0 %v1308
    %1374 = vmatprep.subr.bf16.mxu0 %v1311
    %1375 = vmatpush1.bf16.msra.mxu0 %v1310
    %1376 = vmatprep.subr.bf16.mxu0 %v1313
    %1377 = vmatpush1.bf16.msra.mxu0 %v1312
    %1378 = vmatprep.subr.bf16.mxu0 %v1315
    %1379 = vmatpush1.bf16.msra.mxu0 %v1314
    %1380 = vmatprep.subr.bf16.mxu0 %v1317
    %1381 = vmatpush1.bf16.msra.mxu0 %v1316
    %1382 = vmatprep.subr.bf16.mxu0 %v1319
    %1383 = vmatpush1.bf16.msra.mxu0 %v1318
    %1384 = vmatprep.subr.bf16.mxu0 %v1321
    %1385 = vmatpush1.bf16.msra.mxu0 %v1320
    %1386 = vmatprep.subr.bf16.mxu0 %v1323
    %1387 = vmatpush1.bf16.msra.mxu0 %v1322
    %1388 = vmatprep.subr.bf16.mxu0 %v1325
    %1389 = vmatpush1.bf16.msra.mxu0 %v1324
    %1390 = vmatprep.subr.bf16.mxu0 %v1327
    %1391 = vmatpush1.bf16.msra.mxu0 %v1326
    %1392 = vmatprep.subr.bf16.mxu0 %v1329
    %1393 = vmatpush1.bf16.msra.mxu0 %v1328
    %1394 = vmatprep.subr.bf16.mxu0 %v1331
    %1395 = vmatpush1.bf16.msra.mxu0 %v1330
    %1396 = vmatprep.subr.bf16.mxu0 %v1333
    %1397 = vmatpush1.bf16.msra.mxu0 %v1332
    %1398 = vmatprep.mubr.bf16.mxu0 %v1154
    %1399 = vmatmul.mubr.bf16.gmra.mrb[0].mxu0 %v1153
    %v1400 = vpop.f32.mrb[0].mxu0
    %v1401 = vadd.f32 %v1199, %v1400
    %v1402 = vpop.f32.mrb[0].mxu0
    %v1403 = vadd.f32 %v1203, %v1402
    %v1404 = vpop.f32.mrb[0].mxu0
    %v1405 = vadd.f32 %v1199, %v1404
    %v1406 = vpop.f32.mrb[0].mxu0
    %v1407 = vadd.f32 %v1203, %v1406
    %1408 = vmatprep.mubr.bf16.mxu0 %v1156
    %1409 = vmatmul.mubr.bf16.gmra.mrb[0].mxu0 %v1155
    %v1410 = vpop.f32.mrb[0].mxu0
    %v1411 = vadd.f32 %v1199, %v1410
    %v1412 = vpop.f32.mrb[0].mxu0
    %v1413 = vadd.f32 %v1203, %v1412
    %v1414 = vpop.f32.mrb[0].mxu0
    %v1415 = vadd.f32 %v1199, %v1414
    %v1416 = vpop.f32.mrb[0].mxu0
    %v1417 = vadd.f32 %v1203, %v1416
    %1418 = vmatprep.mubr.bf16.mxu0 %v1158
    %1419 = vmatmul.mubr.bf16.gmra.mrb[0].mxu0 %v1157
    %v1420 = vpop.f32.mrb[0].mxu0
    %v1421 = vadd.f32 %v1199, %v1420
    %v1422 = vpop.f32.mrb[0].mxu0
    %v1423 = vadd.f32 %v1203, %v1422
    %v1424 = vpop.f32.mrb[0].mxu0
    %v1425 = vadd.f32 %v1199, %v1424
    %v1426 = vpop.f32.mrb[0].mxu0
    %v1427 = vadd.f32 %v1203, %v1426
    %1428 = vmatprep.mubr.bf16.mxu0 %v1160
    %1429 = vmatmul.mubr.bf16.gmra.mrb[0].mxu0 %v1159
    %v1430 = vpop.f32.mrb[0].mxu0
    %v1431 = vadd.f32 %v1199, %v1430
    %v1432 = vpop.f32.mrb[0].mxu0
    %v1433 = vadd.f32 %v1203, %v1432
    %v1434 = vpop.f32.mrb[0].mxu0
    %v1435 = vadd.f32 %v1199, %v1434
    %v1436 = vpop.f32.mrb[0].mxu0
    %v1437 = vadd.f32 %v1203, %v1436
    %1438 = vdwg.mxu0
    %1439 = vst [vmem:[#allocation2] sm:$0xff] %v1401
    %1440 = vst [vmem:[#allocation2 + $0x8] sm:$0xff] %v1403
    %1441 = vst [vmem:[#allocation2 + $0x10] sm:$0xff] %v1405
    %1442 = vst [vmem:[#allocation2 + $0x18] sm:$0xff] %v1407
    %1443 = vst [vmem:[#allocation2 + $0x20] sm:$0xff] %v1411
    %1444 = vst [vmem:[#allocation2 + $0x28] sm:$0xff] %v1413
    %1445 = vst [vmem:[#allocation2 + $0x30] sm:$0xff] %v1415
    %1446 = vst [vmem:[#allocation2 + $0x38] sm:$0xff] %v1417
    %1447 = vst [vmem:[#allocation2 + $0x40] sm:$0xff] %v1421
    %1448 = vst [vmem:[#allocation2 + $0x48] sm:$0xff] %v1423
    %1449 = vst [vmem:[#allocation2 + $0x50] sm:$0xff] %v1425
    %1450 = vst [vmem:[#allocation2 + $0x58] sm:$0xff] %v1427
    %1451 = vst [vmem:[#allocation2 + $0x60] sm:$0xff] %v1431
    %1452 = vst [vmem:[#allocation2 + $0x68] sm:$0xff] %v1433
    %1453 = vst [vmem:[#allocation2 + $0x70] sm:$0xff] %v1435
    %1454 = vst [vmem:[#allocation2 + $0x78] sm:$0xff] %v1437
    %s1455 = scalar_lea.vmem [#allocation6], 256
    %v1456 = vld [vmem:[%s1455] sm:$0xff]
    %v1457 = vld [vmem:[%s1455 + $0x8] sm:$0xff]
    %v1458 = vld [vmem:[%s1455 + $0x10] sm:$0xff]
    %v1459 = vld [vmem:[%s1455 + $0x18] sm:$0xff]
    %v1460 = vld [vmem:[%s1455 + $0x20] sm:$0xff]
    %v1461 = vld [vmem:[%s1455 + $0x28] sm:$0xff]
    %v1462 = vld [vmem:[%s1455 + $0x30] sm:$0xff]
    %v1463 = vld [vmem:[%s1455 + $0x38] sm:$0xff]
    %v1464 = vld [vmem:[%s1455 + $0x40] sm:$0xff]
    %v1465 = vld [vmem:[%s1455 + $0x48] sm:$0xff]
    %v1466 = vld [vmem:[%s1455 + $0x50] sm:$0xff]
    %v1467 = vld [vmem:[%s1455 + $0x58] sm:$0xff]
    %v1468 = vld [vmem:[%s1455 + $0x60] sm:$0xff]
    %v1469 = vld [vmem:[%s1455 + $0x68] sm:$0xff]
    %v1470 = vld [vmem:[%s1455 + $0x70] sm:$0xff]
    %v1471 = vld [vmem:[%s1455 + $0x78] sm:$0xff]
    %v1472 = vld [vmem:[%s1455 + $0x80] sm:$0xff]
    %v1473 = vld [vmem:[%s1455 + $0x88] sm:$0xff]
    %v1474 = vld [vmem:[%s1455 + $0x90] sm:$0xff]
    %v1475 = vld [vmem:[%s1455 + $0x98] sm:$0xff]
    %v1476 = vld [vmem:[%s1455 + $0xa0] sm:$0xff]
    %v1477 = vld [vmem:[%s1455 + $0xa8] sm:$0xff]
    %v1478 = vld [vmem:[%s1455 + $0xb0] sm:$0xff]
    %v1479 = vld [vmem:[%s1455 + $0xb8] sm:$0xff]
    %v1480 = vld [vmem:[%s1455 + $0xc0] sm:$0xff]
    %v1481 = vld [vmem:[%s1455 + $0xc8] sm:$0xff]
    %v1482 = vld [vmem:[%s1455 + $0xd0] sm:$0xff]
    %v1483 = vld [vmem:[%s1455 + $0xd8] sm:$0xff]
    %v1484 = vld [vmem:[%s1455 + $0xe0] sm:$0xff]
    %v1485 = vld [vmem:[%s1455 + $0xe8] sm:$0xff]
    %v1486 = vld [vmem:[%s1455 + $0xf0] sm:$0xff]
    %v1487 = vld [vmem:[%s1455 + $0xf8] sm:$0xff]
    %v1488 = vld [vmem:[#allocation2] sm:$0xff]
    %v1489 = vld [vmem:[#allocation2 + $0x78] sm:$0xff]
    %v1490 = vxor.u32 %v1488, 2147483648
    %v1491 = vmul.f32 %v1490, 1.442695
    %v1492 = vpow.pop %v1491
    %v1493 = vadd.f32 %v1492, 1.0
    %v1494 = vrcp.pop %v1493
    %v1495 = vmul.f32 1.0, %v1494
    %v1496 = vtanh.pop %v1488
    %1498 = vrot.lane.b32.xlu0 %v1496, 64
    %v1499 = vpop.permute.xlu0 %1498
    %v1501 = vmul.f32 %v1495, %v1499
    %1503 = vrot.lane.b32.xlu0 %v1501, 32
    %v1504 = vpop.permute.xlu0 %1503
    %v1506 = vtanh.pop %v1504
    %1508 = vrot.lane.b32.xlu0 %v1506, 64
    %v1509 = vpop.permute.xlu0 %1508
    %v1511 = vmul.f32 %v1495, %v1509
    %v1512 = vxor.u32 %v1489, 2147483648
    %v1513 = vmul.f32 %v1512, 1.442695
    %v1514 = vpow.pop %v1513
    %v1515 = vadd.f32 %v1514, 1.0
    %v1516 = vrcp.pop %v1515
    %v1517 = vmul.f32 1.0, %v1516
    %v1518 = vtanh.pop %v1489
    %1520 = vrot.lane.b32.xlu0 %v1518, 64
    %v1521 = vpop.permute.xlu0 %1520
    %v1523 = vmul.f32 %v1517, %v1521
    %1525 = vrot.lane.b32.xlu0 %v1523, 32
    %v1526 = vpop.permute.xlu0 %1525
    %v1528 = vtanh.pop %v1526
    %1530 = vrot.lane.b32.xlu0 %v1528, 64
    %v1531 = vpop.permute.xlu0 %1530
    %v1533 = vmul.f32 %v1517, %v1531
    %v1534 = vld [vmem:[#allocation2 + $0x10] sm:$0xff]
    %v1535 = vld [vmem:[#allocation2 + $0x68] sm:$0xff]
    %v1536 = vpack.c.bf16 %v1511, %v1511
    %v1537 = vpack.c.bf16 %v1533, %v1533
    %v1570 = vunpack.c.l.b16 %v1456
    %v1571 = vunpack.c.h.b16 %v1456
    %v1572 = vunpack.c.l.b16 %v1457
    %v1573 = vunpack.c.h.b16 %v1457
    %v1574 = vunpack.c.l.b16 %v1458
    %v1575 = vunpack.c.h.b16 %v1458
    %v1576 = vunpack.c.l.b16 %v1459
    %v1577 = vunpack.c.h.b16 %v1459
    %v1578 = vunpack.c.l.b16 %v1460
    %v1579 = vunpack.c.h.b16 %v1460
    %v1580 = vunpack.c.l.b16 %v1461
    %v1581 = vunpack.c.h.b16 %v1461
    %v1582 = vunpack.c.l.b16 %v1462
    %v1583 = vunpack.c.h.b16 %v1462
    %v1584 = vunpack.c.l.b16 %v1463
    %v1585 = vunpack.c.h.b16 %v1463
    %v1586 = vunpack.c.l.b16 %v1464
    %v1587 = vunpack.c.h.b16 %v1464
    %v1588 = vunpack.c.l.b16 %v1465
    %v1589 = vunpack.c.h.b16 %v1465
    %v1590 = vunpack.c.l.b16 %v1466
    %v1591 = vunpack.c.h.b16 %v1466
    %v1592 = vunpack.c.l.b16 %v1467
    %v1593 = vunpack.c.h.b16 %v1467
    %v1594 = vunpack.c.l.b16 %v1468
    %v1595 = vunpack.c.h.b16 %v1468
    %v1596 = vunpack.c.l.b16 %v1469
    %v1597 = vunpack.c.h.b16 %v1469
    %v1598 = vunpack.c.l.b16 %v1470
    %v1599 = vunpack.c.h.b16 %v1470
    %v1600 = vunpack.c.l.b16 %v1471
    %v1601 = vunpack.c.h.b16 %v1471
    %v1602 = vunpack.c.l.b16 %v1472
    %v1603 = vunpack.c.h.b16 %v1472
    %v1604 = vunpack.c.l.b16 %v1473
    %v1605 = vunpack.c.h.b16 %v1473
    %v1606 = vunpack.c.l.b16 %v1474
    %v1607 = vunpack.c.h.b16 %v1474
    %v1608 = vunpack.c.l.b16 %v1475
    %v1609 = vunpack.c.h.b16 %v1475
    %v1610 = vunpack.c.l.b16 %v1476
    %v1611 = vunpack.c.h.b16 %v1476
    %v1612 = vunpack.c.l.b16 %v1477
    %v1613 = vunpack.c.h.b16 %v1477
    %v1614 = vunpack.c.l.b16 %v1478
    %v1615 = vunpack.c.h.b16 %v1478
    %v1616 = vunpack.c.l.b16 %v1479
    %v1617 = vunpack.c.h.b16 %v1479
    %v1618 = vunpack.c.l.b16 %v1480
    %v1619 = vunpack.c.h.b16 %v1480
    %v1620 = vunpack.c.l.b16 %v1481
    %v1621 = vunpack.c.h.b16 %v1481
    %v1622 = vunpack.c.l.b16 %v1482
    %v1623 = vunpack.c.h.b16 %v1482
    %v1624 = vunpack.c.l.b16 %v1483
    %v1625 = vunpack.c.h.b16 %v1483
    %v1626 = vunpack.c.l.b16 %v1484
    %v1627 = vunpack.c.h.b16 %v1484
    %v1628 = vunpack.c.l.b16 %v1485
    %v1629 = vunpack.c.h.b16 %v1485
    %v1630 = vunpack.c.l.b16 %v1486
    %v1631 = vunpack.c.h.b16 %v1486
    %v1632 = vunpack.c.l.b16 %v1487
    %v1633 = vunpack.c.h.b16 %v1487
    %v1634 = vpack.c.b16 %v1572, %v1570
    %v1635 = vpack.c.b16 %v1573, %v1571
    %v1636 = vpack.c.b16 %v1576, %v1574
    %v1637 = vpack.c.b16 %v1577, %v1575
    %v1638 = vpack.c.b16 %v1580, %v1578
    %v1639 = vpack.c.b16 %v1581, %v1579
    %v1640 = vpack.c.b16 %v1584, %v1582
    %v1641 = vpack.c.b16 %v1585, %v1583
    %v1642 = vpack.c.b16 %v1588, %v1586
    %v1643 = vpack.c.b16 %v1589, %v1587
    %v1644 = vpack.c.b16 %v1592, %v1590
    %v1645 = vpack.c.b16 %v1593, %v1591
    %v1646 = vpack.c.b16 %v1596, %v1594
    %v1647 = vpack.c.b16 %v1597, %v1595
    %v1648 = vpack.c.b16 %v1600, %v1598
    %v1649 = vpack.c.b16 %v1601, %v1599
    %v1650 = vpack.c.b16 %v1604, %v1602
    %v1651 = vpack.c.b16 %v1605, %v1603
    %v1652 = vpack.c.b16 %v1608, %v1606
    %v1653 = vpack.c.b16 %v1609, %v1607
    %v1654 = vpack.c.b16 %v1612, %v1610
    %v1655 = vpack.c.b16 %v1613, %v1611
    %v1656 = vpack.c.b16 %v1616, %v1614
    %v1657 = vpack.c.b16 %v1617, %v1615
    %v1658 = vpack.c.b16 %v1620, %v1618
    %v1659 = vpack.c.b16 %v1621, %v1619
    %v1660 = vpack.c.b16 %v1624, %v1622
    %v1661 = vpack.c.b16 %v1625, %v1623
    %v1662 = vpack.c.b16 %v1628, %v1626
    %v1663 = vpack.c.b16 %v1629, %v1627
    %v1664 = vpack.c.b16 %v1632, %v1630
    %v1665 = vpack.c.b16 %v1633, %v1631
    %1698 = vmatprep.subr.bf16.mxu0 %v1635
    %1699 = vmatpush1.bf16.msra.mxu0 %v1634
    %1700 = vmatprep.subr.bf16.mxu0 %v1637
    %1701 = vmatpush1.bf16.msra.mxu0 %v1636
    %1702 = vmatprep.subr.bf16.mxu0 %v1639
    %1703 = vmatpush1.bf16.msra.mxu0 %v1638
    %1704 = vmatprep.subr.bf16.mxu0 %v1641
    %1705 = vmatpush1.bf16.msra.mxu0 %v1640
    %1706 = vmatprep.subr.bf16.mxu0 %v1643
    %1707 = vmatpush1.bf16.msra.mxu0 %v1642
    %1708 = vmatprep.subr.bf16.mxu0 %v1645
    %1709 = vmatpush1.bf16.msra.mxu0 %v1644
    %1710 = vmatprep.subr.bf16.mxu0 %v1647
    %1711 = vmatpush1.bf16.msra.mxu0 %v1646
    %1712 = vmatprep.subr.bf16.mxu0 %v1649
    %1713 = vmatpush1.bf16.msra.mxu0 %v1648
    %1714 = vmatprep.subr.bf16.mxu0 %v1651
    %1715 = vmatpush1.bf16.msra.mxu0 %v1650
    %1716 = vmatprep.subr.bf16.mxu0 %v1653
    %1717 = vmatpush1.bf16.msra.mxu0 %v1652
    %1718 = vmatprep.subr.bf16.mxu0 %v1655
    %1719 = vmatpush1.bf16.msra.mxu0 %v1654
    %1720 = vmatprep.subr.bf16.mxu0 %v1657
    %1721 = vmatpush1.bf16.msra.mxu0 %v1656
    %1722 = vmatprep.subr.bf16.mxu0 %v1659
    %1723 = vmatpush1.bf16.msra.mxu0 %v1658
    %1724 = vmatprep.subr.bf16.mxu0 %v1661
    %1725 = vmatpush1.bf16.msra.mxu0 %v1660
    %1726 = vmatprep.subr.bf16.mxu0 %v1663
    %1727 = vmatpush1.bf16.msra.mxu0 %v1662
    %1728 = vmatprep.subr.bf16.mxu0 %v1665
    %1729 = vmatpush1.bf16.msra.mxu0 %v1664
    %1730 = vmatprep.mubr.bf16.mxu0 %v1537
    %1731 = vmatmul.mubr.bf16.gmra.mrb[0].mxu0 %v1536
    %v1732 = vpop.f32.mrb[0].mxu0
    %v1733 = vadd.f32 0.0, %v1732
    %v1734 = vpop.f32.mrb[0].mxu0
    %v1735 = vadd.f32 0.0, %v1734
    %v1736 = vpop.f32.mrb[0].mxu0
    %v1737 = vpop.f32.mrb[0].mxu0
    %1738 = vdwg.mxu0
    %v1739 = vadd.f32 %v1534, %v1733
    %v1740 = vadd.f32 %v1535, %v1735
    %v1741 = vxor.u32 %v1739, 2147483648
    %v1742 = vmul.f32 %v1741, 1.442695
    %v1743 = vpow.pop %v1742
    %v1744 = vadd.f32 %v1743, 1.0
    %v1745 = vrcp.pop %v1744
    %v1746 = vmul.f32 1.0, %v1745
    %v1747 = vtanh.pop %v1739
    %1749 = vrot.lane.b32.xlu0 %v1747, 64
    %v1750 = vpop.permute.xlu0 %1749
    %v1752 = vmul.f32 %v1746, %v1750
    %1754 = vrot.lane.b32.xlu0 %v1752, 32
    %v1755 = vpop.permute.xlu0 %1754
    %v1757 = vmul.f32 %v1746, %v1504
    %v1758 = vadd.f32 %v1755, %v1757
    %v1759 = vtanh.pop %v1758
    %1761 = vrot.lane.b32.xlu0 %v1759, 64
    %v1762 = vpop.permute.xlu0 %1761
    %v1764 = vmul.f32 %v1746, %v1762
    %v1765 = vxor.u32 %v1740, 2147483648
    %v1766 = vmul.f32 %v1765, 1.442695
    %v1767 = vpow.pop %v1766
    %v1768 = vadd.f32 %v1767, 1.0
    %v1769 = vrcp.pop %v1768
    %v1770 = vmul.f32 1.0, %v1769
    %v1771 = vtanh.pop %v1740
    %1773 = vrot.lane.b32.xlu0 %v1771, 64
    %v1774 = vpop.permute.xlu0 %1773
    %v1776 = vmul.f32 %v1770, %v1774
    %1778 = vrot.lane.b32.xlu0 %v1776, 32
    %v1779 = vpop.permute.xlu0 %1778
    %v1781 = vmul.f32 %v1770, %v1526
    %v1782 = vadd.f32 %v1779, %v1781
    %v1783 = vtanh.pop %v1782
    %1785 = vrot.lane.b32.xlu0 %v1783, 64
    %v1786 = vpop.permute.xlu0 %1785
    %v1788 = vmul.f32 %v1770, %v1786
    %v1789 = vld [vmem:[#allocation2 + $0x20] sm:$0xff]
    %v1790 = vld [vmem:[#allocation2 + $0x58] sm:$0xff]
    %v1791 = vpack.c.bf16 %v1764, %v1764
    %v1792 = vpack.c.bf16 %v1788, %v1788
    %1793 = vmatprep.subr.bf16.mxu0 %v1635
    %1794 = vmatpush1.bf16.msra.mxu0 %v1634
    %1795 = vmatprep.subr.bf16.mxu0 %v1637
    %1796 = vmatpush1.bf16.msra.mxu0 %v1636
    %1797 = vmatprep.subr.bf16.mxu0 %v1639
    %1798 = vmatpush1.bf16.msra.mxu0 %v1638
    %1799 = vmatprep.subr.bf16.mxu0 %v1641
    %1800 = vmatpush1.bf16.msra.mxu0 %v1640
    %1801 = vmatprep.subr.bf16.mxu0 %v1643
    %1802 = vmatpush1.bf16.msra.mxu0 %v1642
    %1803 = vmatprep.subr.bf16.mxu0 %v1645
    %1804 = vmatpush1.bf16.msra.mxu0 %v1644
    %1805 = vmatprep.subr.bf16.mxu0 %v1647
    %1806 = vmatpush1.bf16.msra.mxu0 %v1646
    %1807 = vmatprep.subr.bf16.mxu0 %v1649
    %1808 = vmatpush1.bf16.msra.mxu0 %v1648
    %1809 = vmatprep.subr.bf16.mxu0 %v1651
    %1810 = vmatpush1.bf16.msra.mxu0 %v1650
    %1811 = vmatprep.subr.bf16.mxu0 %v1653
    %1812 = vmatpush1.bf16.msra.mxu0 %v1652
    %1813 = vmatprep.subr.bf16.mxu0 %v1655
    %1814 = vmatpush1.bf16.msra.mxu0 %v1654
    %1815 = vmatprep.subr.bf16.mxu0 %v1657
    %1816 = vmatpush1.bf16.msra.mxu0 %v1656
    %1817 = vmatprep.subr.bf16.mxu0 %v1659
    %1818 = vmatpush1.bf16.msra.mxu0 %v1658
    %1819 = vmatprep.subr.bf16.mxu0 %v1661
    %1820 = vmatpush1.bf16.msra.mxu0 %v1660
    %1821 = vmatprep.subr.bf16.mxu0 %v1663
    %1822 = vmatpush1.bf16.msra.mxu0 %v1662
    %1823 = vmatprep.subr.bf16.mxu0 %v1665
    %1824 = vmatpush1.bf16.msra.mxu0 %v1664
    %1825 = vmatprep.mubr.bf16.mxu0 %v1792
    %1826 = vmatmul.mubr.bf16.gmra.mrb[0].mxu0 %v1791
    %v1827 = vpop.f32.mrb[0].mxu0
    %v1828 = vadd.f32 0.0, %v1827
    %v1829 = vpop.f32.mrb[0].mxu0
    %v1830 = vadd.f32 0.0, %v1829
    %v1831 = vpop.f32.mrb[0].mxu0
    %v1832 = vpop.f32.mrb[0].mxu0
    %1833 = vdwg.mxu0
    %v1834 = vadd.f32 %v1789, %v1828
    %v1835 = vadd.f32 %v1790, %v1830
    %v1836 = vxor.u32 %v1834, 2147483648
    %v1837 = vmul.f32 %v1836, 1.442695
    %v1838 = vpow.pop %v1837
    %v1839 = vadd.f32 %v1838, 1.0
    %v1840 = vrcp.pop %v1839
    %v1841 = vmul.f32 1.0, %v1840
    %v1842 = vtanh.pop %v1834
    %1844 = vrot.lane.b32.xlu0 %v1842, 64
    %v1845 = vpop.permute.xlu0 %1844
    %v1847 = vmul.f32 %v1841, %v1845
    %1849 = vrot.lane.b32.xlu0 %v1847, 32
    %v1850 = vpop.permute.xlu0 %1849
    %v1852 = vmul.f32 %v1841, %v1758
    %v1853 = vadd.f32 %v1850, %v1852
    %v1854 = vtanh.pop %v1853
    %1856 = vrot.lane.b32.xlu0 %v1854, 64
    %v1857 = vpop.permute.xlu0 %1856
    %v1859 = vmul.f32 %v1841, %v1857
    %v1860 = vxor.u32 %v1835, 2147483648
    %v1861 = vmul.f32 %v1860, 1.442695
    %v1862 = vpow.pop %v1861
    %v1863 = vadd.f32 %v1862, 1.0
    %v1864 = vrcp.pop %v1863
    %v1865 = vmul.f32 1.0, %v1864
    %v1866 = vtanh.pop %v1835
    %1868 = vrot.lane.b32.xlu0 %v1866, 64
    %v1869 = vpop.permute.xlu0 %1868
    %v1871 = vmul.f32 %v1865, %v1869
    %1873 = vrot.lane.b32.xlu0 %v1871, 32
    %v1874 = vpop.permute.xlu0 %1873
    %v1876 = vmul.f32 %v1865, %v1782
    %v1877 = vadd.f32 %v1874, %v1876
    %v1878 = vtanh.pop %v1877
    %1880 = vrot.lane.b32.xlu0 %v1878, 64
    %v1881 = vpop.permute.xlu0 %1880
    %v1883 = vmul.f32 %v1865, %v1881
    %v1884 = vld [vmem:[#allocation2 + $0x30] sm:$0xff]
    %v1885 = vld [vmem:[#allocation2 + $0x48] sm:$0xff]
    %v1886 = vpack.c.bf16 %v1859, %v1859
    %v1887 = vpack.c.bf16 %v1883, %v1883
    %1888 = vmatprep.subr.bf16.mxu0 %v1635
    %1889 = vmatpush1.bf16.msra.mxu0 %v1634
    %1890 = vmatprep.subr.bf16.mxu0 %v1637
    %1891 = vmatpush1.bf16.msra.mxu0 %v1636
    %1892 = vmatprep.subr.bf16.mxu0 %v1639
    %1893 = vmatpush1.bf16.msra.mxu0 %v1638
    %1894 = vmatprep.subr.bf16.mxu0 %v1641
    %1895 = vmatpush1.bf16.msra.mxu0 %v1640
    %1896 = vmatprep.subr.bf16.mxu0 %v1643
    %1897 = vmatpush1.bf16.msra.mxu0 %v1642
    %1898 = vmatprep.subr.bf16.mxu0 %v1645
    %1899 = vmatpush1.bf16.msra.mxu0 %v1644
    %1900 = vmatprep.subr.bf16.mxu0 %v1647
    %1901 = vmatpush1.bf16.msra.mxu0 %v1646
    %1902 = vmatprep.subr.bf16.mxu0 %v1649
    %1903 = vmatpush1.bf16.msra.mxu0 %v1648
    %1904 = vmatprep.subr.bf16.mxu0 %v1651
    %1905 = vmatpush1.bf16.msra.mxu0 %v1650
    %1906 = vmatprep.subr.bf16.mxu0 %v1653
    %1907 = vmatpush1.bf16.msra.mxu0 %v1652
    %1908 = vmatprep.subr.bf16.mxu0 %v1655
    %1909 = vmatpush1.bf16.msra.mxu0 %v1654
    %1910 = vmatprep.subr.bf16.mxu0 %v1657
    %1911 = vmatpush1.bf16.msra.mxu0 %v1656
    %1912 = vmatprep.subr.bf16.mxu0 %v1659
    %1913 = vmatpush1.bf16.msra.mxu0 %v1658
    %1914 = vmatprep.subr.bf16.mxu0 %v1661
    %1915 = vmatpush1.bf16.msra.mxu0 %v1660
    %1916 = vmatprep.subr.bf16.mxu0 %v1663
    %1917 = vmatpush1.bf16.msra.mxu0 %v1662
    %1918 = vmatprep.subr.bf16.mxu0 %v1665
    %1919 = vmatpush1.bf16.msra.mxu0 %v1664
    %1920 = vmatprep.mubr.bf16.mxu0 %v1887
    %1921 = vmatmul.mubr.bf16.gmra.mrb[0].mxu0 %v1886
    %v1922 = vpop.f32.mrb[0].mxu0
    %v1923 = vadd.f32 0.0, %v1922
    %v1924 = vpop.f32.mrb[0].mxu0
    %v1925 = vadd.f32 0.0, %v1924
    %v1926 = vpop.f32.mrb[0].mxu0
    %v1927 = vpop.f32.mrb[0].mxu0
    %1928 = vdwg.mxu0
    %v1929 = vadd.f32 %v1884, %v1923
    %v1930 = vadd.f32 %v1885, %v1925
    %v1931 = vxor.u32 %v1929, 2147483648
    %v1932 = vmul.f32 %v1931, 1.442695
    %v1933 = vpow.pop %v1932
    %v1934 = vadd.f32 %v1933, 1.0
    %v1935 = vrcp.pop %v1934
    %v1936 = vmul.f32 1.0, %v1935
    %v1937 = vtanh.pop %v1929
    %1939 = vrot.lane.b32.xlu0 %v1937, 64
    %v1940 = vpop.permute.xlu0 %1939
    %v1942 = vmul.f32 %v1936, %v1940
    %1944 = vrot.lane.b32.xlu0 %v1942, 32
    %v1945 = vpop.permute.xlu0 %1944
    %v1947 = vmul.f32 %v1936, %v1853
    %v1948 = vadd.f32 %v1945, %v1947
    %v1949 = vtanh.pop %v1948
    %1951 = vrot.lane.b32.xlu0 %v1949, 64
    %v1952 = vpop.permute.xlu0 %1951
    %v1954 = vmul.f32 %v1936, %v1952
    %v1955 = vxor.u32 %v1930, 2147483648
    %v1956 = vmul.f32 %v1955, 1.442695
    %v1957 = vpow.pop %v1956
    %v1958 = vadd.f32 %v1957, 1.0
    %v1959 = vrcp.pop %v1958
    %v1960 = vmul.f32 1.0, %v1959
    %v1961 = vtanh.pop %v1930
    %1963 = vrot.lane.b32.xlu0 %v1961, 64
    %v1964 = vpop.permute.xlu0 %1963
    %v1966 = vmul.f32 %v1960, %v1964
    %1968 = vrot.lane.b32.xlu0 %v1966, 32
    %v1969 = vpop.permute.xlu0 %1968
    %v1971 = vmul.f32 %v1960, %v1877
    %v1972 = vadd.f32 %v1969, %v1971
    %v1973 = vtanh.pop %v1972
    %1975 = vrot.lane.b32.xlu0 %v1973, 64
    %v1976 = vpop.permute.xlu0 %1975
    %v1978 = vmul.f32 %v1960, %v1976
    %v1979 = vld [vmem:[#allocation2 + $0x40] sm:$0xff]
    %v1980 = vld [vmem:[#allocation2 + $0x38] sm:$0xff]
    %v1981 = vpack.c.bf16 %v1954, %v1954
    %v1982 = vpack.c.bf16 %v1978, %v1978
    %1983 = vmatprep.subr.bf16.mxu0 %v1635
    %1984 = vmatpush1.bf16.msra.mxu0 %v1634
    %1985 = vmatprep.subr.bf16.mxu0 %v1637
    %1986 = vmatpush1.bf16.msra.mxu0 %v1636
    %1987 = vmatprep.subr.bf16.mxu0 %v1639
    %1988 = vmatpush1.bf16.msra.mxu0 %v1638
    %1989 = vmatprep.subr.bf16.mxu0 %v1641
    %1990 = vmatpush1.bf16.msra.mxu0 %v1640
    %1991 = vmatprep.subr.bf16.mxu0 %v1643
    %1992 = vmatpush1.bf16.msra.mxu0 %v1642
    %1993 = vmatprep.subr.bf16.mxu0 %v1645
    %1994 = vmatpush1.bf16.msra.mxu0 %v1644
    %1995 = vmatprep.subr.bf16.mxu0 %v1647
    %1996 = vmatpush1.bf16.msra.mxu0 %v1646
    %1997 = vmatprep.subr.bf16.mxu0 %v1649
    %1998 = vmatpush1.bf16.msra.mxu0 %v1648
    %1999 = vmatprep.subr.bf16.mxu0 %v1651
    %2000 = vmatpush1.bf16.msra.mxu0 %v1650
    %2001 = vmatprep.subr.bf16.mxu0 %v1653
    %2002 = vmatpush1.bf16.msra.mxu0 %v1652
    %2003 = vmatprep.subr.bf16.mxu0 %v1655
    %2004 = vmatpush1.bf16.msra.mxu0 %v1654
    %2005 = vmatprep.subr.bf16.mxu0 %v1657
    %2006 = vmatpush1.bf16.msra.mxu0 %v1656
    %2007 = vmatprep.subr.bf16.mxu0 %v1659
    %2008 = vmatpush1.bf16.msra.mxu0 %v1658
    %2009 = vmatprep.subr.bf16.mxu0 %v1661
    %2010 = vmatpush1.bf16.msra.mxu0 %v1660
    %2011 = vmatprep.subr.bf16.mxu0 %v1663
    %2012 = vmatpush1.bf16.msra.mxu0 %v1662
    %2013 = vmatprep.subr.bf16.mxu0 %v1665
    %2014 = vmatpush1.bf16.msra.mxu0 %v1664
    %2015 = vmatprep.mubr.bf16.mxu0 %v1982
    %2016 = vmatmul.mubr.bf16.gmra.mrb[0].mxu0 %v1981
    %v2017 = vpop.f32.mrb[0].mxu0
    %v2018 = vadd.f32 0.0, %v2017
    %v2019 = vpop.f32.mrb[0].mxu0
    %v2020 = vadd.f32 0.0, %v2019
    %v2021 = vpop.f32.mrb[0].mxu0
    %v2022 = vpop.f32.mrb[0].mxu0
    %2023 = vdwg.mxu0
    %v2024 = vadd.f32 %v1979, %v2018
    %v2025 = vadd.f32 %v1980, %v2020
    %v2026 = vxor.u32 %v2024, 2147483648
    %v2027 = vmul.f32 %v2026, 1.442695
    %v2028 = vpow.pop %v2027
    %v2029 = vadd.f32 %v2028, 1.0
    %v2030 = vrcp.pop %v2029
    %v2031 = vmul.f32 1.0, %v2030
    %v2032 = vtanh.pop %v2024
    %2034 = vrot.lane.b32.xlu0 %v2032, 64
    %v2035 = vpop.permute.xlu0 %2034
    %v2037 = vmul.f32 %v2031, %v2035
    %2039 = vrot.lane.b32.xlu0 %v2037, 32
    %v2040 = vpop.permute.xlu0 %2039
    %v2042 = vmul.f32 %v2031, %v1948
    %v2043 = vadd.f32 %v2040, %v2042
    %v2044 = vtanh.pop %v2043
    %2046 = vrot.lane.b32.xlu0 %v2044, 64
    %v2047 = vpop.permute.xlu0 %2046
    %v2049 = vmul.f32 %v2031, %v2047
    %v2050 = vxor.u32 %v2025, 2147483648
    %v2051 = vmul.f32 %v2050, 1.442695
    %v2052 = vpow.pop %v2051
    %v2053 = vadd.f32 %v2052, 1.0
    %v2054 = vrcp.pop %v2053
    %v2055 = vmul.f32 1.0, %v2054
    %v2056 = vtanh.pop %v2025
    %2058 = vrot.lane.b32.xlu0 %v2056, 64
    %v2059 = vpop.permute.xlu0 %2058
    %v2061 = vmul.f32 %v2055, %v2059
    %2063 = vrot.lane.b32.xlu0 %v2061, 32
    %v2064 = vpop.permute.xlu0 %2063
    %v2066 = vmul.f32 %v2055, %v1972
    %v2067 = vadd.f32 %v2064, %v2066
    %v2068 = vtanh.pop %v2067
    %2070 = vrot.lane.b32.xlu0 %v2068, 64
    %v2071 = vpop.permute.xlu0 %2070
    %v2073 = vmul.f32 %v2055, %v2071
    %v2074 = vld [vmem:[#allocation2 + $0x50] sm:$0xff]
    %v2075 = vld [vmem:[#allocation2 + $0x28] sm:$0xff]
    %v2076 = vpack.c.bf16 %v2049, %v2049
    %v2077 = vpack.c.bf16 %v2073, %v2073
    %2078 = vmatprep.subr.bf16.mxu0 %v1635
    %2079 = vmatpush1.bf16.msra.mxu0 %v1634
    %2080 = vmatprep.subr.bf16.mxu0 %v1637
    %2081 = vmatpush1.bf16.msra.mxu0 %v1636
    %2082 = vmatprep.subr.bf16.mxu0 %v1639
    %2083 = vmatpush1.bf16.msra.mxu0 %v1638
    %2084 = vmatprep.subr.bf16.mxu0 %v1641
    %2085 = vmatpush1.bf16.msra.mxu0 %v1640
    %2086 = vmatprep.subr.bf16.mxu0 %v1643
    %2087 = vmatpush1.bf16.msra.mxu0 %v1642
    %2088 = vmatprep.subr.bf16.mxu0 %v1645
    %2089 = vmatpush1.bf16.msra.mxu0 %v1644
    %2090 = vmatprep.subr.bf16.mxu0 %v1647
    %2091 = vmatpush1.bf16.msra.mxu0 %v1646
    %2092 = vmatprep.subr.bf16.mxu0 %v1649
    %2093 = vmatpush1.bf16.msra.mxu0 %v1648
    %2094 = vmatprep.subr.bf16.mxu0 %v1651
    %2095 = vmatpush1.bf16.msra.mxu0 %v1650
    %2096 = vmatprep.subr.bf16.mxu0 %v1653
    %2097 = vmatpush1.bf16.msra.mxu0 %v1652
    %2098 = vmatprep.subr.bf16.mxu0 %v1655
    %2099 = vmatpush1.bf16.msra.mxu0 %v1654
    %2100 = vmatprep.subr.bf16.mxu0 %v1657
    %2101 = vmatpush1.bf16.msra.mxu0 %v1656
    %2102 = vmatprep.subr.bf16.mxu0 %v1659
    %2103 = vmatpush1.bf16.msra.mxu0 %v1658
    %2104 = vmatprep.subr.bf16.mxu0 %v1661
    %2105 = vmatpush1.bf16.msra.mxu0 %v1660
    %2106 = vmatprep.subr.bf16.mxu0 %v1663
    %2107 = vmatpush1.bf16.msra.mxu0 %v1662
    %2108 = vmatprep.subr.bf16.mxu0 %v1665
    %2109 = vmatpush1.bf16.msra.mxu0 %v1664
    %2110 = vmatprep.mubr.bf16.mxu0 %v2077
    %2111 = vmatmul.mubr.bf16.gmra.mrb[0].mxu0 %v2076
    %v2112 = vpop.f32.mrb[0].mxu0
    %v2113 = vadd.f32 0.0, %v2112
    %v2114 = vpop.f32.mrb[0].mxu0
    %v2115 = vadd.f32 0.0, %v2114
    %v2116 = vpop.f32.mrb[0].mxu0
    %v2117 = vpop.f32.mrb[0].mxu0
    %2118 = vdwg.mxu0
    %v2119 = vadd.f32 %v2074, %v2113
    %v2120 = vadd.f32 %v2075, %v2115
    %v2121 = vxor.u32 %v2119, 2147483648
    %v2122 = vmul.f32 %v2121, 1.442695
    %v2123 = vpow.pop %v2122
    %v2124 = vadd.f32 %v2123, 1.0
    %v2125 = vrcp.pop %v2124
    %v2126 = vmul.f32 1.0, %v2125
    %v2127 = vtanh.pop %v2119
    %2129 = vrot.lane.b32.xlu0 %v2127, 64
    %v2130 = vpop.permute.xlu0 %2129
    %v2132 = vmul.f32 %v2126, %v2130
    %2134 = vrot.lane.b32.xlu0 %v2132, 32
    %v2135 = vpop.permute.xlu0 %2134
    %v2137 = vmul.f32 %v2126, %v2043
    %v2138 = vadd.f32 %v2135, %v2137
    %v2139 = vtanh.pop %v2138
    %2141 = vrot.lane.b32.xlu0 %v2139, 64
    %v2142 = vpop.permute.xlu0 %2141
    %v2144 = vmul.f32 %v2126, %v2142
    %v2145 = vxor.u32 %v2120, 2147483648
    %v2146 = vmul.f32 %v2145, 1.442695
    %v2147 = vpow.pop %v2146
    %v2148 = vadd.f32 %v2147, 1.0
    %v2149 = vrcp.pop %v2148
    %v2150 = vmul.f32 1.0, %v2149
    %v2151 = vtanh.pop %v2120
    %2153 = vrot.lane.b32.xlu0 %v2151, 64
    %v2154 = vpop.permute.xlu0 %2153
    %v2156 = vmul.f32 %v2150, %v2154
    %2158 = vrot.lane.b32.xlu0 %v2156, 32
    %v2159 = vpop.permute.xlu0 %2158
    %v2161 = vmul.f32 %v2150, %v2067
    %v2162 = vadd.f32 %v2159, %v2161
    %v2163 = vtanh.pop %v2162
    %2165 = vrot.lane.b32.xlu0 %v2163, 64
    %v2166 = vpop.permute.xlu0 %2165
    %v2168 = vmul.f32 %v2150, %v2166
    %v2169 = vld [vmem:[#allocation2 + $0x60] sm:$0xff]
    %v2170 = vld [vmem:[#allocation2 + $0x18] sm:$0xff]
    %v2171 = vpack.c.bf16 %v2144, %v2144
    %v2172 = vpack.c.bf16 %v2168, %v2168
    %2173 = vmatprep.subr.bf16.mxu0 %v1635
    %2174 = vmatpush1.bf16.msra.mxu0 %v1634
    %2175 = vmatprep.subr.bf16.mxu0 %v1637
    %2176 = vmatpush1.bf16.msra.mxu0 %v1636
    %2177 = vmatprep.subr.bf16.mxu0 %v1639
    %2178 = vmatpush1.bf16.msra.mxu0 %v1638
    %2179 = vmatprep.subr.bf16.mxu0 %v1641
    %2180 = vmatpush1.bf16.msra.mxu0 %v1640
    %2181 = vmatprep.subr.bf16.mxu0 %v1643
    %2182 = vmatpush1.bf16.msra.mxu0 %v1642
    %2183 = vmatprep.subr.bf16.mxu0 %v1645
    %2184 = vmatpush1.bf16.msra.mxu0 %v1644
    %2185 = vmatprep.subr.bf16.mxu0 %v1647
    %2186 = vmatpush1.bf16.msra.mxu0 %v1646
    %2187 = vmatprep.subr.bf16.mxu0 %v1649
    %2188 = vmatpush1.bf16.msra.mxu0 %v1648
    %2189 = vmatprep.subr.bf16.mxu0 %v1651
    %2190 = vmatpush1.bf16.msra.mxu0 %v1650
    %2191 = vmatprep.subr.bf16.mxu0 %v1653
    %2192 = vmatpush1.bf16.msra.mxu0 %v1652
    %2193 = vmatprep.subr.bf16.mxu0 %v1655
    %2194 = vmatpush1.bf16.msra.mxu0 %v1654
    %2195 = vmatprep.subr.bf16.mxu0 %v1657
    %2196 = vmatpush1.bf16.msra.mxu0 %v1656
    %2197 = vmatprep.subr.bf16.mxu0 %v1659
    %2198 = vmatpush1.bf16.msra.mxu0 %v1658
    %2199 = vmatprep.subr.bf16.mxu0 %v1661
    %2200 = vmatpush1.bf16.msra.mxu0 %v1660
    %2201 = vmatprep.subr.bf16.mxu0 %v1663
    %2202 = vmatpush1.bf16.msra.mxu0 %v1662
    %2203 = vmatprep.subr.bf16.mxu0 %v1665
    %2204 = vmatpush1.bf16.msra.mxu0 %v1664
    %2205 = vmatprep.mubr.bf16.mxu0 %v2172
    %2206 = vmatmul.mubr.bf16.gmra.mrb[0].mxu0 %v2171
    %v2207 = vpop.f32.mrb[0].mxu0
    %v2208 = vadd.f32 0.0, %v2207
    %v2209 = vpop.f32.mrb[0].mxu0
    %v2210 = vadd.f32 0.0, %v2209
    %v2211 = vpop.f32.mrb[0].mxu0
    %v2212 = vpop.f32.mrb[0].mxu0
    %2213 = vdwg.mxu0
    %v2214 = vadd.f32 %v2169, %v2208
    %v2215 = vadd.f32 %v2170, %v2210
    %v2216 = vxor.u32 %v2214, 2147483648
    %v2217 = vmul.f32 %v2216, 1.442695
    %v2218 = vpow.pop %v2217
    %v2219 = vadd.f32 %v2218, 1.0
    %v2220 = vrcp.pop %v2219
    %v2221 = vmul.f32 1.0, %v2220
    %v2222 = vtanh.pop %v2214
    %2224 = vrot.lane.b32.xlu0 %v2222, 64
    %v2225 = vpop.permute.xlu0 %2224
    %v2227 = vmul.f32 %v2221, %v2225
    %2229 = vrot.lane.b32.xlu0 %v2227, 32
    %v2230 = vpop.permute.xlu0 %2229
    %v2232 = vmul.f32 %v2221, %v2138
    %v2233 = vadd.f32 %v2230, %v2232
    %v2234 = vtanh.pop %v2233
    %2236 = vrot.lane.b32.xlu0 %v2234, 64
    %v2237 = vpop.permute.xlu0 %2236
    %v2239 = vmul.f32 %v2221, %v2237
    %v2240 = vxor.u32 %v2215, 2147483648
    %v2241 = vmul.f32 %v2240, 1.442695
    %v2242 = vpow.pop %v2241
    %v2243 = vadd.f32 %v2242, 1.0
    %v2244 = vrcp.pop %v2243
    %v2245 = vmul.f32 1.0, %v2244
    %v2246 = vtanh.pop %v2215
    %2248 = vrot.lane.b32.xlu0 %v2246, 64
    %v2249 = vpop.permute.xlu0 %2248
    %v2251 = vmul.f32 %v2245, %v2249
    %2253 = vrot.lane.b32.xlu0 %v2251, 32
    %v2254 = vpop.permute.xlu0 %2253
    %v2256 = vmul.f32 %v2245, %v2162
    %v2257 = vadd.f32 %v2254, %v2256
    %v2258 = vtanh.pop %v2257
    %2260 = vrot.lane.b32.xlu0 %v2258, 64
    %v2261 = vpop.permute.xlu0 %2260
    %v2263 = vmul.f32 %v2245, %v2261
    %v2264 = vld [vmem:[#allocation2 + $0x70] sm:$0xff]
    %v2265 = vld [vmem:[#allocation2 + $0x8] sm:$0xff]
    %v2266 = vpack.c.bf16 %v2239, %v2239
    %v2267 = vpack.c.bf16 %v2263, %v2263
    %2268 = vmatprep.subr.bf16.mxu0 %v1635
    %2269 = vmatpush1.bf16.msra.mxu0 %v1634
    %2270 = vmatprep.subr.bf16.mxu0 %v1637
    %2271 = vmatpush1.bf16.msra.mxu0 %v1636
    %2272 = vmatprep.subr.bf16.mxu0 %v1639
    %2273 = vmatpush1.bf16.msra.mxu0 %v1638
    %2274 = vmatprep.subr.bf16.mxu0 %v1641
    %2275 = vmatpush1.bf16.msra.mxu0 %v1640
    %2276 = vmatprep.subr.bf16.mxu0 %v1643
    %2277 = vmatpush1.bf16.msra.mxu0 %v1642
    %2278 = vmatprep.subr.bf16.mxu0 %v1645
    %2279 = vmatpush1.bf16.msra.mxu0 %v1644
    %2280 = vmatprep.subr.bf16.mxu0 %v1647
    %2281 = vmatpush1.bf16.msra.mxu0 %v1646
    %2282 = vmatprep.subr.bf16.mxu0 %v1649
    %2283 = vmatpush1.bf16.msra.mxu0 %v1648
    %2284 = vmatprep.subr.bf16.mxu0 %v1651
    %2285 = vmatpush1.bf16.msra.mxu0 %v1650
    %2286 = vmatprep.subr.bf16.mxu0 %v1653
    %2287 = vmatpush1.bf16.msra.mxu0 %v1652
    %2288 = vmatprep.subr.bf16.mxu0 %v1655
    %2289 = vmatpush1.bf16.msra.mxu0 %v1654
    %2290 = vmatprep.subr.bf16.mxu0 %v1657
    %2291 = vmatpush1.bf16.msra.mxu0 %v1656
    %2292 = vmatprep.subr.bf16.mxu0 %v1659
    %2293 = vmatpush1.bf16.msra.mxu0 %v1658
    %2294 = vmatprep.subr.bf16.mxu0 %v1661
    %2295 = vmatpush1.bf16.msra.mxu0 %v1660
    %2296 = vmatprep.subr.bf16.mxu0 %v1663
    %2297 = vmatpush1.bf16.msra.mxu0 %v1662
    %2298 = vmatprep.subr.bf16.mxu0 %v1665
    %2299 = vmatpush1.bf16.msra.mxu0 %v1664
    %2300 = vmatprep.mubr.bf16.mxu0 %v2267
    %2301 = vmatmul.mubr.bf16.gmra.mrb[0].mxu0 %v2266
    %v2302 = vpop.f32.mrb[0].mxu0
    %v2303 = vadd.f32 0.0, %v2302
    %v2304 = vpop.f32.mrb[0].mxu0
    %v2305 = vadd.f32 0.0, %v2304
    %v2306 = vpop.f32.mrb[0].mxu0
    %v2307 = vpop.f32.mrb[0].mxu0
    %2308 = vdwg.mxu0
    %v2309 = vadd.f32 %v2264, %v2303
    %v2310 = vadd.f32 %v2265, %v2305
    %v2311 = vxor.u32 %v2309, 2147483648
    %v2312 = vmul.f32 %v2311, 1.442695
    %v2313 = vpow.pop %v2312
    %v2314 = vadd.f32 %v2313, 1.0
    %v2315 = vrcp.pop %v2314
    %v2316 = vmul.f32 1.0, %v2315
    %v2317 = vtanh.pop %v2309
    %2319 = vrot.lane.b32.xlu0 %v2317, 64
    %v2320 = vpop.permute.xlu0 %2319
    %v2322 = vmul.f32 %v2316, %v2320
    %2324 = vrot.lane.b32.xlu0 %v2322, 32
    %v2325 = vpop.permute.xlu0 %2324
    %v2327 = vmul.f32 %v2316, %v2233
    %v2328 = vadd.f32 %v2325, %v2327
    %v2329 = vtanh.pop %v2328
    %2331 = vrot.lane.b32.xlu0 %v2329, 64
    %v2332 = vpop.permute.xlu0 %2331
    %v2334 = vmul.f32 %v2316, %v2332
    %v2335 = vxor.u32 %v2310, 2147483648
    %v2336 = vmul.f32 %v2335, 1.442695
    %v2337 = vpow.pop %v2336
    %v2338 = vadd.f32 %v2337, 1.0
    %v2339 = vrcp.pop %v2338
    %v2340 = vmul.f32 1.0, %v2339
    %v2341 = vtanh.pop %v2310
    %2343 = vrot.lane.b32.xlu0 %v2341, 64
    %v2344 = vpop.permute.xlu0 %2343
    %v2346 = vmul.f32 %v2340, %v2344
    %2348 = vrot.lane.b32.xlu0 %v2346, 32
    %v2349 = vpop.permute.xlu0 %2348
    %v2351 = vmul.f32 %v2340, %v2257
    %v2352 = vadd.f32 %v2349, %v2351
    %v2353 = vtanh.pop %v2352
    %2355 = vrot.lane.b32.xlu0 %v2353, 64
    %v2356 = vpop.permute.xlu0 %2355
    %v2358 = vmul.f32 %v2340, %v2356
    %2360 = vrot.lane.b32.xlu0 %v1110, 32
    %v2361 = vpop.permute.xlu0 %2360
    %2364 = vrot.lane.b32.xlu0 %v1134, 64
    %v2365 = vpop.permute.xlu0 %2364
    %2368 = vrot.lane.b32.xlu0 %v2334, 96
    %v2369 = vpop.permute.xlu0 %2368
    %v2371 = vsel %vm115, %v2361, %v2365
    %v2372 = vsel %vm262, %v2371, %v2369
    %vm2373 = vcmask 785408
    %v2374 = vsel %vm2373, %v2372, %v2358
    %2375 = vst [vmem:[%s5] sm:$0xff] %v2374
    %2377 = vrot.lane.b32.xlu0 %v1104, 96
    %v2378 = vpop.permute.xlu0 %2377
    %2381 = vrot.lane.b32.xlu0 %v2328, 32
    %v2382 = vpop.permute.xlu0 %2381
    %2385 = vrot.lane.b32.xlu0 %v2352, 64
    %v2386 = vpop.permute.xlu0 %2385
    %v2388 = vsel %vm115, %v2378, %v1128
    %v2389 = vsel %vm262, %v2388, %v2382
    %v2390 = vsel %vm2373, %v2389, %v2386
    %2391 = vst [vmem:[%s6] sm:$0xff] %v2390
    // Predicated region
    $region30: #{encoder_forward.1} parent=1 // pred_check
      _
    $region31: #{encoder_forward.1} parent=1 // pred_check_branch
      %2393 = sbr.rel (0) target = $region33
    $region32: #{encoder_forward.1} parent=1 // pred_region
      _
    $region33: #{encoder_forward.1} parent=1 // pred_fallthru
      _
    // Predicated region
    $region34: #{encoder_forward.1} parent=1 // pred_check
      _
    $region35: #{encoder_forward.1} parent=1 // pred_check_branch
      %2395 = sbr.rel (0) target = $region37
    $region36: #{encoder_forward.1} parent=1 // pred_region
      _
    $region37: #{encoder_forward.1} parent=1 // pred_fallthru
      _
    // Predicated region
    $region38: #{encoder_forward.1} parent=1 // pred_check
      _
    $region39: #{encoder_forward.1} parent=1 // pred_check_branch
      %2397 = sbr.rel (0) target = $region41
    $region40: #{encoder_forward.1} parent=1 // pred_region
      _
    $region41: #{encoder_forward.1} parent=1 // pred_fallthru
      _
    // Predicated region
    $region42: #{encoder_forward.1} parent=1 // pred_check
      _
    $region43: #{encoder_forward.1} parent=1 // pred_check_branch
      %2399 = sbr.rel (0) target = $region45
    $region44: #{encoder_forward.1} parent=1 // pred_region
      _
    $region45: #{encoder_forward.1} parent=1 // pred_fallthru
      _
    %2400 = vsyncpa [#allocation5], 1
    %2401 = vsyncpa [#allocation7], 1

</llo_original>
